<compile_context>
chip_gen: v7x
topology: tpu7x:2x2x1
jax: 0.10.0
libtpu: 0.0.40
codegen_flags: <defaults>
</compile_context>

<pallas_src>
import functools

import jax
import jax.numpy as jnp
from jax.experimental import pallas as pl
from jax.experimental.pallas import tpu as pltpu


# ----------------------------------------------------------------------------
# Tiling helpers
# ----------------------------------------------------------------------------
def _pick_row_tile(hout, target=128):
    """Rows of output per conv grid step: a divisor of hout near `target`."""
    if hout <= target:
        return hout
    for tr in range(target, max(1, target // 2) - 1, -1):
        if hout % tr == 0:
            return tr
    # TODO(synk): no clean divisor (e.g. prime Hout at the real 448x448 size)
    # -> fall back to whole-image tiles; proper v7x support needs ragged row
    # tiles with masked boundary stores.
    return hout


def _pick_fc_tk(k, max_tk=8192):
    """K tile for the FC reduction: full K when small, else a big legal divisor."""
    if k <= max_tk:
        return k
    for tk in range(max_tk - max_tk % 128, 0, -128):
        if k % tk == 0:
            return tk
    # TODO(synk): K with no multiple-of-128 divisor (e.g. 390728) -> single
    # full-K block; with num_classes=2 the whole bf16 weight is ~1.5 MB so it
    # still fits comfortably in VMEM.
    return k


# ----------------------------------------------------------------------------
# Pallas kernels
# ----------------------------------------------------------------------------
def conv3x3_kernel(x_ref, w_ref, b_ref, o_ref, *, pool: bool):
    """Fused 3x3 VALID conv (single im2col matmul) + bias + ReLU (+ 2x2/2 pool).

    x_ref: (H, W, Cin)              bf16  full image (resident across row tiles)
    w_ref: (9*Cin, Cout)            bf16  rows ordered (kh, kw, cin)
    b_ref: (1, Cout)                f32
    o_ref: (rows_out, cols_out, Cout) bf16  one output row tile
    """
    H, W, Cin = x_ref.shape
    rows_out, cols_out, Cout = o_ref.shape
    # Conv-output rows/cols this tile needs (pool consumes 2x; odd trailing
    # conv row/col is never computed -> matches floor-mode pooling).
    hc = 2 * rows_out if pool else rows_out
    wc = 2 * cols_out if pool else cols_out

    r = pl.program_id(1)
    xs = x_ref[pl.ds(r * hc, hc + 2), :, :]                    # (hc+2, W, Cin)

    # im2col in VMEM: 9 shifted views concatenated on the channel (lane) dim,
    # then ONE MXU matmul with K = 9*Cin and f32 accumulation.
    cols = [xs[di:di + hc, dj:dj + wc, :]
            for di in range(3) for dj in range(3)]
    col = jnp.concatenate(cols, axis=-1)                       # (hc, wc, 9*Cin)
    acc = jnp.dot(col.reshape(hc * wc, 9 * Cin), w_ref[...],
                  preferred_element_type=jnp.float32)          # (hc*wc, Cout)

    y = jnp.maximum(acc.reshape(hc, wc, Cout) + b_ref[...], 0.0)

    if pool:
        # Vectorised 2x2 max-pool: H direction then W direction, no unrolled
        # per-column stores.
        y = y.reshape(rows_out, 2, wc, Cout)
        y = jnp.maximum(y[:, 0], y[:, 1])                      # (rows_out, wc, Cout)
        y = y.reshape(rows_out, cols_out, 2, Cout)
        y = jnp.maximum(y[:, :, 0], y[:, :, 1])                # (rows_out, cols_out, Cout)

    o_ref[...] = y.astype(o_ref.dtype)                         # single full-block store


def fc_kernel(x_ref, w_ref, b_ref, o_ref, acc_ref):
    """K-tiled y = x @ w + b with an f32 VMEM accumulator (init/finalise via pl.when)."""
    k = pl.program_id(0)

    @pl.when(k == 0)
    def _():
        acc_ref[...] = jnp.zeros_like(acc_ref)

    acc_ref[...] += jnp.dot(x_ref[...], w_ref[...],
                            preferred_element_type=jnp.float32)

    @pl.when(k == pl.num_programs(0) - 1)
    def _():
        o_ref[...] = (acc_ref[...] + b_ref[...]).astype(o_ref.dtype)


# ----------------------------------------------------------------------------
# Pallas wrappers
# ----------------------------------------------------------------------------
def conv3x3_relu(x_nhwc, w_mat, b, *, pool, row_target=128,
                 vmem_limit_bytes=64 * 1024 * 1024):
    N, H, W, Cin = x_nhwc.shape
    Cout = w_mat.shape[-1]
    ho, wo = H - 2, W - 2
    hout, wout = (ho // 2, wo // 2) if pool else (ho, wo)
    tr = _pick_row_tile(hout, row_target)
    rt = hout // tr

    return pl.pallas_call(
        functools.partial(conv3x3_kernel, pool=pool),
        out_shape=jax.ShapeDtypeStruct((N, hout, wout, Cout), jnp.bfloat16),
        grid=(N, rt),
        in_specs=[
            # Full image stays resident across the row-tile axis (block index
            # is unchanged in r, so it is fetched once per image).
            pl.BlockSpec((None, H, W, Cin), lambda n, r: (n, 0, 0, 0)),
            pl.BlockSpec((9 * Cin, Cout), lambda n, r: (0, 0)),
            pl.BlockSpec((1, Cout), lambda n, r: (0, 0)),
        ],
        out_specs=pl.BlockSpec((None, tr, wout, Cout),
                               lambda n, r: (n, r, 0, 0)),
        compiler_params=pltpu.CompilerParams(
            dimension_semantics=("parallel", "parallel"),
            vmem_limit_bytes=vmem_limit_bytes),
    )(x_nhwc, w_mat, b)


def fc(x, w, b, *, max_tk=8192):
    M, K = x.shape
    Kw, NC = w.shape
    assert Kw == K and b.shape == (1, NC)
    tk = _pick_fc_tk(K, max_tk)
    kt = K // tk

    return pl.pallas_call(
        fc_kernel,
        out_shape=jax.ShapeDtypeStruct((M, NC), jnp.float32),
        grid=(kt,),
        in_specs=[
            pl.BlockSpec((M, tk), lambda k: (0, k)),
            pl.BlockSpec((tk, NC), lambda k: (k, 0)),
            pl.BlockSpec((1, NC), lambda k: (0, 0)),
        ],
        out_specs=pl.BlockSpec((M, NC), lambda k: (0, 0)),
        scratch_shapes=[pltpu.VMEM((M, NC), jnp.float32)],
        compiler_params=pltpu.CompilerParams(
            dimension_semantics=("arbitrary",)),
    )(x, w, b)


# ----------------------------------------------------------------------------
# Parameter packing (plain JAX, done once)
# ----------------------------------------------------------------------------
def pack_params(params, conv2_hw):
    H2, W2 = conv2_hw

    def pack_conv(w, b):
        cout, cin, kh, kw = w.shape
        # (Cout, Cin, KH, KW) -> (KH*KW*Cin, Cout), rows ordered (kh, kw, cin)
        # to match the in-kernel im2col concat order.
        w_mat = jnp.transpose(w, (2, 3, 1, 0)).reshape(kh * kw * cin, cout)
        return w_mat.astype(jnp.bfloat16), b.reshape(1, cout).astype(jnp.float32)

    w1, b1 = pack_conv(params["w1"], params["b1"])
    w2, b2 = pack_conv(params["w2"], params["b2"])

    c2 = params["w2"].shape[0]
    wfc, bfc = params["wfc"], params["bfc"]
    K, nc = wfc.shape
    assert K == c2 * H2 * W2
    # Fold the PyTorch NCHW-flatten permutation into the FC weight rows so the
    # kernel consumes the NHWC-flattened activation directly (no transpose,
    # no lane padding).
    wfc_nhwc = wfc.reshape(c2, H2, W2, nc).transpose(1, 2, 0, 3).reshape(K, nc)

    return {
        "w1": w1, "b1": b1, "w2": w2, "b2": b2,
        "wfc": wfc_nhwc.astype(jnp.bfloat16),
        "bfc": bfc.reshape(1, nc).astype(jnp.float32),
    }


# ----------------------------------------------------------------------------
# Forward pass
# ----------------------------------------------------------------------------
def cnn_forward(x_nchw, packed):
    # NCHW (PyTorch boundary) -> NHWC bf16 inside the pipeline.
    x = jnp.transpose(x_nchw, (0, 2, 3, 1)).astype(jnp.bfloat16)
    x = conv3x3_relu(x, packed["w1"], packed["b1"], pool=True)    # (N,Hp,Wp,16)
    x = conv3x3_relu(x, packed["w2"], packed["b2"], pool=False)   # (N,H2,W2,8)
    xf = x.reshape(x.shape[0], -1)                                # NHWC flatten (no pad)
    return fc(xf, packed["wfc"], packed["bfc"])                   # (N, num_classes) f32


# ----------------------------------------------------------------------------
# Pure-JAX reference (f32) for correctness check
# ----------------------------------------------------------------------------
def cnn_reference(x_nchw, params):
    dn = jax.lax.conv_dimension_numbers(x_nchw.shape, params["w1"].shape,
                                        ("NCHW", "OIHW", "NCHW"))
    x = jax.lax.conv_general_dilated(x_nchw, params["w1"], (1, 1), "VALID",
                                     dimension_numbers=dn)
    x = jax.nn.relu(x + params["b1"][None, :, None, None])
    x = jax.lax.reduce_window(x, -jnp.inf, jax.lax.max,
                              (1, 1, 2, 2), (1, 1, 2, 2), "VALID")
    dn2 = jax.lax.conv_dimension_numbers(x.shape, params["w2"].shape,
                                         ("NCHW", "OIHW", "NCHW"))
    x = jax.lax.conv_general_dilated(x, params["w2"], (1, 1), "VALID",
                                     dimension_numbers=dn2)
    x = jax.nn.relu(x + params["b2"][None, :, None, None])
    x = x.reshape(x.shape[0], -1)
    return x @ params["wfc"] + params["bfc"][None, :]


# ----------------------------------------------------------------------------
if __name__ == "__main__":
    num_classes = 2
    batch, in_channels, spatial = 2, 4, 16
    # TODO(synk): the original module hard-codes fc in_features=390728 (i.e. a
    # 448x448 input); here the FC in_features is derived from the small test
    # spatial size instead.
    h1 = spatial - 2          # conv1 output
    hp = h1 // 2              # after 2x2 max-pool
    h2 = hp - 2               # conv2 output
    fc_in = 8 * h2 * h2

    key = jax.random.PRNGKey(0)
    k_x, k1, k2, k3, k4, k5, k6 = jax.random.split(key, 7)

    x = jax.random.normal(k_x, (batch, in_channels, spatial, spatial),
                          dtype=jnp.float32)
    params = {
        "w1": jax.random.normal(k1, (16, in_channels, 3, 3), jnp.float32) * 0.1,
        "b1": jax.random.normal(k2, (16,), jnp.float32) * 0.1,
        "w2": jax.random.normal(k3, (8, 16, 3, 3), jnp.float32) * 0.1,
        "b2": jax.random.normal(k4, (8,), jnp.float32) * 0.1,
        "wfc": jax.random.normal(k5, (fc_in, num_classes), jnp.float32) * 0.05,
        "bfc": jax.random.normal(k6, (num_classes,), jnp.float32) * 0.05,
    }

    packed = pack_params(params, (h2, h2))
    out = jax.block_until_ready(jax.jit(cnn_forward)(x, packed))
    ref = jax.block_until_ready(cnn_reference(x, params))

    assert out.shape == (batch, num_classes), out.shape
    # bf16 matmul operands (f32 accumulation) vs an all-f32 reference.
    assert jnp.allclose(out, ref, rtol=5e-2, atol=5e-2), (
        "mismatch vs reference", float(jnp.max(jnp.abs(out - ref))))

    print("KERNEL_OK")
</pallas_src>

<mosaic_0001>
module attributes {stable_mosaic.version = 11 : i64} {
  func.func @conv3x3_kernel(%arg0: i32, %arg1: i32, %arg2: memref<1x16x16x4xbf16, #tpu.memory_space<vmem>>, %arg3: memref<36x16xbf16, #tpu.memory_space<vmem>>, %arg4: memref<1x16xf32, #tpu.memory_space<vmem>>, %arg5: memref<1x7x7x16xbf16, #tpu.memory_space<vmem>>) attributes {dimension_semantics = [#tpu.dimension_semantics<parallel>, #tpu.dimension_semantics<parallel>], iteration_bounds = array<i64: 2, 1>, scalar_prefetch = 0 : i64, scratch_operands = 0 : i64, tpu.core_type = #tpu.core_type<tc>, window_params = [{transform_indices = @transform_0, window_bounds = array<i64: 1, 16, 16, 4>}, {pipeline_mode = #tpu.pipeline_mode<synchronous>, transform_indices = @transform_1, window_bounds = array<i64: 36, 16>}, {pipeline_mode = #tpu.pipeline_mode<synchronous>, transform_indices = @transform_2, window_bounds = array<i64: 1, 16>}, {transform_indices = @transform_3, window_bounds = array<i64: 1, 7, 7, 16>}]} {
    %c14_i32 = arith.constant 14 : i32
    %0 = arith.muli %arg1, %c14_i32 : i32
    %c0 = arith.constant 0 : index
    %1 = arith.index_cast %0 : i32 to index
    %c0_0 = arith.constant 0 : index
    %c0_1 = arith.constant 0 : index
    %2 = vector.load %arg2[%c0, %1, %c0_0, %c0_1] : memref<1x16x16x4xbf16, #tpu.memory_space<vmem>>, vector<1x16x16x4xbf16>
    %3 = vector.shape_cast %2 : vector<1x16x16x4xbf16> to vector<16x16x4xbf16>
    %4 = vector.extract_strided_slice %3 {offsets = [0, 0, 0], sizes = [14, 14, 4], strides = [1, 1, 1]} : vector<16x16x4xbf16> to vector<14x14x4xbf16>
    %5 = vector.extract_strided_slice %3 {offsets = [0, 1, 0], sizes = [14, 14, 4], strides = [1, 1, 1]} : vector<16x16x4xbf16> to vector<14x14x4xbf16>
    %6 = vector.extract_strided_slice %3 {offsets = [0, 2, 0], sizes = [14, 14, 4], strides = [1, 1, 1]} : vector<16x16x4xbf16> to vector<14x14x4xbf16>
    %7 = vector.extract_strided_slice %3 {offsets = [1, 0, 0], sizes = [14, 14, 4], strides = [1, 1, 1]} : vector<16x16x4xbf16> to vector<14x14x4xbf16>
    %8 = vector.extract_strided_slice %3 {offsets = [1, 1, 0], sizes = [14, 14, 4], strides = [1, 1, 1]} : vector<16x16x4xbf16> to vector<14x14x4xbf16>
    %9 = vector.extract_strided_slice %3 {offsets = [1, 2, 0], sizes = [14, 14, 4], strides = [1, 1, 1]} : vector<16x16x4xbf16> to vector<14x14x4xbf16>
    %10 = vector.extract_strided_slice %3 {offsets = [2, 0, 0], sizes = [14, 14, 4], strides = [1, 1, 1]} : vector<16x16x4xbf16> to vector<14x14x4xbf16>
    %11 = vector.extract_strided_slice %3 {offsets = [2, 1, 0], sizes = [14, 14, 4], strides = [1, 1, 1]} : vector<16x16x4xbf16> to vector<14x14x4xbf16>
    %12 = vector.extract_strided_slice %3 {offsets = [2, 2, 0], sizes = [14, 14, 4], strides = [1, 1, 1]} : vector<16x16x4xbf16> to vector<14x14x4xbf16>
    %13 = tpu.concatenate %4, %5, %6, %7, %8, %9, %10, %11, %12 in 2 : vector<14x14x4xbf16>, vector<14x14x4xbf16>, vector<14x14x4xbf16>, vector<14x14x4xbf16>, vector<14x14x4xbf16>, vector<14x14x4xbf16>, vector<14x14x4xbf16>, vector<14x14x4xbf16>, vector<14x14x4xbf16> -> vector<14x14x36xbf16>
    %14 = vector.shape_cast %13 : vector<14x14x36xbf16> to vector<196x36xbf16>
    %c0_2 = arith.constant 0 : index
    %c0_3 = arith.constant 0 : index
    %15 = vector.load %arg3[%c0_2, %c0_3] : memref<36x16xbf16, #tpu.memory_space<vmem>>, vector<36x16xbf16>
    %cst = arith.constant dense<0.000000e+00> : vector<196x16xf32>
    %16 = tpu.matmul %14, %15, %cst {dimension_numbers = #tpu.dot_dimension_numbers<[1], [0], [0], [1], [0, 0, 1, 1], [], []>} : vector<196x36xbf16>, vector<36x16xbf16>, vector<196x16xf32> -> vector<196x16xf32>
    %17 = vector.shape_cast %16 : vector<196x16xf32> to vector<14x14x16xf32>
    %c0_4 = arith.constant 0 : index
    %c0_5 = arith.constant 0 : index
    %18 = vector.load %arg4[%c0_4, %c0_5] : memref<1x16xf32, #tpu.memory_space<vmem>>, vector<1x16xf32>
    %19 = vector.shape_cast %18 : vector<1x16xf32> to vector<1x1x16xf32>
    %20 = vector.broadcast %19 : vector<1x1x16xf32> to vector<14x14x16xf32>
    %21 = arith.addf %17, %20 : vector<14x14x16xf32>
    %cst_6 = arith.constant 0.000000e+00 : f32
    %22 = vector.broadcast %cst_6 : f32 to vector<14x14x16xf32>
    %23 = arith.maximumf %21, %22 : vector<14x14x16xf32>
    %24 = vector.shape_cast %23 : vector<14x14x16xf32> to vector<7x2x14x16xf32>
    %25 = vector.extract_strided_slice %24 {offsets = [0, 0, 0, 0], sizes = [7, 1, 14, 16], strides = [1, 1, 1, 1]} : vector<7x2x14x16xf32> to vector<7x1x14x16xf32>
    %26 = vector.shape_cast %25 : vector<7x1x14x16xf32> to vector<7x14x16xf32>
    %27 = vector.extract_strided_slice %24 {offsets = [0, 1, 0, 0], sizes = [7, 1, 14, 16], strides = [1, 1, 1, 1]} : vector<7x2x14x16xf32> to vector<7x1x14x16xf32>
    %28 = vector.shape_cast %27 : vector<7x1x14x16xf32> to vector<7x14x16xf32>
    %29 = arith.maximumf %26, %28 : vector<7x14x16xf32>
    %30 = vector.shape_cast %29 : vector<7x14x16xf32> to vector<7x7x2x16xf32>
    %31 = vector.extract_strided_slice %30 {offsets = [0, 0, 0, 0], sizes = [7, 7, 1, 16], strides = [1, 1, 1, 1]} : vector<7x7x2x16xf32> to vector<7x7x1x16xf32>
    %32 = vector.shape_cast %31 : vector<7x7x1x16xf32> to vector<7x7x16xf32>
    %33 = vector.extract_strided_slice %30 {offsets = [0, 0, 1, 0], sizes = [7, 7, 1, 16], strides = [1, 1, 1, 1]} : vector<7x7x2x16xf32> to vector<7x7x1x16xf32>
    %34 = vector.shape_cast %33 : vector<7x7x1x16xf32> to vector<7x7x16xf32>
    %35 = arith.maximumf %32, %34 : vector<7x7x16xf32>
    %36 = arith.truncf %35 : vector<7x7x16xf32> to vector<7x7x16xbf16>
    %c0_7 = arith.constant 0 : index
    %c0_8 = arith.constant 0 : index
    %c0_9 = arith.constant 0 : index
    %c0_10 = arith.constant 0 : index
    %37 = vector.load %arg5[%c0_7, %c0_8, %c0_9, %c0_10] : memref<1x7x7x16xbf16, #tpu.memory_space<vmem>>, vector<1x7x7x16xbf16>
    %38 = vector.shape_cast %37 : vector<1x7x7x16xbf16> to vector<7x7x16xbf16>
    %39 = vector.shape_cast %36 : vector<7x7x16xbf16> to vector<1x7x7x16xbf16>
    tpu.vector_store %arg5[%c0_7, %c0_8, %c0_9, %c0_10], %39 {strides = array<i32>} : memref<1x7x7x16xbf16, #tpu.memory_space<vmem>>, vector<1x7x7x16xbf16>,
    return
  }
  func.func @transform_0(%arg0: i32, %arg1: i32) -> (i32, i32, i32, i32) {
    %c0_i32 = arith.constant 0 : i32
    %c0_i32_0 = arith.constant 0 : i32
    %c0_i32_1 = arith.constant 0 : i32
    %c0_i32_2 = arith.constant 0 : i32
    return %arg0, %c0_i32, %c0_i32_0, %c0_i32_1 : i32, i32, i32, i32
  }
  func.func @transform_1(%arg0: i32, %arg1: i32) -> (i32, i32) {
    %c0_i32 = arith.constant 0 : i32
    %c0_i32_0 = arith.constant 0 : i32
    %c0_i32_1 = arith.constant 0 : i32
    return %c0_i32, %c0_i32_0 : i32, i32
  }
  func.func @transform_2(%arg0: i32, %arg1: i32) -> (i32, i32) {
    %c0_i32 = arith.constant 0 : i32
    %c0_i32_0 = arith.constant 0 : i32
    %c0_i32_1 = arith.constant 0 : i32
    return %c0_i32, %c0_i32_0 : i32, i32
  }
  func.func @transform_3(%arg0: i32, %arg1: i32) -> (i32, i32, i32, i32) {
    %c0_i32 = arith.constant 0 : i32
    %c0_i32_0 = arith.constant 0 : i32
    %c0_i32_1 = arith.constant 0 : i32
    return %arg0, %arg1, %c0_i32, %c0_i32_0 : i32, i32, i32, i32
  }
}

module attributes {stable_mosaic.version = 11 : i64} {
  func.func @conv3x3_kernel(%arg0: i32, %arg1: i32, %arg2: memref<1x7x7x16xbf16, #tpu.memory_space<vmem>>, %arg3: memref<144x8xbf16, #tpu.memory_space<vmem>>, %arg4: memref<1x8xf32, #tpu.memory_space<vmem>>, %arg5: memref<1x5x5x8xbf16, #tpu.memory_space<vmem>>) attributes {dimension_semantics = [#tpu.dimension_semantics<parallel>, #tpu.dimension_semantics<parallel>], iteration_bounds = array<i64: 2, 1>, scalar_prefetch = 0 : i64, scratch_operands = 0 : i64, tpu.core_type = #tpu.core_type<tc>, window_params = [{transform_indices = @transform_0, window_bounds = array<i64: 1, 7, 7, 16>}, {pipeline_mode = #tpu.pipeline_mode<synchronous>, transform_indices = @transform_1, window_bounds = array<i64: 144, 8>}, {pipeline_mode = #tpu.pipeline_mode<synchronous>, transform_indices = @transform_2, window_bounds = array<i64: 1, 8>}, {transform_indices = @transform_3, window_bounds = array<i64: 1, 5, 5, 8>}]} {
    %c5_i32 = arith.constant 5 : i32
    %0 = arith.muli %arg1, %c5_i32 : i32
    %c0 = arith.constant 0 : index
    %1 = arith.index_cast %0 : i32 to index
    %c0_0 = arith.constant 0 : index
    %c0_1 = arith.constant 0 : index
    %2 = vector.load %arg2[%c0, %1, %c0_0, %c0_1] : memref<1x7x7x16xbf16, #tpu.memory_space<vmem>>, vector<1x7x7x16xbf16>
    %3 = vector.shape_cast %2 : vector<1x7x7x16xbf16> to vector<7x7x16xbf16>
    %4 = vector.extract_strided_slice %3 {offsets = [0, 0, 0], sizes = [5, 5, 16], strides = [1, 1, 1]} : vector<7x7x16xbf16> to vector<5x5x16xbf16>
    %5 = vector.extract_strided_slice %3 {offsets = [0, 1, 0], sizes = [5, 5, 16], strides = [1, 1, 1]} : vector<7x7x16xbf16> to vector<5x5x16xbf16>
    %6 = vector.extract_strided_slice %3 {offsets = [0, 2, 0], sizes = [5, 5, 16], strides = [1, 1, 1]} : vector<7x7x16xbf16> to vector<5x5x16xbf16>
    %7 = vector.extract_strided_slice %3 {offsets = [1, 0, 0], sizes = [5, 5, 16], strides = [1, 1, 1]} : vector<7x7x16xbf16> to vector<5x5x16xbf16>
    %8 = vector.extract_strided_slice %3 {offsets = [1, 1, 0], sizes = [5, 5, 16], strides = [1, 1, 1]} : vector<7x7x16xbf16> to vector<5x5x16xbf16>
    %9 = vector.extract_strided_slice %3 {offsets = [1, 2, 0], sizes = [5, 5, 16], strides = [1, 1, 1]} : vector<7x7x16xbf16> to vector<5x5x16xbf16>
    %10 = vector.extract_strided_slice %3 {offsets = [2, 0, 0], sizes = [5, 5, 16], strides = [1, 1, 1]} : vector<7x7x16xbf16> to vector<5x5x16xbf16>
    %11 = vector.extract_strided_slice %3 {offsets = [2, 1, 0], sizes = [5, 5, 16], strides = [1, 1, 1]} : vector<7x7x16xbf16> to vector<5x5x16xbf16>
    %12 = vector.extract_strided_slice %3 {offsets = [2, 2, 0], sizes = [5, 5, 16], strides = [1, 1, 1]} : vector<7x7x16xbf16> to vector<5x5x16xbf16>
    %13 = tpu.concatenate %4, %5, %6, %7, %8, %9, %10, %11, %12 in 2 : vector<5x5x16xbf16>, vector<5x5x16xbf16>, vector<5x5x16xbf16>, vector<5x5x16xbf16>, vector<5x5x16xbf16>, vector<5x5x16xbf16>, vector<5x5x16xbf16>, vector<5x5x16xbf16>, vector<5x5x16xbf16> -> vector<5x5x144xbf16>
    %14 = vector.shape_cast %13 : vector<5x5x144xbf16> to vector<25x144xbf16>
    %c0_2 = arith.constant 0 : index
    %c0_3 = arith.constant 0 : index
    %15 = vector.load %arg3[%c0_2, %c0_3] : memref<144x8xbf16, #tpu.memory_space<vmem>>, vector<144x8xbf16>
    %cst = arith.constant dense<0.000000e+00> : vector<25x8xf32>
    %16 = tpu.matmul %14, %15, %cst {dimension_numbers = #tpu.dot_dimension_numbers<[1], [0], [0], [1], [0, 0, 1, 1], [], []>} : vector<25x144xbf16>, vector<144x8xbf16>, vector<25x8xf32> -> vector<25x8xf32>
    %17 = vector.shape_cast %16 : vector<25x8xf32> to vector<5x5x8xf32>
    %c0_4 = arith.constant 0 : index
    %c0_5 = arith.constant 0 : index
    %18 = vector.load %arg4[%c0_4, %c0_5] : memref<1x8xf32, #tpu.memory_space<vmem>>, vector<1x8xf32>
    %19 = vector.shape_cast %18 : vector<1x8xf32> to vector<1x1x8xf32>
    %20 = vector.broadcast %19 : vector<1x1x8xf32> to vector<5x5x8xf32>
    %21 = arith.addf %17, %20 : vector<5x5x8xf32>
    %cst_6 = arith.constant 0.000000e+00 : f32
    %22 = vector.broadcast %cst_6 : f32 to vector<5x5x8xf32>
    %23 = arith.maximumf %21, %22 : vector<5x5x8xf32>
    %24 = arith.truncf %23 : vector<5x5x8xf32> to vector<5x5x8xbf16>
    %c0_7 = arith.constant 0 : index
    %c0_8 = arith.constant 0 : index
    %c0_9 = arith.constant 0 : index
    %c0_10 = arith.constant 0 : index
    %25 = vector.load %arg5[%c0_7, %c0_8, %c0_9, %c0_10] : memref<1x5x5x8xbf16, #tpu.memory_space<vmem>>, vector<1x5x5x8xbf16>
    %26 = vector.shape_cast %25 : vector<1x5x5x8xbf16> to vector<5x5x8xbf16>
    %27 = vector.shape_cast %24 : vector<5x5x8xbf16> to vector<1x5x5x8xbf16>
    tpu.vector_store %arg5[%c0_7, %c0_8, %c0_9, %c0_10], %27 {strides = array<i32>} : memref<1x5x5x8xbf16, #tpu.memory_space<vmem>>, vector<1x5x5x8xbf16>,
    return
  }
  func.func @transform_0(%arg0: i32, %arg1: i32) -> (i32, i32, i32, i32) {
    %c0_i32 = arith.constant 0 : i32
    %c0_i32_0 = arith.constant 0 : i32
    %c0_i32_1 = arith.constant 0 : i32
    %c0_i32_2 = arith.constant 0 : i32
    return %arg0, %c0_i32, %c0_i32_0, %c0_i32_1 : i32, i32, i32, i32
  }
  func.func @transform_1(%arg0: i32, %arg1: i32) -> (i32, i32) {
    %c0_i32 = arith.constant 0 : i32
    %c0_i32_0 = arith.constant 0 : i32
    %c0_i32_1 = arith.constant 0 : i32
    return %c0_i32, %c0_i32_0 : i32, i32
  }
  func.func @transform_2(%arg0: i32, %arg1: i32) -> (i32, i32) {
    %c0_i32 = arith.constant 0 : i32
    %c0_i32_0 = arith.constant 0 : i32
    %c0_i32_1 = arith.constant 0 : i32
    return %c0_i32, %c0_i32_0 : i32, i32
  }
  func.func @transform_3(%arg0: i32, %arg1: i32) -> (i32, i32, i32, i32) {
    %c0_i32 = arith.constant 0 : i32
    %c0_i32_0 = arith.constant 0 : i32
    %c0_i32_1 = arith.constant 0 : i32
    return %arg0, %arg1, %c0_i32, %c0_i32_0 : i32, i32, i32, i32
  }
}

module attributes {stable_mosaic.version = 11 : i64} {
  func.func @fc_kernel(%arg0: i32, %arg1: memref<2x200xbf16, #tpu.memory_space<vmem>>, %arg2: memref<200x2xbf16, #tpu.memory_space<vmem>>, %arg3: memref<1x2xf32, #tpu.memory_space<vmem>>, %arg4: memref<2x2xf32, #tpu.memory_space<vmem>>, %arg5: memref<2x2xf32, #tpu.memory_space<vmem>>) attributes {dimension_semantics = [#tpu.dimension_semantics<arbitrary>], iteration_bounds = array<i64: 1>, scalar_prefetch = 0 : i64, scratch_operands = 1 : i64, tpu.core_type = #tpu.core_type<tc>, window_params = [{transform_indices = @transform_0, window_bounds = array<i64: 2, 200>}, {transform_indices = @transform_1, window_bounds = array<i64: 200, 2>}, {pipeline_mode = #tpu.pipeline_mode<synchronous>, transform_indices = @transform_2, window_bounds = array<i64: 1, 2>}, {pipeline_mode = #tpu.pipeline_mode<synchronous>, transform_indices = @transform_3, window_bounds = array<i64: 2, 2>}]} {
    %c0_i32 = arith.constant 0 : i32
    %0 = arith.cmpi eq, %arg0, %c0_i32 : i32
    %1 = arith.extui %0 : i1 to i32
    %c0_i32_0 = arith.constant 0 : i32
    %2 = arith.cmpi ne, %1, %c0_i32_0 : i32
    scf.if %2 {
      %cst_10 = arith.constant 0.000000e+00 : f32
      %12 = vector.broadcast %cst_10 : f32 to vector<2x2xf32>
      %c0_11 = arith.constant 0 : index
      %c0_12 = arith.constant 0 : index
      %13 = vector.load %arg5[%c0_11, %c0_12] : memref<2x2xf32, #tpu.memory_space<vmem>>, vector<2x2xf32>
      tpu.vector_store %arg5[%c0_11, %c0_12], %12 {strides = array<i32>} : memref<2x2xf32, #tpu.memory_space<vmem>>, vector<2x2xf32>,
    } else {
    }
    %c0 = arith.constant 0 : index
    %c0_1 = arith.constant 0 : index
    %3 = vector.load %arg5[%c0, %c0_1] : memref<2x2xf32, #tpu.memory_space<vmem>>, vector<2x2xf32>
    %c0_2 = arith.constant 0 : index
    %c0_3 = arith.constant 0 : index
    %4 = vector.load %arg1[%c0_2, %c0_3] : memref<2x200xbf16, #tpu.memory_space<vmem>>, vector<2x200xbf16>
    %c0_4 = arith.constant 0 : index
    %c0_5 = arith.constant 0 : index
    %5 = vector.load %arg2[%c0_4, %c0_5] : memref<200x2xbf16, #tpu.memory_space<vmem>>, vector<200x2xbf16>
    %cst = arith.constant dense<0.000000e+00> : vector<2x2xf32>
    %6 = tpu.matmul %4, %5, %cst {dimension_numbers = #tpu.dot_dimension_numbers<[1], [0], [0], [1], [0, 0, 1, 1], [], []>} : vector<2x200xbf16>, vector<200x2xbf16>, vector<2x2xf32> -> vector<2x2xf32>
    %7 = arith.addf %3, %6 : vector<2x2xf32>
    %c0_6 = arith.constant 0 : index
    %c0_7 = arith.constant 0 : index
    %8 = vector.load %arg5[%c0_6, %c0_7] : memref<2x2xf32, #tpu.memory_space<vmem>>, vector<2x2xf32>
    tpu.vector_store %arg5[%c0_6, %c0_7], %7 {strides = array<i32>} : memref<2x2xf32, #tpu.memory_space<vmem>>, vector<2x2xf32>,
    %c0_i32_8 = arith.constant 0 : i32
    %9 = arith.cmpi eq, %arg0, %c0_i32_8 : i32
    %10 = arith.extui %9 : i1 to i32
    %c0_i32_9 = arith.constant 0 : i32
    %11 = arith.cmpi ne, %10, %c0_i32_9 : i32
    scf.if %11 {
      %c0_10 = arith.constant 0 : index
      %c0_11 = arith.constant 0 : index
      %12 = vector.load %arg5[%c0_10, %c0_11] : memref<2x2xf32, #tpu.memory_space<vmem>>, vector<2x2xf32>
      %c0_12 = arith.constant 0 : index
      %c0_13 = arith.constant 0 : index
      %13 = vector.load %arg3[%c0_12, %c0_13] : memref<1x2xf32, #tpu.memory_space<vmem>>, vector<1x2xf32>
      %14 = vector.broadcast %13 : vector<1x2xf32> to vector<2x2xf32>
      %15 = arith.addf %12, %14 : vector<2x2xf32>
      %c0_14 = arith.constant 0 : index
      %c0_15 = arith.constant 0 : index
      %16 = vector.load %arg4[%c0_14, %c0_15] : memref<2x2xf32, #tpu.memory_space<vmem>>, vector<2x2xf32>
      tpu.vector_store %arg4[%c0_14, %c0_15], %15 {strides = array<i32>} : memref<2x2xf32, #tpu.memory_space<vmem>>, vector<2x2xf32>,
    } else {
    }
    return
  }
  func.func @transform_0(%arg0: i32) -> (i32, i32) {
    %c0_i32 = arith.constant 0 : i32
    %c0_i32_0 = arith.constant 0 : i32
    return %c0_i32, %arg0 : i32, i32
  }
  func.func @transform_1(%arg0: i32) -> (i32, i32) {
    %c0_i32 = arith.constant 0 : i32
    %c0_i32_0 = arith.constant 0 : i32
    return %arg0, %c0_i32 : i32, i32
  }
  func.func @transform_2(%arg0: i32) -> (i32, i32) {
    %c0_i32 = arith.constant 0 : i32
    %c0_i32_0 = arith.constant 0 : i32
    %c0_i32_1 = arith.constant 0 : i32
    return %c0_i32, %c0_i32_0 : i32, i32
  }
  func.func @transform_3(%arg0: i32) -> (i32, i32) {
    %c0_i32 = arith.constant 0 : i32
    %c0_i32_0 = arith.constant 0 : i32
    %c0_i32_1 = arith.constant 0 : i32
    return %c0_i32, %c0_i32_0 : i32, i32
  }
}

</mosaic_0001>

<llo_original>
// kernel: cnn_forward.5
$region0: #{cnn_forward.5}
  #allocation0 [shape = 'u32[]', space=smem, size = 0x4, offset = 0x4, fixed_abs, tag = 'smem constant byte address 0x4 - core index']
  #allocation1 [shape = 'u32[144,128]{1,0:T(1,128)}', space=vmem, size = 0x12000, scoped, tag = 'internal scratch']
  #allocation2 [shape = 'f32[2,2]{1,0:T(2,128)}', space=vmem, size = 0x400, scoped, tag = 'scratch operand']
  %s0 = inlined_call_operand.vmem [shape: bf16[2,200], index: 0, kind: input, shape index: {}]
  %s1 = inlined_call_operand.vmem [shape: bf16[200,2], index: 1, kind: input, shape index: {}]
  %s2 = inlined_call_operand.vmem [shape: f32[1,2], index: 2, kind: input, shape index: {}]
  %s3 = inlined_call_operand.hbm [shape: f32[2,2], index: 3, kind: output, shape index: {}]
  %s4 = sld [smem:[#allocation0]]
  $region30: #{cnn_forward.5} parent=0
    _
  %s6 = ssub.s32 1, %s4
  %s7 = scalar_select 0, %s6, %s4
  $region1: #{cnn_forward.5} parent=0
    #allocation3 [shape = 'u8[1024]{0}', space=vmem, size = 0x400, scoped, tag = 'output window, operand 0, single buffered']
    #allocation4 [shape = 's32[1]{0}', space=sflag, size = 0x4, scoped, tag = 'scoped memory for cnn_forward.5']
    %8 = vsyncpa [#allocation4], 0
    // Predicated region
    $region2: #{cnn_forward.5} parent=1 // pred_check
      _
    $region3: #{cnn_forward.5} parent=1 // pred_check_branch
      %10 = sbr.rel (0) target = $region5
    $region4: #{cnn_forward.5} parent=1 // pred_region
      _
    $region5: #{cnn_forward.5} parent=1 // pred_fallthru
      _
    // Predicated region
    $region6: #{cnn_forward.5} parent=1 // pred_check
      _
    $region7: #{cnn_forward.5} parent=1 // pred_check_branch
      %12 = sbr.rel (0) target = $region9
    $region8: #{cnn_forward.5} parent=1 // pred_region
      _
    $region9: #{cnn_forward.5} parent=1 // pred_fallthru
      _
    // Predicated region
    $region10: #{cnn_forward.5} parent=1 // pred_check
      _
    $region11: #{cnn_forward.5} parent=1 // pred_check_branch
      %14 = sbr.rel (0) target = $region13
    $region12: #{cnn_forward.5} parent=1 // pred_region
      _
    $region13: #{cnn_forward.5} parent=1 // pred_fallthru
      _
    %p16 = scmp.eq.s32.totalorder 0, 0
    // Predicated region
    $region14: #{cnn_forward.5} parent=1 // pred_check
      %p17 = pneg %p16
    $region15: #{cnn_forward.5} parent=1 // pred_check_branch
      %19 = sbr.rel (%p17) target = $region17
    $region16: #{cnn_forward.5} parent=1 // pred_region
      %vm20 = vcmask 9216
      %21 = vst.msk [vmem:[#allocation2] sm:$0x3] %vm20, 0.0
    $region17: #{cnn_forward.5} parent=1 // pred_fallthru
      _
    %v22 = vld [vmem:[#allocation2] sm:$0x3]
    %v23 = vld [vmem:[%s0] sm:$0x3]
    %v24 = vld [vmem:[%s1] sm:$0xf]
    %v25 = vld [vmem:[%s1 + $0x4] sm:$0xf]
    %v26 = vld [vmem:[%s1 + $0x8] sm:$0xf]
    %v27 = vld [vmem:[%s1 + $0xc] sm:$0xf]
    %v28 = vld [vmem:[%s1 + $0x10] sm:$0xf]
    %v29 = vld [vmem:[%s1 + $0x14] sm:$0xf]
    %v30 = vld [vmem:[%s1 + $0x18] sm:$0xf]
    %v31 = vld [vmem:[%s1 + $0x1c] sm:$0xf]
    %v32 = vld [vmem:[%s1 + $0x20] sm:$0xf]
    %v33 = vld [vmem:[%s1 + $0x24] sm:$0xf]
    %v34 = vld [vmem:[%s1 + $0x28] sm:$0xf]
    %v35 = vld [vmem:[%s1 + $0x2c] sm:$0xf]
    %v36 = vld [vmem:[%s1 + $0x30] sm:$0xf]
    %v37 = vld [vmem:[%s1 + $0x34] sm:$0xf]
    %v38 = vld [vmem:[%s1 + $0x38] sm:$0xf]
    %v39 = vld [vmem:[%s1 + $0x3c] sm:$0xf]
    %v40 = vld [vmem:[%s1 + $0x40] sm:$0xf]
    %v41 = vld [vmem:[%s1 + $0x44] sm:$0xf]
    %v42 = vld [vmem:[%s1 + $0x48] sm:$0xf]
    %v43 = vld [vmem:[%s1 + $0x4c] sm:$0xf]
    %v44 = vld [vmem:[%s1 + $0x50] sm:$0xf]
    %v45 = vld [vmem:[%s1 + $0x54] sm:$0xf]
    %v46 = vld [vmem:[%s1 + $0x58] sm:$0xf]
    %v47 = vld [vmem:[%s1 + $0x5c] sm:$0xf]
    %v48 = vld [vmem:[%s1 + $0x60] sm:$0xf]
    %v51 = vunpack.c.l.s4 1966171168
    %v52 = vunpack.c.0.s8 %v51
    %v53 = vlaneseq
    %v54 = vshrl.u32 %v53, 7
    %v55 = vsub.s32 %v52, %v54
    %v56 = vrot.slane %v23, %v55
    %v57 = vcombine.high %v56, %v56
    %v59 = vunpack.c.l.s4 1966171168
    %v60 = vunpack.c.0.s8 %v59
    %v61 = vlaneseq
    %v62 = vshrl.u32 %v61, 7
    %v63 = vsub.s32 %v60, %v62
    %v64 = vrot.slane %v56, %v63
    %v66 = vunpack.c.l.s4 1966171168
    %v67 = vunpack.c.0.s8 %v66
    %v68 = vlaneseq
    %v69 = vshrl.u32 %v68, 7
    %v70 = vsub.s32 %v67, %v69
    %v71 = vrot.slane %v57, %v70
    %v98 = vunpack.c.l.b16 %v24
    %v99 = vunpack.c.l.b16 %v25
    %v100 = vunpack.c.l.b16 %v26
    %v101 = vunpack.c.l.b16 %v27
    %v102 = vunpack.c.l.b16 %v28
    %v103 = vunpack.c.l.b16 %v29
    %v104 = vunpack.c.l.b16 %v30
    %v105 = vunpack.c.l.b16 %v31
    %v106 = vunpack.c.l.b16 %v32
    %v107 = vunpack.c.l.b16 %v33
    %v108 = vunpack.c.l.b16 %v34
    %v109 = vunpack.c.l.b16 %v35
    %v110 = vunpack.c.l.b16 %v36
    %v111 = vunpack.c.l.b16 %v37
    %v112 = vunpack.c.l.b16 %v38
    %v113 = vunpack.c.l.b16 %v39
    %v114 = vunpack.c.l.b16 %v40
    %v115 = vunpack.c.l.b16 %v41
    %v116 = vunpack.c.l.b16 %v42
    %v117 = vunpack.c.l.b16 %v43
    %v118 = vunpack.c.l.b16 %v44
    %v119 = vunpack.c.l.b16 %v45
    %v120 = vunpack.c.l.b16 %v46
    %v121 = vunpack.c.l.b16 %v47
    %v122 = vunpack.c.l.b16 %v48
    %v123 = vpack.c.b16 %v99, %v98
    %v124 = vpack.c.b16 %v101, %v100
    %v125 = vpack.c.b16 %v103, %v102
    %v126 = vpack.c.b16 %v105, %v104
    %v127 = vpack.c.b16 %v107, %v106
    %v128 = vpack.c.b16 %v109, %v108
    %v129 = vpack.c.b16 %v111, %v110
    %v130 = vpack.c.b16 %v113, %v112
    %v131 = vpack.c.b16 %v115, %v114
    %v132 = vpack.c.b16 %v117, %v116
    %v133 = vpack.c.b16 %v119, %v118
    %v134 = vpack.c.b16 %v121, %v120
    %v135 = vpack.c.b16 %v122, %v122
    %vm148 = vcmask 588800
    %v150 = vsel %vm148, %v71, 0
    %vm152 = vcmask 1043456
    %v154 = vsel %vm152, %v135, 0
    %156 = vmatprep.subr.bf16.mxu0 0
    %157 = vmatpush1.bf16.msra.mxu0 %v123
    %158 = vmatprep.subr.bf16.mxu0 0
    %159 = vmatpush1.bf16.msra.mxu0 %v124
    %160 = vmatprep.subr.bf16.mxu0 0
    %161 = vmatpush1.bf16.msra.mxu0 %v125
    %162 = vmatprep.subr.bf16.mxu0 0
    %163 = vmatpush1.bf16.msra.mxu0 %v126
    %164 = vmatprep.subr.bf16.mxu0 0
    %165 = vmatpush1.bf16.msra.mxu0 %v127
    %166 = vmatprep.subr.bf16.mxu0 0
    %167 = vmatpush1.bf16.msra.mxu0 %v128
    %168 = vmatprep.subr.bf16.mxu0 0
    %169 = vmatpush1.bf16.msra.mxu0 %v129
    %170 = vmatprep.subr.bf16.mxu0 0
    %171 = vmatpush1.bf16.msra.mxu0 %v130
    %172 = vmatprep.subr.bf16.mxu0 0
    %173 = vmatpush1.bf16.msra.mxu0 %v131
    %174 = vmatprep.subr.bf16.mxu0 0
    %175 = vmatpush1.bf16.msra.mxu0 %v132
    %176 = vmatprep.subr.bf16.mxu0 0
    %177 = vmatpush1.bf16.msra.mxu0 %v133
    %178 = vmatprep.subr.bf16.mxu0 0
    %179 = vmatpush1.bf16.msra.mxu0 %v134
    %180 = vmatprep.subr.bf16.mxu0 0
    %181 = vmatpush1.bf16.msra.mxu0 %v154
    %182 = vmatprep.subr.bf16.mxu0 0
    %183 = vmatpush1.bf16.msra.mxu0 0
    %184 = vmatprep.subr.bf16.mxu0 0
    %185 = vmatpush1.bf16.msra.mxu0 0
    %186 = vmatprep.subr.bf16.mxu0 0
    %187 = vmatpush1.bf16.msra.mxu0 0
    %188 = vmatprep.mubr.bf16.mxu0 %v150
    %189 = vmatmul.mubr.bf16.gmra.mrb[0].mxu0 %v64
    %v190 = vpop.f32.mrb[0].mxu0
    %v191 = vadd.f32 0.0, %v190
    %v192 = vpop.f32.mrb[0].mxu0
    %v193 = vpop.f32.mrb[0].mxu0
    %v194 = vpop.f32.mrb[0].mxu0
    %195 = vdwg.mxu0
    %v196 = vadd.f32 %v22, %v191
    %vm197 = vcmask 9216
    %198 = vst.msk [vmem:[#allocation2] sm:$0x3] %vm197, %v196
    // Predicated region
    $region18: #{cnn_forward.5} parent=1 // pred_check
      %p199 = pneg %p16
    $region19: #{cnn_forward.5} parent=1 // pred_check_branch
      %201 = sbr.rel (%p199) target = $region21
    $region20: #{cnn_forward.5} parent=1 // pred_region
      %v202 = vld [vmem:[#allocation2] sm:$0x3]
      %v203 = vld [vmem:[%s2] sm:$0x1]
      %v205 = vlaneseq
      %v206 = vshrl.u32 %v205, 7
      %v207 = vsub.s32 0, %v206
      %v208 = vrot.slane %v203, %v207
      %v210 = vadd.f32 %v202, %v208
      %211 = vst.msk [vmem:[#allocation3] sm:$0x3] %vm197, %v210
    $region21: #{cnn_forward.5} parent=1 // pred_fallthru
      _
    // Predicated region
    $region22: #{cnn_forward.5} parent=1 // pred_check
      _
    $region23: #{cnn_forward.5} parent=1 // pred_check_branch
      %213 = sbr.rel (0) target = $region25
    $region24: #{cnn_forward.5} parent=1 // pred_region
      %s215 = ssub.s32 32, 32
      %216 = vsyncadd [#allocation4], %s215
      %s218 = sshll.u32 [#allocation3], 4
      %s219 = int_to_ptr.vmem [resolvable:$true] %s218
      %221 = dma.vmem_to_hbm [thread:$0]  %s219, 32, %s3, [#allocation4]
    $region25: #{cnn_forward.5} parent=1 // pred_fallthru
      _
    // Predicated region
    $region26: #{cnn_forward.5} parent=1 // pred_check
      _
    $region27: #{cnn_forward.5} parent=1 // pred_check_branch
      %223 = sbr.rel (0) target = $region29
    $region28: #{cnn_forward.5} parent=1 // pred_region
      %224 = dma.done [#allocation4], 32
    $region29: #{cnn_forward.5} parent=1 // pred_fallthru
      _
    %225 = vsyncpa [#allocation4], 1

// kernel: cnn_forward.4
$region0: #{cnn_forward.4}
  #allocation0 [shape = 'u32[]', space=smem, size = 0x4, offset = 0x4, fixed_abs, tag = 'smem constant byte address 0x4 - core index']
  #allocation1 [shape = 'u32[144,128]{1,0:T(1,128)}', space=vmem, size = 0x12000, scoped, tag = 'internal scratch']
  %s0 = inlined_call_operand.hbm [shape: bf16[2,7,7,16], index: 0, kind: input, shape index: {}]
  %s1 = inlined_call_operand.hbm [shape: bf16[144,8], index: 1, kind: input, shape index: {}]
  %s2 = inlined_call_operand.hbm [shape: f32[1,8], index: 2, kind: input, shape index: {}]
  %s3 = inlined_call_operand.hbm [shape: bf16[2,5,5,8], index: 3, kind: output, shape index: {}]
  %s4 = sld [smem:[#allocation0]]
  $region57: #{cnn_forward.4} parent=0
    _
  %s6 = ssub.s32 1, %s4
  %s7 = scalar_select 0, %s6, %s4
  $region1: #{cnn_forward.4} parent=0
    #allocation2 [shape = 'u8[28672]{0}', space=vmem, size = 0x7000, scoped, tag = 'input window, operand 0']
    #allocation3 [shape = 's32[2]{0}', space=sflag, size = 0x8, scoped, tag = 'scoped memory for cnn_forward.4']
    #allocation4 [shape = 's32[2]{0}', space=sflag, size = 0x8, scoped, tag = 'scoped memory for cnn_forward.4']
    #allocation5 [shape = 'u8[36864]{0}', space=vmem, size = 0x9000, scoped, tag = 'input window, operand 1, single buffered']
    #allocation6 [shape = 's32[1]{0}', space=sflag, size = 0x4, scoped, tag = 'scoped memory for cnn_forward.4']
    #allocation7 [shape = 'u8[512]{0}', space=vmem, size = 0x400, scoped, tag = 'input window, operand 2, single buffered']
    #allocation8 [shape = 'u8[20480]{0}', space=vmem, size = 0x5000, scoped, tag = 'output window, operand 0']
    %8 = vsyncpa [#allocation3], 0
    %s9 = scalar_lea.sflag [#allocation3], 1
    %10 = vsyncpa %s9, 0
    %11 = vsyncpa [#allocation6], 0
    %12 = vsyncpa [#allocation4], 0
    %s13 = scalar_lea.sflag [#allocation4], 1
    %14 = vsyncpa %s13, 0
    loop: start=0, step=1, limit=4
    $region2: #{cnn_forward.4} parent=1 // loop_pre_header
      _
    $region3: #{cnn_forward.4} parent=1 // loop_header
      %s16 = sphi 0, %s20
      %p17 = scmp.ge.s32.totalorder %s16, 4
      %s23 = sphi 0, %s35
      %s24 = sphi 0, %s31
      %s25 = sphi 0, %s23
      %s26 = sphi 0, %s24
      %s27 = sphi 0, %s25
      %s28 = sphi 0, %s26
      %s38 = sphi 0, %s40
      %s41 = sphi 0, %s38
      %s42 = sphi 0, %s41
      %s58 = sphi 0, %s42
      %s62 = sphi 0, %s62
      %s64 = sphi 0, %s62
      %s65 = sphi 0, %s64
      %s79 = sphi 0, %s65
      %s83 = sphi 0, %s83
      %s85 = sphi 0, %s83
      %s86 = sphi 0, %s85
      %s100 = sphi 0, %s86
      %s108 = sphi 0, %s110
      %s111 = sphi 0, %s108
      %s112 = sphi 0, %s111
      %s128 = sphi 0, %s112
    $region4: #{cnn_forward.4} parent=1 // loop_header_branch
      %19 = sbr.rel (%p17) target = $region8
    $region5: #{cnn_forward.4} parent=1 // loop_body
      %s21 = ssub.s32 %s16, 1
      %s22 = ssub.s32 %s16, 2
      %s29 = sadd.s32 1, %s24
      %p30 = scmp.ge.s32.totalorder %s29, 1
      %s31 = scalar_select %p30, 0, %s29
      %s32 = sadd.s32 1, %s23
      %s33 = scalar_select %p30, %s32, %s23
      %p34 = scmp.ge.s32.totalorder %s33, 2
      %s35 = scalar_select %p34, 0, %s33
      %s36 = ssub.s32 %s23, %s35
      %p37 = scmp.eq.s32.totalorder %s36, 0
      %s39 = sadd.s32 %s38, 1
      %s40 = scalar_select %p37, %s38, %s39
      %p43 = pneg %p37
      %p44 = scmp.eq.s32.totalorder %s16, 1
      %p45 = por %p43, %p44
      %p46 = scmp.ne.s32.totalorder %s38, %s41
      %p47 = scmp.eq.s32.totalorder %s16, 0
      %p48 = por %p46, %p47
      %p49 = scmp.ne.s32.totalorder %s38, %s41
      %p50 = scmp.eq.s32.totalorder %s21, 1
      %p51 = por %p49, %p50
      %p52 = scmp.ne.s32.totalorder %s41, %s42
      %p53 = scmp.eq.s32.totalorder %s21, 0
      %p54 = por %p52, %p53
      %p55 = scmp.ne.s32.totalorder %s41, %s42
      %p56 = scmp.eq.s32.totalorder %s22, 1
      %p57 = por %p55, %p56
      %p59 = scmp.ne.s32.totalorder %s42, %s58
      %p60 = scmp.eq.s32.totalorder %s22, 0
      %p61 = por %p59, %p60
      %s63 = sadd.s32 %s62, 1
      %p66 = scmp.eq.s32.totalorder %s16, 1
      %p67 = scmp.ne.s32.totalorder %s62, %s64
      %p68 = scmp.eq.s32.totalorder %s16, 0
      %p69 = por %p67, %p68
      %p70 = scmp.ne.s32.totalorder %s62, %s64
      %p71 = scmp.eq.s32.totalorder %s21, 1
      %p72 = por %p70, %p71
      %p73 = scmp.ne.s32.totalorder %s64, %s65
      %p74 = scmp.eq.s32.totalorder %s21, 0
      %p75 = por %p73, %p74
      %p76 = scmp.ne.s32.totalorder %s64, %s65
      %p77 = scmp.eq.s32.totalorder %s22, 1
      %p78 = por %p76, %p77
      %p80 = scmp.ne.s32.totalorder %s65, %s79
      %p81 = scmp.eq.s32.totalorder %s22, 0
      %p82 = por %p80, %p81
      %s84 = sadd.s32 %s83, 1
      %p87 = scmp.eq.s32.totalorder %s16, 1
      %p88 = scmp.ne.s32.totalorder %s83, %s85
      %p89 = scmp.eq.s32.totalorder %s16, 0
      %p90 = por %p88, %p89
      %p91 = scmp.ne.s32.totalorder %s83, %s85
      %p92 = scmp.eq.s32.totalorder %s21, 1
      %p93 = por %p91, %p92
      %p94 = scmp.ne.s32.totalorder %s85, %s86
      %p95 = scmp.eq.s32.totalorder %s21, 0
      %p96 = por %p94, %p95
      %p97 = scmp.ne.s32.totalorder %s85, %s86
      %p98 = scmp.eq.s32.totalorder %s22, 1
      %p99 = por %p97, %p98
      %p101 = scmp.ne.s32.totalorder %s86, %s100
      %p102 = scmp.eq.s32.totalorder %s22, 0
      %p103 = por %p101, %p102
      %s104 = ssub.s32 %s23, %s35
      %s105 = ssub.s32 %s24, %s31
      %s106 = sor.u32 %s104, %s105
      %p107 = scmp.eq.s32.totalorder %s106, 0
      %s109 = sadd.s32 %s108, 1
      %s110 = scalar_select %p107, %s108, %s109
      %p113 = pneg %p107
      %p114 = scmp.eq.s32.totalorder %s16, 1
      %p115 = por %p113, %p114
      %p116 = scmp.ne.s32.totalorder %s108, %s111
      %p117 = scmp.eq.s32.totalorder %s16, 0
      %p118 = por %p116, %p117
      %p119 = scmp.ne.s32.totalorder %s108, %s111
      %p120 = scmp.eq.s32.totalorder %s21, 1
      %p121 = por %p119, %p120
      %p122 = scmp.ne.s32.totalorder %s111, %s112
      %p123 = scmp.eq.s32.totalorder %s21, 0
      %p124 = por %p122, %p123
      %p125 = scmp.ne.s32.totalorder %s111, %s112
      %p126 = scmp.eq.s32.totalorder %s22, 1
      %p127 = por %p125, %p126
      %p129 = scmp.ne.s32.totalorder %s112, %s128
      %p130 = scmp.eq.s32.totalorder %s22, 0
      %p131 = por %p129, %p130
      %p132 = scmp.le.s32.totalorder 1, %s16
      %p133 = scmp.lt.s32.totalorder %s16, 3
      %p134 = pnand %p132, %p133
      %p135 = pneg %p134
      // Predicated region
      $region9: #{cnn_forward.4} parent=5 // pred_check
        _
      $region10: #{cnn_forward.4} parent=5 // pred_check_branch
        %137 = sbr.rel (%p134) target = $region12
      $region11: #{cnn_forward.4} parent=5 // pred_region
        %s138 = ssub.s32 %s16, 1
        // Predicated region
        $region13: #{cnn_forward.4} parent=11 // pred_check
          %p139 = pneg %p75
        $region14: #{cnn_forward.4} parent=11 // pred_check_branch
          %141 = sbr.rel (%p139) target = $region16
        $region15: #{cnn_forward.4} parent=11 // pred_region
          %s143 = ssub.s32 1152, 1152
          %144 = vsyncadd [#allocation6], %s143
          %s145 = sshll.u32 [#allocation5], 4
          %s146 = int_to_ptr.vmem [resolvable:$true] %s145
          %151 = dma.hbm_to_vmem [thread:$0]  %s1, 1152, %s146, [#allocation6], 64, 64, 4
        $region16: #{cnn_forward.4} parent=11 // pred_fallthru
          _
        // Predicated region
        $region17: #{cnn_forward.4} parent=11 // pred_check
          %p152 = pneg %p96
        $region18: #{cnn_forward.4} parent=11 // pred_check_branch
          %154 = sbr.rel (%p152) target = $region20
        $region19: #{cnn_forward.4} parent=11 // pred_region
          %s156 = ssub.s32 16, 16
          %157 = vsyncadd [#allocation6], %s156
          %s159 = sshll.u32 [#allocation7], 4
          %s160 = int_to_ptr.vmem [resolvable:$true] %s159
          %162 = dma.hbm_to_vmem [thread:$0]  %s2, 16, %s160, [#allocation6]
        $region20: #{cnn_forward.4} parent=11 // pred_fallthru
          _
      $region12: #{cnn_forward.4} parent=5 // pred_fallthru
        _
      %p163 = scmp.lt.s32.totalorder %s16, 2
      // Predicated region
      $region21: #{cnn_forward.4} parent=5 // pred_check
        %p164 = pneg %p163
      $region22: #{cnn_forward.4} parent=5 // pred_check_branch
        %166 = sbr.rel (%p164) target = $region24
      $region23: #{cnn_forward.4} parent=5 // pred_region
        // Predicated region
        $region25: #{cnn_forward.4} parent=23 // pred_check
          %p167 = pneg %p48
        $region26: #{cnn_forward.4} parent=23 // pred_check_branch
          %169 = sbr.rel (%p167) target = $region28
        $region27: #{cnn_forward.4} parent=23 // pred_region
          %s170 = sand.u32 %s38, 1
          %s171 = scalar_lea.sflag [#allocation3], %s170
          %s172 = sand.u32 %s38, 1
          %s173 = smul.addr %s172, 28
          %s174 = scalar_lea.vmem [#allocation2], %s173
          %s176 = ssub.s32 448, 448
          %177 = vsyncadd %s171, %s176
          %s178 = smul.addr %s23, 7
          %s179 = smul.addr %s178, 64
          %s180 = scalar_lea.hbm %s0, %s179
          %s181 = sshll.u32 %s174, 4
          %s182 = int_to_ptr.vmem [resolvable:$true] %s181
          %187 = dma.hbm_to_vmem [thread:$0]  %s180, 448, %s182, %s171, 64, 64, 4
        $region28: #{cnn_forward.4} parent=23 // pred_fallthru
          _
      $region24: #{cnn_forward.4} parent=5 // pred_fallthru
        _
      %p188 = scmp.le.s32.totalorder 1, %s16
      %p189 = scmp.lt.s32.totalorder %s16, 3
      %p190 = pnand %p188, %p189
      %p191 = pneg %p190
      // Predicated region
      $region29: #{cnn_forward.4} parent=5 // pred_check
        _
      $region30: #{cnn_forward.4} parent=5 // pred_check_branch
        %193 = sbr.rel (%p190) target = $region32
      $region31: #{cnn_forward.4} parent=5 // pred_region
        %s194 = ssub.s32 %s16, 1
        %s195 = sand.u32 %s41, 1
        %s196 = scalar_lea.sflag [#allocation3], %s195
        %s197 = sand.u32 %s41, 1
        %s198 = smul.addr %s197, 28
        %s199 = scalar_lea.vmem [#allocation2], %s198
        // Predicated region
        $region33: #{cnn_forward.4} parent=31 // pred_check
          %p200 = pneg %p54
        $region34: #{cnn_forward.4} parent=31 // pred_check_branch
          %202 = sbr.rel (%p200) target = $region36
        $region35: #{cnn_forward.4} parent=31 // pred_region
          %203 = dma.done %s196, 448
        $region36: #{cnn_forward.4} parent=31 // pred_fallthru
          _
        // Predicated region
        $region37: #{cnn_forward.4} parent=31 // pred_check
          %p204 = pneg %p75
        $region38: #{cnn_forward.4} parent=31 // pred_check_branch
          %206 = sbr.rel (%p204) target = $region40
        $region39: #{cnn_forward.4} parent=31 // pred_region
          %207 = dma.done [#allocation6], 1152
        $region40: #{cnn_forward.4} parent=31 // pred_fallthru
          _
        // Predicated region
        $region41: #{cnn_forward.4} parent=31 // pred_check
          %p208 = pneg %p96
        $region42: #{cnn_forward.4} parent=31 // pred_check_branch
          %210 = sbr.rel (%p208) target = $region44
        $region43: #{cnn_forward.4} parent=31 // pred_region
          %211 = dma.done [#allocation6], 16
        $region44: #{cnn_forward.4} parent=31 // pred_fallthru
          _
        %s212 = sand.u32 %s41, 1
        %s213 = scalar_lea.sflag [#allocation3], %s212
        %s214 = sand.u32 %s41, 1
        %s215 = smul.addr %s214, 28
        %s216 = scalar_lea.vmem [#allocation2], %s215
        %p217 = pneg %p54
        %p218 = pneg %p51
        %p219 = pneg %p75
        %p220 = pneg %p72
        %p221 = pneg %p96
        %p222 = pneg %p93
        %p223 = pneg %p124
        %p224 = pneg %p121
        %s225 = sand.u32 %s111, 1
        %s226 = scalar_lea.sflag [#allocation4], %s225
        %s227 = sand.u32 %s111, 1
        %s228 = smul.addr %s227, 20
        %s229 = scalar_lea.vmem [#allocation8], %s228
        %s230 = smul.u32 5, %s26
        %s232 = smul.u32 %s26, 5
        %s233 = smul.addr %s232, 4
        %s234 = scalar_lea.vmem %s199, %s233 [#allocation2]
        %v235 = vld [vmem:[%s234] sm:$0xf]
        %v236 = vld [vmem:[%s234 + $0x4] sm:$0xf]
        %v237 = vld [vmem:[%s234 + $0x8] sm:$0xf]
        %v238 = vld [vmem:[%s234 + $0xc] sm:$0xf]
        %v239 = vld [vmem:[%s234 + $0x10] sm:$0xf]
        %v240 = vld [vmem:[%s234 + $0x14] sm:$0xf]
        %v241 = vld [vmem:[%s234 + $0x18] sm:$0xf]
        %v247 = vunpack.c.l.b16 %v235
        %v248 = vunpack.c.l.b16 %v236
        %v249 = vunpack.c.l.b16 %v237
        %v250 = vunpack.c.l.b16 %v238
        %v251 = vunpack.c.l.b16 %v239
        %v252 = vpack.c.b16 %v247, %v247
        %v253 = vpack.c.b16 %v248, %v248
        %v254 = vpack.c.b16 %v249, %v249
        %v255 = vpack.c.b16 %v250, %v250
        %v256 = vpack.c.b16 %v251, %v251
        %v258 = vshrl.u32 %v252, 16
        %v260 = vshll.u32 %v252, 16
        %v262 = vrot.slane %v260, 1
        %v263 = vor.u32 %v258, %v262
        %v265 = vshrl.u32 %v253, 16
        %v267 = vshll.u32 %v253, 16
        %v269 = vrot.slane %v267, 1
        %v270 = vor.u32 %v265, %v269
        %v272 = vshrl.u32 %v254, 16
        %v274 = vshll.u32 %v254, 16
        %v276 = vrot.slane %v274, 1
        %v277 = vor.u32 %v272, %v276
        %v279 = vshrl.u32 %v255, 16
        %v281 = vshll.u32 %v255, 16
        %v283 = vrot.slane %v281, 1
        %v284 = vor.u32 %v279, %v283
        %v286 = vshrl.u32 %v256, 16
        %v288 = vshll.u32 %v256, 16
        %v290 = vrot.slane %v288, 1
        %v291 = vor.u32 %v286, %v290
        %292 = vrot.lane.b32.xlu0 %v263, 16
        %v293 = vpop.permute.xlu0 %292
        %294 = vrot.lane.b32.xlu0 %v270, 16
        %v295 = vpop.permute.xlu0 %294
        %296 = vrot.lane.b32.xlu0 %v277, 16
        %v297 = vpop.permute.xlu0 %296
        %298 = vrot.lane.b32.xlu0 %v284, 16
        %v299 = vpop.permute.xlu0 %298
        %300 = vrot.lane.b32.xlu0 %v291, 16
        %v301 = vpop.permute.xlu0 %300
        %v302 = vrot.slane %v252, 1
        %v303 = vrot.slane %v253, 1
        %v304 = vrot.slane %v254, 1
        %v305 = vrot.slane %v255, 1
        %v306 = vrot.slane %v256, 1
        %307 = vrot.lane.b32.xlu0 %v302, 32
        %v308 = vpop.permute.xlu0 %307
        %309 = vrot.lane.b32.xlu0 %v303, 32
        %v310 = vpop.permute.xlu0 %309
        %311 = vrot.lane.b32.xlu0 %v304, 32
        %v312 = vpop.permute.xlu0 %311
        %313 = vrot.lane.b32.xlu0 %v305, 32
        %v314 = vpop.permute.xlu0 %313
        %315 = vrot.lane.b32.xlu0 %v306, 32
        %v316 = vpop.permute.xlu0 %315
        %v318 = vunpack.c.l.b16 %v240
        %v319 = vpack.c.b16 %v318, %v318
        %320 = vrot.lane.b32.xlu0 %v253, 48
        %v321 = vpop.permute.xlu0 %320
        %322 = vrot.lane.b32.xlu0 %v254, 48
        %v323 = vpop.permute.xlu0 %322
        %324 = vrot.lane.b32.xlu0 %v255, 48
        %v325 = vpop.permute.xlu0 %324
        %326 = vrot.lane.b32.xlu0 %v256, 48
        %v327 = vpop.permute.xlu0 %326
        %328 = vrot.lane.b32.xlu0 %v319, 48
        %v329 = vpop.permute.xlu0 %328
        %v331 = vshrl.u32 %v319, 16
        %v333 = vshll.u32 %v319, 16
        %v335 = vrot.slane %v333, 1
        %v336 = vor.u32 %v331, %v335
        %337 = vrot.lane.b32.xlu0 %v270, 64
        %v338 = vpop.permute.xlu0 %337
        %339 = vrot.lane.b32.xlu0 %v277, 64
        %v340 = vpop.permute.xlu0 %339
        %341 = vrot.lane.b32.xlu0 %v284, 64
        %v342 = vpop.permute.xlu0 %341
        %343 = vrot.lane.b32.xlu0 %v291, 64
        %v344 = vpop.permute.xlu0 %343
        %345 = vrot.lane.b32.xlu0 %v336, 64
        %v346 = vpop.permute.xlu0 %345
        %v347 = vrot.slane %v319, 1
        %348 = vrot.lane.b32.xlu0 %v303, 80
        %v349 = vpop.permute.xlu0 %348
        %350 = vrot.lane.b32.xlu0 %v304, 80
        %v351 = vpop.permute.xlu0 %350
        %352 = vrot.lane.b32.xlu0 %v305, 80
        %v353 = vpop.permute.xlu0 %352
        %354 = vrot.lane.b32.xlu0 %v306, 80
        %v355 = vpop.permute.xlu0 %354
        %356 = vrot.lane.b32.xlu0 %v347, 80
        %v357 = vpop.permute.xlu0 %356
        %v359 = vunpack.c.l.b16 %v241
        %v360 = vpack.c.b16 %v359, %v359
        %361 = vrot.lane.b32.xlu0 %v254, 96
        %v362 = vpop.permute.xlu0 %361
        %363 = vrot.lane.b32.xlu0 %v255, 96
        %v364 = vpop.permute.xlu0 %363
        %365 = vrot.lane.b32.xlu0 %v256, 96
        %v366 = vpop.permute.xlu0 %365
        %367 = vrot.lane.b32.xlu0 %v319, 96
        %v368 = vpop.permute.xlu0 %367
        %369 = vrot.lane.b32.xlu0 %v360, 96
        %v370 = vpop.permute.xlu0 %369
        %v372 = vshrl.u32 %v360, 16
        %v374 = vshll.u32 %v360, 16
        %v376 = vrot.slane %v374, 1
        %v377 = vor.u32 %v372, %v376
        %378 = vrot.lane.b32.xlu0 %v277, 112
        %v379 = vpop.permute.xlu0 %378
        %380 = vrot.lane.b32.xlu0 %v284, 112
        %v381 = vpop.permute.xlu0 %380
        %382 = vrot.lane.b32.xlu0 %v291, 112
        %v383 = vpop.permute.xlu0 %382
        %384 = vrot.lane.b32.xlu0 %v336, 112
        %v385 = vpop.permute.xlu0 %384
        %386 = vrot.lane.b32.xlu0 %v377, 112
        %v387 = vpop.permute.xlu0 %386
        %v388 = vrot.slane %v360, 1
        %vm389 = vcmask 130048
        %v392 = vsel %vm389, %v235, %v293
        %v395 = vsel %vm389, %v236, %v295
        %v398 = vsel %vm389, %v237, %v297
        %v401 = vsel %vm389, %v238, %v299
        %v404 = vsel %vm389, %v239, %v301
        %vm405 = vcmask 261120
        %v407 = vsel %vm405, %v392, %v308
        %v409 = vsel %vm405, %v395, %v310
        %v411 = vsel %vm405, %v398, %v312
        %v413 = vsel %vm405, %v401, %v314
        %v415 = vsel %vm405, %v404, %v316
        %vm416 = vcmask 392192
        %v418 = vsel %vm416, %v407, %v321
        %v420 = vsel %vm416, %v409, %v323
        %v422 = vsel %vm416, %v411, %v325
        %v424 = vsel %vm416, %v413, %v327
        %v426 = vsel %vm416, %v415, %v329
        %vm427 = vcmask 523264
        %v429 = vsel %vm427, %v418, %v338
        %v431 = vsel %vm427, %v420, %v340
        %v433 = vsel %vm427, %v422, %v342
        %v435 = vsel %vm427, %v424, %v344
        %v437 = vsel %vm427, %v426, %v346
        %vm438 = vcmask 654336
        %v440 = vsel %vm438, %v429, %v349
        %v442 = vsel %vm438, %v431, %v351
        %v444 = vsel %vm438, %v433, %v353
        %v446 = vsel %vm438, %v435, %v355
        %v448 = vsel %vm438, %v437, %v357
        %vm449 = vcmask 785408
        %v451 = vsel %vm449, %v440, %v362
        %v453 = vsel %vm449, %v442, %v364
        %v455 = vsel %vm449, %v444, %v366
        %v457 = vsel %vm449, %v446, %v368
        %v459 = vsel %vm449, %v448, %v370
        %vm460 = vcmask 916480
        %v462 = vsel %vm460, %v451, %v379
        %v464 = vsel %vm460, %v453, %v381
        %v466 = vsel %vm460, %v455, %v383
        %v468 = vsel %vm460, %v457, %v385
        %v470 = vsel %vm460, %v459, %v387
        %v476 = vcombine.low %v462, %v304
        %v478 = vunpack.c.l.s4 1966171168
        %v479 = vunpack.c.0.s8 %v478
        %v480 = vlaneseq
        %v481 = vshrl.u32 %v480, 7
        %v482 = vsub.s32 %v479, %v481
        %v483 = vrot.slane %v476, %v482
        %v484 = vcombine.high %v483, %v483
        %v486 = vunpack.c.l.s4 1966171168
        %v487 = vunpack.c.0.s8 %v486
        %v488 = vlaneseq
        %v489 = vshrl.u32 %v488, 7
        %v490 = vsub.s32 %v487, %v489
        %v491 = vrot.slane %v483, %v490
        %v493 = vunpack.c.l.s4 1966171168
        %v494 = vunpack.c.0.s8 %v493
        %v495 = vlaneseq
        %v496 = vshrl.u32 %v495, 7
        %v497 = vsub.s32 %v494, %v496
        %v498 = vrot.slane %v484, %v497
        %v499 = vcombine.high %v491, %v491
        %v500 = vcombine.low %v464, %v305
        %v502 = vunpack.c.l.s4 1966171168
        %v503 = vunpack.c.0.s8 %v502
        %v504 = vlaneseq
        %v505 = vshrl.u32 %v504, 7
        %v506 = vsub.s32 %v503, %v505
        %v507 = vrot.slane %v500, %v506
        %v508 = vcombine.high %v507, %v507
        %v510 = vunpack.c.l.s4 1966171168
        %v511 = vunpack.c.0.s8 %v510
        %v512 = vlaneseq
        %v513 = vshrl.u32 %v512, 7
        %v514 = vsub.s32 %v511, %v513
        %v515 = vrot.slane %v507, %v514
        %v517 = vunpack.c.l.s4 1966171168
        %v518 = vunpack.c.0.s8 %v517
        %v519 = vlaneseq
        %v520 = vshrl.u32 %v519, 7
        %v521 = vsub.s32 %v518, %v520
        %v522 = vrot.slane %v508, %v521
        %v523 = vcombine.high %v515, %v515
        %v524 = vcombine.low %v466, %v306
        %v526 = vunpack.c.l.s4 1966171168
        %v527 = vunpack.c.0.s8 %v526
        %v528 = vlaneseq
        %v529 = vshrl.u32 %v528, 7
        %v530 = vsub.s32 %v527, %v529
        %v531 = vrot.slane %v524, %v530
        %v532 = vcombine.high %v531, %v531
        %v534 = vunpack.c.l.s4 1966171168
        %v535 = vunpack.c.0.s8 %v534
        %v536 = vlaneseq
        %v537 = vshrl.u32 %v536, 7
        %v538 = vsub.s32 %v535, %v537
        %v539 = vrot.slane %v531, %v538
        %v541 = vunpack.c.l.s4 1966171168
        %v542 = vunpack.c.0.s8 %v541
        %v543 = vlaneseq
        %v544 = vshrl.u32 %v543, 7
        %v545 = vsub.s32 %v542, %v544
        %v546 = vrot.slane %v532, %v545
        %v547 = vcombine.high %v539, %v539
        %v548 = vcombine.low %v468, %v347
        %v550 = vunpack.c.l.s4 1966171168
        %v551 = vunpack.c.0.s8 %v550
        %v552 = vlaneseq
        %v553 = vshrl.u32 %v552, 7
        %v554 = vsub.s32 %v551, %v553
        %v555 = vrot.slane %v548, %v554
        %v556 = vcombine.high %v555, %v555
        %v558 = vunpack.c.l.s4 1966171168
        %v559 = vunpack.c.0.s8 %v558
        %v560 = vlaneseq
        %v561 = vshrl.u32 %v560, 7
        %v562 = vsub.s32 %v559, %v561
        %v563 = vrot.slane %v555, %v562
        %v565 = vunpack.c.l.s4 1966171168
        %v566 = vunpack.c.0.s8 %v565
        %v567 = vlaneseq
        %v568 = vshrl.u32 %v567, 7
        %v569 = vsub.s32 %v566, %v568
        %v570 = vrot.slane %v556, %v569
        %v571 = vcombine.high %v563, %v563
        %v572 = vcombine.low %v470, %v388
        %v574 = vunpack.c.l.s4 1966171168
        %v575 = vunpack.c.0.s8 %v574
        %v576 = vlaneseq
        %v577 = vshrl.u32 %v576, 7
        %v578 = vsub.s32 %v575, %v577
        %v579 = vrot.slane %v572, %v578
        %v580 = vcombine.high %v579, %v579
        %v582 = vunpack.c.l.s4 1966171168
        %v583 = vunpack.c.0.s8 %v582
        %v584 = vlaneseq
        %v585 = vshrl.u32 %v584, 7
        %v586 = vsub.s32 %v583, %v585
        %v587 = vrot.slane %v579, %v586
        %v589 = vunpack.c.l.s4 1966171168
        %v590 = vunpack.c.0.s8 %v589
        %v591 = vlaneseq
        %v592 = vshrl.u32 %v591, 7
        %v593 = vsub.s32 %v590, %v592
        %v594 = vrot.slane %v580, %v593
        %v595 = vcombine.high %v587, %v587
        %v596 = vunpack.i.l.s16 %v491
        %v597 = vunpack.i.h.s16 %v491
        %v598 = vunpack.i.l.s16 %v498
        %v599 = vunpack.i.h.s16 %v498
        %v600 = vunpack.i.l.s16 %v499
        %v601 = vunpack.i.l.s16 %v515
        %v602 = vunpack.i.h.s16 %v515
        %v603 = vunpack.i.l.s16 %v522
        %v604 = vunpack.i.h.s16 %v522
        %v605 = vunpack.i.l.s16 %v523
        %v606 = vunpack.i.l.s16 %v539
        %v607 = vunpack.i.h.s16 %v539
        %v608 = vunpack.i.l.s16 %v546
        %v609 = vunpack.i.h.s16 %v546
        %v610 = vunpack.i.l.s16 %v547
        %v611 = vunpack.i.l.s16 %v563
        %v612 = vunpack.i.h.s16 %v563
        %v613 = vunpack.i.l.s16 %v570
        %v614 = vunpack.i.h.s16 %v570
        %v615 = vunpack.i.l.s16 %v571
        %v616 = vunpack.i.l.s16 %v587
        %v617 = vunpack.i.h.s16 %v587
        %v618 = vunpack.i.l.s16 %v594
        %v619 = vunpack.i.h.s16 %v594
        %v620 = vunpack.i.l.s16 %v595
        %v621 = vld [vmem:[#allocation5] sm:$0xf]
        %v622 = vld [vmem:[#allocation5 + $0x4] sm:$0xf]
        %v623 = vld [vmem:[#allocation5 + $0x8] sm:$0xf]
        %v624 = vld [vmem:[#allocation5 + $0xc] sm:$0xf]
        %v625 = vld [vmem:[#allocation5 + $0x10] sm:$0xf]
        %v626 = vld [vmem:[#allocation5 + $0x14] sm:$0xf]
        %v627 = vld [vmem:[#allocation5 + $0x18] sm:$0xf]
        %v628 = vld [vmem:[#allocation5 + $0x1c] sm:$0xf]
        %v629 = vld [vmem:[#allocation5 + $0x20] sm:$0xf]
        %v630 = vld [vmem:[#allocation5 + $0x24] sm:$0xf]
        %v631 = vld [vmem:[#allocation5 + $0x28] sm:$0xf]
        %v632 = vld [vmem:[#allocation5 + $0x2c] sm:$0xf]
        %v633 = vld [vmem:[#allocation5 + $0x30] sm:$0xf]
        %v634 = vld [vmem:[#allocation5 + $0x34] sm:$0xf]
        %v635 = vld [vmem:[#allocation5 + $0x38] sm:$0xf]
        %v636 = vld [vmem:[#allocation5 + $0x3c] sm:$0xf]
        %v637 = vld [vmem:[#allocation5 + $0x40] sm:$0xf]
        %v638 = vld [vmem:[#allocation5 + $0x44] sm:$0xf]
        %v639 = vpack.i.b16 %v597, %v596
        %v640 = vpack.i.b16 %v599, %v598
        %v641 = vpack.i.b16 %v601, %v600
        %v642 = vpack.i.b16 %v603, %v602
        %v643 = vpack.i.b16 %v605, %v604
        %v644 = vpack.i.b16 %v607, %v606
        %v645 = vpack.i.b16 %v609, %v608
        %v646 = vpack.i.b16 %v611, %v610
        %v647 = vpack.i.b16 %v613, %v612
        %v648 = vpack.i.b16 %v615, %v614
        %v649 = vpack.i.b16 %v617, %v616
        %v650 = vpack.i.b16 %v619, %v618
        %v652 = vcombine.low %v639, %v640
        %v653 = vcombine.low %v641, %v642
        %v654 = vcombine.low %v643, %v644
        %v655 = vcombine.low %v645, %v646
        %v657 = vunpack.c.l.s4 1966171168
        %v658 = vunpack.c.0.s8 %v657
        %v659 = vlaneseq
        %v660 = vshrl.u32 %v659, 7
        %v661 = vsub.s32 %v658, %v660
        %v662 = vrot.slane %v652, %v661
        %v664 = vunpack.c.l.s4 1966171168
        %v665 = vunpack.c.0.s8 %v664
        %v666 = vlaneseq
        %v667 = vshrl.u32 %v666, 7
        %v668 = vsub.s32 %v665, %v667
        %v669 = vrot.slane %v653, %v668
        %v671 = vunpack.c.l.s4 1966171168
        %v672 = vunpack.c.0.s8 %v671
        %v673 = vlaneseq
        %v674 = vshrl.u32 %v673, 7
        %v675 = vsub.s32 %v672, %v674
        %v676 = vrot.slane %v654, %v675
        %v678 = vunpack.c.l.s4 1966171168
        %v679 = vunpack.c.0.s8 %v678
        %v680 = vlaneseq
        %v681 = vshrl.u32 %v680, 7
        %v682 = vsub.s32 %v679, %v681
        %v683 = vrot.slane %v655, %v682
        %v684 = vcombine.low %v662, %v669
        %v685 = vcombine.high %v662, %v669
        %v686 = vcombine.low %v676, %v683
        %v687 = vcombine.high %v676, %v683
        %v689 = vunpack.c.l.s4 1966171168
        %v690 = vunpack.c.0.s8 %v689
        %v691 = vlaneseq
        %v692 = vshrl.u32 %v691, 7
        %v693 = vsub.s32 %v690, %v692
        %v694 = vrot.slane %v684, %v693
        %v696 = vunpack.c.l.s4 1966171168
        %v697 = vunpack.c.0.s8 %v696
        %v698 = vlaneseq
        %v699 = vshrl.u32 %v698, 7
        %v700 = vsub.s32 %v697, %v699
        %v701 = vrot.slane %v685, %v700
        %v703 = vunpack.c.l.s4 1966171168
        %v704 = vunpack.c.0.s8 %v703
        %v705 = vlaneseq
        %v706 = vshrl.u32 %v705, 7
        %v707 = vsub.s32 %v704, %v706
        %v708 = vrot.slane %v686, %v707
        %v710 = vunpack.c.l.s4 1966171168
        %v711 = vunpack.c.0.s8 %v710
        %v712 = vlaneseq
        %v713 = vshrl.u32 %v712, 7
        %v714 = vsub.s32 %v711, %v713
        %v715 = vrot.slane %v687, %v714
        %v716 = vcombine.low %v694, %v708
        %v717 = vcombine.low %v701, %v715
        %v718 = vcombine.low %v647, %v648
        %v719 = vcombine.low %v649, %v650
        %v721 = vunpack.c.l.s4 1966171168
        %v722 = vunpack.c.0.s8 %v721
        %v723 = vlaneseq
        %v724 = vshrl.u32 %v723, 7
        %v725 = vsub.s32 %v722, %v724
        %v726 = vrot.slane %v718, %v725
        %v728 = vunpack.c.l.s4 1966171168
        %v729 = vunpack.c.0.s8 %v728
        %v730 = vlaneseq
        %v731 = vshrl.u32 %v730, 7
        %v732 = vsub.s32 %v729, %v731
        %v733 = vrot.slane %v719, %v732
        %v735 = vunpack.c.l.s4 1966171168
        %v736 = vunpack.c.0.s8 %v735
        %v737 = vlaneseq
        %v738 = vshrl.u32 %v737, 7
        %v739 = vsub.s32 %v736, %v738
        %v740 = vrot.slane %v620, %v739
        %v741 = vcombine.low %v726, %v733
        %v742 = vcombine.high %v726, %v733
        %v743 = vcombine.high %v740, %v740
        %v745 = vunpack.c.l.s4 1966171168
        %v746 = vunpack.c.0.s8 %v745
        %v747 = vlaneseq
        %v748 = vshrl.u32 %v747, 7
        %v749 = vsub.s32 %v746, %v748
        %v750 = vrot.slane %v741, %v749
        %v752 = vunpack.c.l.s4 1966171168
        %v753 = vunpack.c.0.s8 %v752
        %v754 = vlaneseq
        %v755 = vshrl.u32 %v754, 7
        %v756 = vsub.s32 %v753, %v755
        %v757 = vrot.slane %v742, %v756
        %v759 = vunpack.c.l.s4 1966171168
        %v760 = vunpack.c.0.s8 %v759
        %v761 = vlaneseq
        %v762 = vshrl.u32 %v761, 7
        %v763 = vsub.s32 %v760, %v762
        %v764 = vrot.slane %v740, %v763
        %v766 = vunpack.c.l.s4 1966171168
        %v767 = vunpack.c.0.s8 %v766
        %v768 = vlaneseq
        %v769 = vshrl.u32 %v768, 7
        %v770 = vsub.s32 %v767, %v769
        %v771 = vrot.slane %v743, %v770
        %v772 = vcombine.low %v750, %v764
        %v773 = vcombine.low %v757, %v771
        %v794 = vunpack.c.l.b16 %v621
        %v795 = vunpack.c.l.b16 %v622
        %v796 = vunpack.c.l.b16 %v623
        %v797 = vunpack.c.l.b16 %v624
        %v798 = vunpack.c.l.b16 %v625
        %v799 = vunpack.c.l.b16 %v626
        %v800 = vunpack.c.l.b16 %v627
        %v801 = vunpack.c.l.b16 %v628
        %v802 = vunpack.c.l.b16 %v629
        %v803 = vunpack.c.l.b16 %v630
        %v804 = vunpack.c.l.b16 %v631
        %v805 = vunpack.c.l.b16 %v632
        %v806 = vunpack.c.l.b16 %v633
        %v807 = vunpack.c.l.b16 %v634
        %v808 = vunpack.c.l.b16 %v635
        %v809 = vunpack.c.l.b16 %v636
        %v810 = vunpack.c.l.b16 %v637
        %v811 = vunpack.c.l.b16 %v638
        %v812 = vpack.c.b16 %v795, %v794
        %v813 = vpack.c.b16 %v797, %v796
        %v814 = vpack.c.b16 %v799, %v798
        %v815 = vpack.c.b16 %v801, %v800
        %v816 = vpack.c.b16 %v803, %v802
        %v817 = vpack.c.b16 %v805, %v804
        %v818 = vpack.c.b16 %v807, %v806
        %v819 = vpack.c.b16 %v809, %v808
        %v820 = vpack.c.b16 %v811, %v810
        %v831 = vsel %vm389, %v717, 0
        %v834 = vsel %vm389, %v773, 0
        %836 = vmatprep.subr.bf16.mxu0 0
        %837 = vmatpush1.bf16.msra.mxu0 %v812
        %838 = vmatprep.subr.bf16.mxu0 0
        %839 = vmatpush1.bf16.msra.mxu0 %v813
        %840 = vmatprep.subr.bf16.mxu0 0
        %841 = vmatpush1.bf16.msra.mxu0 %v814
        %842 = vmatprep.subr.bf16.mxu0 0
        %843 = vmatpush1.bf16.msra.mxu0 %v815
        %844 = vmatprep.subr.bf16.mxu0 0
        %845 = vmatpush1.bf16.msra.mxu0 %v816
        %846 = vmatprep.subr.bf16.mxu0 0
        %847 = vmatpush1.bf16.msra.mxu0 %v817
        %848 = vmatprep.subr.bf16.mxu0 0
        %849 = vmatpush1.bf16.msra.mxu0 %v818
        %850 = vmatprep.subr.bf16.mxu0 0
        %851 = vmatpush1.bf16.msra.mxu0 %v819
        %852 = vmatprep.subr.bf16.mxu0 0
        %853 = vmatpush1.bf16.msra.mxu0 %v820
        %854 = vmatprep.subr.bf16.mxu0 0
        %855 = vmatpush1.bf16.msra.mxu0 0
        %856 = vmatprep.subr.bf16.mxu0 0
        %857 = vmatpush1.bf16.msra.mxu0 0
        %858 = vmatprep.subr.bf16.mxu0 0
        %859 = vmatpush1.bf16.msra.mxu0 0
        %860 = vmatprep.subr.bf16.mxu0 0
        %861 = vmatpush1.bf16.msra.mxu0 0
        %862 = vmatprep.subr.bf16.mxu0 0
        %863 = vmatpush1.bf16.msra.mxu0 0
        %864 = vmatprep.subr.bf16.mxu0 0
        %865 = vmatpush1.bf16.msra.mxu0 0
        %866 = vmatprep.subr.bf16.mxu0 0
        %867 = vmatpush1.bf16.msra.mxu0 0
        %868 = vmatprep.mubr.bf16.mxu0 %v831
        %869 = vmatmul.mubr.bf16.gmra.mrb[0].mxu0 %v716
        %v870 = vpop.f32.mrb[0].mxu0
        %v871 = vadd.f32 0.0, %v870
        %v872 = vpop.f32.mrb[0].mxu0
        %v873 = vpop.f32.mrb[0].mxu0
        %v874 = vadd.f32 0.0, %v873
        %v875 = vpop.f32.mrb[0].mxu0
        %876 = vmatprep.mubr.bf16.mxu0 %v834
        %877 = vmatmul.mubr.bf16.gmra.mrb[0].mxu0 %v772
        %v878 = vpop.f32.mrb[0].mxu0
        %v879 = vadd.f32 0.0, %v878
        %v880 = vpop.f32.mrb[0].mxu0
        %v881 = vpop.f32.mrb[0].mxu0
        %v882 = vadd.f32 0.0, %v881
        %v883 = vpop.f32.mrb[0].mxu0
        %884 = vdwg.mxu0
        %v889 = vcombine.high %v871, %v871
        %v891 = vunpack.c.l.s4 1966171168
        %v892 = vunpack.c.0.s8 %v891
        %v893 = vlaneseq
        %v894 = vshrl.u32 %v893, 7
        %v895 = vsub.s32 %v892, %v894
        %v896 = vrot.slane %v871, %v895
        %v898 = vunpack.c.l.s4 1966171168
        %v899 = vunpack.c.0.s8 %v898
        %v900 = vlaneseq
        %v901 = vshrl.u32 %v900, 7
        %v902 = vsub.s32 %v899, %v901
        %v903 = vrot.slane %v889, %v902
        %v904 = vcombine.high %v896, %v896
        %v905 = vcombine.high %v903, %v903
        %v907 = vunpack.c.l.s4 1966171168
        %v908 = vunpack.c.0.s8 %v907
        %v909 = vlaneseq
        %v910 = vshrl.u32 %v909, 7
        %v911 = vsub.s32 %v908, %v910
        %v912 = vrot.slane %v896, %v911
        %v914 = vunpack.c.l.s4 1966171168
        %v915 = vunpack.c.0.s8 %v914
        %v916 = vlaneseq
        %v917 = vshrl.u32 %v916, 7
        %v918 = vsub.s32 %v915, %v917
        %v919 = vrot.slane %v903, %v918
        %v921 = vunpack.c.l.s4 1966171168
        %v922 = vunpack.c.0.s8 %v921
        %v923 = vlaneseq
        %v924 = vshrl.u32 %v923, 7
        %v925 = vsub.s32 %v922, %v924
        %v926 = vrot.slane %v904, %v925
        %v928 = vunpack.c.l.s4 1966171168
        %v929 = vunpack.c.0.s8 %v928
        %v930 = vlaneseq
        %v931 = vshrl.u32 %v930, 7
        %v932 = vsub.s32 %v929, %v931
        %v933 = vrot.slane %v905, %v932
        %v934 = vcombine.high %v912, %v912
        %v935 = vcombine.high %v919, %v919
        %v936 = vcombine.high %v926, %v926
        %v937 = vcombine.high %v933, %v933
        %v938 = vcombine.high %v874, %v874
        %v940 = vunpack.c.l.s4 1966171168
        %v941 = vunpack.c.0.s8 %v940
        %v942 = vlaneseq
        %v943 = vshrl.u32 %v942, 7
        %v944 = vsub.s32 %v941, %v943
        %v945 = vrot.slane %v874, %v944
        %v947 = vunpack.c.l.s4 1966171168
        %v948 = vunpack.c.0.s8 %v947
        %v949 = vlaneseq
        %v950 = vshrl.u32 %v949, 7
        %v951 = vsub.s32 %v948, %v950
        %v952 = vrot.slane %v938, %v951
        %v953 = vcombine.high %v945, %v945
        %v954 = vcombine.high %v952, %v952
        %v956 = vunpack.c.l.s4 1966171168
        %v957 = vunpack.c.0.s8 %v956
        %v958 = vlaneseq
        %v959 = vshrl.u32 %v958, 7
        %v960 = vsub.s32 %v957, %v959
        %v961 = vrot.slane %v945, %v960
        %v963 = vunpack.c.l.s4 1966171168
        %v964 = vunpack.c.0.s8 %v963
        %v965 = vlaneseq
        %v966 = vshrl.u32 %v965, 7
        %v967 = vsub.s32 %v964, %v966
        %v968 = vrot.slane %v952, %v967
        %v970 = vunpack.c.l.s4 1966171168
        %v971 = vunpack.c.0.s8 %v970
        %v972 = vlaneseq
        %v973 = vshrl.u32 %v972, 7
        %v974 = vsub.s32 %v971, %v973
        %v975 = vrot.slane %v953, %v974
        %v977 = vunpack.c.l.s4 1966171168
        %v978 = vunpack.c.0.s8 %v977
        %v979 = vlaneseq
        %v980 = vshrl.u32 %v979, 7
        %v981 = vsub.s32 %v978, %v980
        %v982 = vrot.slane %v954, %v981
        %v983 = vcombine.high %v961, %v961
        %v984 = vcombine.high %v968, %v968
        %v985 = vcombine.high %v975, %v975
        %v986 = vcombine.high %v982, %v982
        %v987 = vcombine.high %v879, %v879
        %v989 = vunpack.c.l.s4 1966171168
        %v990 = vunpack.c.0.s8 %v989
        %v991 = vlaneseq
        %v992 = vshrl.u32 %v991, 7
        %v993 = vsub.s32 %v990, %v992
        %v994 = vrot.slane %v879, %v993
        %v996 = vunpack.c.l.s4 1966171168
        %v997 = vunpack.c.0.s8 %v996
        %v998 = vlaneseq
        %v999 = vshrl.u32 %v998, 7
        %v1000 = vsub.s32 %v997, %v999
        %v1001 = vrot.slane %v987, %v1000
        %v1002 = vcombine.high %v994, %v994
        %v1003 = vcombine.high %v1001, %v1001
        %v1005 = vunpack.c.l.s4 1966171168
        %v1006 = vunpack.c.0.s8 %v1005
        %v1007 = vlaneseq
        %v1008 = vshrl.u32 %v1007, 7
        %v1009 = vsub.s32 %v1006, %v1008
        %v1010 = vrot.slane %v994, %v1009
        %v1012 = vunpack.c.l.s4 1966171168
        %v1013 = vunpack.c.0.s8 %v1012
        %v1014 = vlaneseq
        %v1015 = vshrl.u32 %v1014, 7
        %v1016 = vsub.s32 %v1013, %v1015
        %v1017 = vrot.slane %v1001, %v1016
        %v1019 = vunpack.c.l.s4 1966171168
        %v1020 = vunpack.c.0.s8 %v1019
        %v1021 = vlaneseq
        %v1022 = vshrl.u32 %v1021, 7
        %v1023 = vsub.s32 %v1020, %v1022
        %v1024 = vrot.slane %v1002, %v1023
        %v1026 = vunpack.c.l.s4 1966171168
        %v1027 = vunpack.c.0.s8 %v1026
        %v1028 = vlaneseq
        %v1029 = vshrl.u32 %v1028, 7
        %v1030 = vsub.s32 %v1027, %v1029
        %v1031 = vrot.slane %v1003, %v1030
        %v1032 = vcombine.high %v1010, %v1010
        %v1033 = vcombine.high %v1017, %v1017
        %v1034 = vcombine.high %v1024, %v1024
        %v1035 = vcombine.high %v1031, %v1031
        %v1037 = vunpack.c.l.s4 1966171168
        %v1038 = vunpack.c.0.s8 %v1037
        %v1039 = vlaneseq
        %v1040 = vshrl.u32 %v1039, 7
        %v1041 = vsub.s32 %v1038, %v1040
        %v1042 = vrot.slane %v882, %v1041
        %v1044 = vunpack.c.l.s4 1966171168
        %v1045 = vunpack.c.0.s8 %v1044
        %v1046 = vlaneseq
        %v1047 = vshrl.u32 %v1046, 7
        %v1048 = vsub.s32 %v1045, %v1047
        %v1049 = vrot.slane %v1042, %v1048
        %v1075 = vld [vmem:[#allocation7] sm:$0x1]
        %v1077 = vlaneseq
        %v1078 = vshrl.u32 %v1077, 7
        %v1079 = vsub.s32 0, %v1078
        %v1080 = vrot.slane %v1075, %v1079
        %v1081 = vcombine.high %v1080, %v1080
        %v1083 = vunpack.c.l.s4 1966171168
        %v1084 = vunpack.c.0.s8 %v1083
        %v1085 = vlaneseq
        %v1086 = vshrl.u32 %v1085, 7
        %v1087 = vsub.s32 %v1084, %v1086
        %v1088 = vrot.slane %v1080, %v1087
        %v1090 = vunpack.c.l.s4 1966171168
        %v1091 = vunpack.c.0.s8 %v1090
        %v1092 = vlaneseq
        %v1093 = vshrl.u32 %v1092, 7
        %v1094 = vsub.s32 %v1091, %v1093
        %v1095 = vrot.slane %v1081, %v1094
        %v1096 = vcombine.high %v1088, %v1088
        %v1098 = vunpack.c.l.s4 1966171168
        %v1099 = vunpack.c.0.s8 %v1098
        %v1100 = vlaneseq
        %v1101 = vshrl.u32 %v1100, 7
        %v1102 = vsub.s32 %v1099, %v1101
        %v1103 = vrot.slane %v1088, %v1102
        %v1105 = vunpack.c.l.s4 1966171168
        %v1106 = vunpack.c.0.s8 %v1105
        %v1107 = vlaneseq
        %v1108 = vshrl.u32 %v1107, 7
        %v1109 = vsub.s32 %v1106, %v1108
        %v1110 = vrot.slane %v1095, %v1109
        %v1112 = vunpack.c.l.s4 1966171168
        %v1113 = vunpack.c.0.s8 %v1112
        %v1114 = vlaneseq
        %v1115 = vshrl.u32 %v1114, 7
        %v1116 = vsub.s32 %v1113, %v1115
        %v1117 = vrot.slane %v1096, %v1116
        %v1118 = vcombine.high %v1103, %v1103
        %v1119 = vcombine.high %v1117, %v1117
        %v1125 = vadd.f32 %v912, %v1103
        %v1126 = vadd.f32 %v926, %v1117
        %v1127 = vadd.f32 %v934, %v1118
        %v1128 = vadd.f32 %v936, %v1119
        %v1129 = vadd.f32 %v919, %v1110
        %v1130 = vadd.f32 %v933, %v1103
        %v1131 = vadd.f32 %v935, %v1117
        %v1132 = vadd.f32 %v937, %v1118
        %v1133 = vadd.f32 %v961, %v1119
        %v1134 = vadd.f32 %v975, %v1110
        %v1135 = vadd.f32 %v983, %v1103
        %v1136 = vadd.f32 %v985, %v1117
        %v1137 = vadd.f32 %v968, %v1118
        %v1138 = vadd.f32 %v982, %v1119
        %v1139 = vadd.f32 %v984, %v1110
        %v1140 = vadd.f32 %v986, %v1103
        %v1141 = vadd.f32 %v1010, %v1117
        %v1142 = vadd.f32 %v1024, %v1118
        %v1143 = vadd.f32 %v1032, %v1119
        %v1144 = vadd.f32 %v1034, %v1110
        %v1145 = vadd.f32 %v1017, %v1103
        %v1146 = vadd.f32 %v1031, %v1117
        %v1147 = vadd.f32 %v1033, %v1118
        %v1148 = vadd.f32 %v1035, %v1119
        %v1149 = vadd.f32 %v1049, %v1110
        %v1150 = vmax.f32 %v1125, 0.0
        %v1151 = vmax.f32 %v1126, 0.0
        %v1152 = vmax.f32 %v1127, 0.0
        %v1153 = vmax.f32 %v1128, 0.0
        %v1154 = vmax.f32 %v1129, 0.0
        %v1155 = vmax.f32 %v1130, 0.0
        %v1156 = vmax.f32 %v1131, 0.0
        %v1157 = vmax.f32 %v1132, 0.0
        %v1158 = vmax.f32 %v1133, 0.0
        %v1159 = vmax.f32 %v1134, 0.0
        %v1160 = vmax.f32 %v1135, 0.0
        %v1161 = vmax.f32 %v1136, 0.0
        %v1162 = vmax.f32 %v1137, 0.0
        %v1163 = vmax.f32 %v1138, 0.0
        %v1164 = vmax.f32 %v1139, 0.0
        %v1165 = vmax.f32 %v1140, 0.0
        %v1166 = vmax.f32 %v1141, 0.0
        %v1167 = vmax.f32 %v1142, 0.0
        %v1168 = vmax.f32 %v1143, 0.0
        %v1169 = vmax.f32 %v1144, 0.0
        %v1170 = vmax.f32 %v1145, 0.0
        %v1171 = vmax.f32 %v1146, 0.0
        %v1172 = vmax.f32 %v1147, 0.0
        %v1173 = vmax.f32 %v1148, 0.0
        %v1174 = vmax.f32 %v1149, 0.0
        %v1200 = vcombine.low %v1150, %v1151
        %v1201 = vcombine.low %v1152, %v1153
        %v1203 = vunpack.c.l.s4 1966171168
        %v1204 = vunpack.c.0.s8 %v1203
        %v1205 = vlaneseq
        %v1206 = vshrl.u32 %v1205, 7
        %v1207 = vsub.s32 %v1204, %v1206
        %v1208 = vrot.slane %v1200, %v1207
        %v1210 = vunpack.c.l.s4 1966171168
        %v1211 = vunpack.c.0.s8 %v1210
        %v1212 = vlaneseq
        %v1213 = vshrl.u32 %v1212, 7
        %v1214 = vsub.s32 %v1211, %v1213
        %v1215 = vrot.slane %v1201, %v1214
        %v1217 = vunpack.c.l.s4 1966171168
        %v1218 = vunpack.c.0.s8 %v1217
        %v1219 = vlaneseq
        %v1220 = vshrl.u32 %v1219, 7
        %v1221 = vsub.s32 %v1218, %v1220
        %v1222 = vrot.slane %v1154, %v1221
        %v1223 = vcombine.low %v1208, %v1215
        %v1225 = vunpack.c.l.s4 1966171168
        %v1226 = vunpack.c.0.s8 %v1225
        %v1227 = vlaneseq
        %v1228 = vshrl.u32 %v1227, 7
        %v1229 = vsub.s32 %v1226, %v1228
        %v1230 = vrot.slane %v1223, %v1229
        %v1232 = vunpack.c.l.s4 1966171168
        %v1233 = vunpack.c.0.s8 %v1232
        %v1234 = vlaneseq
        %v1235 = vshrl.u32 %v1234, 7
        %v1236 = vsub.s32 %v1233, %v1235
        %v1237 = vrot.slane %v1222, %v1236
        %v1238 = vcombine.low %v1230, %v1237
        %v1239 = vcombine.low %v1155, %v1156
        %v1240 = vcombine.low %v1157, %v1158
        %v1242 = vunpack.c.l.s4 1966171168
        %v1243 = vunpack.c.0.s8 %v1242
        %v1244 = vlaneseq
        %v1245 = vshrl.u32 %v1244, 7
        %v1246 = vsub.s32 %v1243, %v1245
        %v1247 = vrot.slane %v1239, %v1246
        %v1249 = vunpack.c.l.s4 1966171168
        %v1250 = vunpack.c.0.s8 %v1249
        %v1251 = vlaneseq
        %v1252 = vshrl.u32 %v1251, 7
        %v1253 = vsub.s32 %v1250, %v1252
        %v1254 = vrot.slane %v1240, %v1253
        %v1256 = vunpack.c.l.s4 1966171168
        %v1257 = vunpack.c.0.s8 %v1256
        %v1258 = vlaneseq
        %v1259 = vshrl.u32 %v1258, 7
        %v1260 = vsub.s32 %v1257, %v1259
        %v1261 = vrot.slane %v1159, %v1260
        %v1262 = vcombine.low %v1247, %v1254
        %v1264 = vunpack.c.l.s4 1966171168
        %v1265 = vunpack.c.0.s8 %v1264
        %v1266 = vlaneseq
        %v1267 = vshrl.u32 %v1266, 7
        %v1268 = vsub.s32 %v1265, %v1267
        %v1269 = vrot.slane %v1262, %v1268
        %v1271 = vunpack.c.l.s4 1966171168
        %v1272 = vunpack.c.0.s8 %v1271
        %v1273 = vlaneseq
        %v1274 = vshrl.u32 %v1273, 7
        %v1275 = vsub.s32 %v1272, %v1274
        %v1276 = vrot.slane %v1261, %v1275
        %v1277 = vcombine.low %v1269, %v1276
        %v1278 = vcombine.low %v1160, %v1161
        %v1279 = vcombine.low %v1162, %v1163
        %v1281 = vunpack.c.l.s4 1966171168
        %v1282 = vunpack.c.0.s8 %v1281
        %v1283 = vlaneseq
        %v1284 = vshrl.u32 %v1283, 7
        %v1285 = vsub.s32 %v1282, %v1284
        %v1286 = vrot.slane %v1278, %v1285
        %v1288 = vunpack.c.l.s4 1966171168
        %v1289 = vunpack.c.0.s8 %v1288
        %v1290 = vlaneseq
        %v1291 = vshrl.u32 %v1290, 7
        %v1292 = vsub.s32 %v1289, %v1291
        %v1293 = vrot.slane %v1279, %v1292
        %v1295 = vunpack.c.l.s4 1966171168
        %v1296 = vunpack.c.0.s8 %v1295
        %v1297 = vlaneseq
        %v1298 = vshrl.u32 %v1297, 7
        %v1299 = vsub.s32 %v1296, %v1298
        %v1300 = vrot.slane %v1164, %v1299
        %v1301 = vcombine.low %v1286, %v1293
        %v1303 = vunpack.c.l.s4 1966171168
        %v1304 = vunpack.c.0.s8 %v1303
        %v1305 = vlaneseq
        %v1306 = vshrl.u32 %v1305, 7
        %v1307 = vsub.s32 %v1304, %v1306
        %v1308 = vrot.slane %v1301, %v1307
        %v1310 = vunpack.c.l.s4 1966171168
        %v1311 = vunpack.c.0.s8 %v1310
        %v1312 = vlaneseq
        %v1313 = vshrl.u32 %v1312, 7
        %v1314 = vsub.s32 %v1311, %v1313
        %v1315 = vrot.slane %v1300, %v1314
        %v1316 = vcombine.low %v1308, %v1315
        %v1317 = vcombine.low %v1165, %v1166
        %v1318 = vcombine.low %v1167, %v1168
        %v1320 = vunpack.c.l.s4 1966171168
        %v1321 = vunpack.c.0.s8 %v1320
        %v1322 = vlaneseq
        %v1323 = vshrl.u32 %v1322, 7
        %v1324 = vsub.s32 %v1321, %v1323
        %v1325 = vrot.slane %v1317, %v1324
        %v1327 = vunpack.c.l.s4 1966171168
        %v1328 = vunpack.c.0.s8 %v1327
        %v1329 = vlaneseq
        %v1330 = vshrl.u32 %v1329, 7
        %v1331 = vsub.s32 %v1328, %v1330
        %v1332 = vrot.slane %v1318, %v1331
        %v1334 = vunpack.c.l.s4 1966171168
        %v1335 = vunpack.c.0.s8 %v1334
        %v1336 = vlaneseq
        %v1337 = vshrl.u32 %v1336, 7
        %v1338 = vsub.s32 %v1335, %v1337
        %v1339 = vrot.slane %v1169, %v1338
        %v1340 = vcombine.low %v1325, %v1332
        %v1342 = vunpack.c.l.s4 1966171168
        %v1343 = vunpack.c.0.s8 %v1342
        %v1344 = vlaneseq
        %v1345 = vshrl.u32 %v1344, 7
        %v1346 = vsub.s32 %v1343, %v1345
        %v1347 = vrot.slane %v1340, %v1346
        %v1349 = vunpack.c.l.s4 1966171168
        %v1350 = vunpack.c.0.s8 %v1349
        %v1351 = vlaneseq
        %v1352 = vshrl.u32 %v1351, 7
        %v1353 = vsub.s32 %v1350, %v1352
        %v1354 = vrot.slane %v1339, %v1353
        %v1355 = vcombine.low %v1347, %v1354
        %v1356 = vcombine.low %v1170, %v1171
        %v1357 = vcombine.low %v1172, %v1173
        %v1359 = vunpack.c.l.s4 1966171168
        %v1360 = vunpack.c.0.s8 %v1359
        %v1361 = vlaneseq
        %v1362 = vshrl.u32 %v1361, 7
        %v1363 = vsub.s32 %v1360, %v1362
        %v1364 = vrot.slane %v1356, %v1363
        %v1366 = vunpack.c.l.s4 1966171168
        %v1367 = vunpack.c.0.s8 %v1366
        %v1368 = vlaneseq
        %v1369 = vshrl.u32 %v1368, 7
        %v1370 = vsub.s32 %v1367, %v1369
        %v1371 = vrot.slane %v1357, %v1370
        %v1373 = vunpack.c.l.s4 1966171168
        %v1374 = vunpack.c.0.s8 %v1373
        %v1375 = vlaneseq
        %v1376 = vshrl.u32 %v1375, 7
        %v1377 = vsub.s32 %v1374, %v1376
        %v1378 = vrot.slane %v1174, %v1377
        %v1379 = vcombine.low %v1364, %v1371
        %v1381 = vunpack.c.l.s4 1966171168
        %v1382 = vunpack.c.0.s8 %v1381
        %v1383 = vlaneseq
        %v1384 = vshrl.u32 %v1383, 7
        %v1385 = vsub.s32 %v1382, %v1384
        %v1386 = vrot.slane %v1379, %v1385
        %v1388 = vunpack.c.l.s4 1966171168
        %v1389 = vunpack.c.0.s8 %v1388
        %v1390 = vlaneseq
        %v1391 = vshrl.u32 %v1390, 7
        %v1392 = vsub.s32 %v1389, %v1391
        %v1393 = vrot.slane %v1378, %v1392
        %v1394 = vcombine.low %v1386, %v1393
        %v1400 = vpack.c.bf16 %v1238, %v1238
        %v1401 = vpack.c.bf16 %v1277, %v1277
        %v1402 = vpack.c.bf16 %v1316, %v1316
        %v1403 = vpack.c.bf16 %v1355, %v1355
        %v1404 = vpack.c.bf16 %v1394, %v1394
        %vm1405 = vcmask 59392
        %vm1406 = vsmask.f32 2304
        %vm1407 = vmand %vm1405, %vm1406
        %v1408 = vld [vmem:[%s229] sm:$0x7]
        %v1409 = vsel %vm1407, %v1400, %v1408
        %1410 = vst [vmem:[%s229] sm:$0x7] %v1409
        %v1411 = vld [vmem:[%s229 + $0x4] sm:$0x7]
        %v1412 = vsel %vm1407, %v1401, %v1411
        %1413 = vst [vmem:[%s229 + $0x4] sm:$0x7] %v1412
        %v1414 = vld [vmem:[%s229 + $0x8] sm:$0x7]
        %v1415 = vsel %vm1407, %v1402, %v1414
        %1416 = vst [vmem:[%s229 + $0x8] sm:$0x7] %v1415
        %v1417 = vld [vmem:[%s229 + $0xc] sm:$0x7]
        %v1418 = vsel %vm1407, %v1403, %v1417
        %1419 = vst [vmem:[%s229 + $0xc] sm:$0x7] %v1418
        %v1420 = vld [vmem:[%s229 + $0x10] sm:$0x7]
        %v1421 = vsel %vm1407, %v1404, %v1420
        %1422 = vst [vmem:[%s229 + $0x10] sm:$0x7] %v1421
        %s1423 = sand.u32 %s111, 1
        %s1424 = scalar_lea.sflag [#allocation4], %s1423
        %s1425 = sand.u32 %s111, 1
        %s1426 = smul.addr %s1425, 20
        %s1427 = scalar_lea.vmem [#allocation8], %s1426
        // Predicated region
        $region45: #{cnn_forward.4} parent=31 // pred_check
          %p1428 = pneg %p121
        $region46: #{cnn_forward.4} parent=31 // pred_check_branch
          %1430 = sbr.rel (%p1428) target = $region48
        $region47: #{cnn_forward.4} parent=31 // pred_region
          %s1431 = smul.u32 5, %s26
          %s1433 = ssub.s32 320, 320
          %1434 = vsyncadd %s1424, %s1433
          %s1435 = smul.addr %s25, 5
          %s1436 = sadd.s32 %s1431, %s1435
          %s1437 = smul.addr %s1436, 64
          %s1438 = scalar_lea.hbm %s3, %s1437
          %s1439 = sshll.u32 %s1427, 4
          %s1440 = int_to_ptr.vmem [resolvable:$true] %s1439
          %1445 = dma.vmem_to_hbm [thread:$0]  %s1440, 320, %s1438, %s1424, 64, 64, 4
        $region48: #{cnn_forward.4} parent=31 // pred_fallthru
          _
      $region32: #{cnn_forward.4} parent=5 // pred_fallthru
        _
      %p1446 = scmp.le.s32.totalorder 2, %s16
      // Predicated region
      $region49: #{cnn_forward.4} parent=5 // pred_check
        %p1447 = pneg %p1446
      $region50: #{cnn_forward.4} parent=5 // pred_check_branch
        %1449 = sbr.rel (%p1447) target = $region52
      $region51: #{cnn_forward.4} parent=5 // pred_region
        %s1450 = ssub.s32 %s16, 2
        // Predicated region
        $region53: #{cnn_forward.4} parent=51 // pred_check
          %p1451 = pneg %p127
        $region54: #{cnn_forward.4} parent=51 // pred_check_branch
          %1453 = sbr.rel (%p1451) target = $region56
        $region55: #{cnn_forward.4} parent=51 // pred_region
          %s1454 = sand.u32 %s112, 1
          %s1455 = scalar_lea.sflag [#allocation4], %s1454
          %s1456 = sand.u32 %s112, 1
          %s1457 = smul.addr %s1456, 20
          %s1458 = scalar_lea.vmem [#allocation8], %s1457
          %1459 = dma.done %s1455, 320
        $region56: #{cnn_forward.4} parent=51 // pred_fallthru
          _
      $region52: #{cnn_forward.4} parent=5 // pred_fallthru
        _
    $region6: #{cnn_forward.4} parent=1 // loop_footer
      %s20 = sadd.s32 1, %s16
    $region7: #{cnn_forward.4} parent=1 // loop_footer_branch
      %15 = sbr.rel target = $region3
    $region8: #{cnn_forward.4} parent=1 // loop_exit
      _
    %1460 = vsyncpa [#allocation3], 1
    %s1461 = scalar_lea.sflag [#allocation3], 1
    %1462 = vsyncpa %s1461, 1
    %1463 = vsyncpa [#allocation6], 1
    %1464 = vsyncpa [#allocation4], 1
    %s1465 = scalar_lea.sflag [#allocation4], 1
    %1466 = vsyncpa %s1465, 1

// kernel: cnn_forward.3
$region0: #{cnn_forward.3}
  #allocation0 [shape = 'u32[]', space=smem, size = 0x4, offset = 0x4, fixed_abs, tag = 'smem constant byte address 0x4 - core index']
  #allocation1 [shape = 'u32[144,128]{1,0:T(1,128)}', space=vmem, size = 0x12000, scoped, tag = 'internal scratch']
  %s0 = inlined_call_operand.hbm [shape: bf16[2,16,16,4], index: 0, kind: input, shape index: {}]
  %s1 = inlined_call_operand.hbm [shape: bf16[36,16], index: 1, kind: input, shape index: {}]
  %s2 = inlined_call_operand.hbm [shape: f32[1,16], index: 2, kind: input, shape index: {}]
  %s3 = inlined_call_operand.hbm [shape: bf16[2,7,7,16], index: 3, kind: output, shape index: {}]
  %s4 = sld [smem:[#allocation0]]
  $region57: #{cnn_forward.3} parent=0
    _
  %s6 = ssub.s32 1, %s4
  %s7 = scalar_select 0, %s6, %s4
  $region1: #{cnn_forward.3} parent=0
    #allocation2 [shape = 'u8[131072]{0}', space=vmem, size = 0x20000, scoped, tag = 'input window, operand 0']
    #allocation3 [shape = 's32[2]{0}', space=sflag, size = 0x8, scoped, tag = 'scoped memory for cnn_forward.3']
    #allocation4 [shape = 's32[2]{0}', space=sflag, size = 0x8, scoped, tag = 'scoped memory for cnn_forward.3']
    #allocation5 [shape = 'u8[10240]{0}', space=vmem, size = 0x2800, scoped, tag = 'input window, operand 1, single buffered']
    #allocation6 [shape = 's32[1]{0}', space=sflag, size = 0x4, scoped, tag = 'scoped memory for cnn_forward.3']
    #allocation7 [shape = 'u8[512]{0}', space=vmem, size = 0x400, scoped, tag = 'input window, operand 2, single buffered']
    #allocation8 [shape = 'u8[28672]{0}', space=vmem, size = 0x7000, scoped, tag = 'output window, operand 0']
    %8 = vsyncpa [#allocation3], 0
    %s9 = scalar_lea.sflag [#allocation3], 1
    %10 = vsyncpa %s9, 0
    %11 = vsyncpa [#allocation6], 0
    %12 = vsyncpa [#allocation4], 0
    %s13 = scalar_lea.sflag [#allocation4], 1
    %14 = vsyncpa %s13, 0
    loop: start=0, step=1, limit=4
    $region2: #{cnn_forward.3} parent=1 // loop_pre_header
      _
    $region3: #{cnn_forward.3} parent=1 // loop_header
      %s16 = sphi 0, %s20
      %p17 = scmp.ge.s32.totalorder %s16, 4
      %s23 = sphi 0, %s35
      %s24 = sphi 0, %s31
      %s25 = sphi 0, %s23
      %s26 = sphi 0, %s24
      %s27 = sphi 0, %s25
      %s28 = sphi 0, %s26
      %s38 = sphi 0, %s40
      %s41 = sphi 0, %s38
      %s42 = sphi 0, %s41
      %s58 = sphi 0, %s42
      %s62 = sphi 0, %s62
      %s64 = sphi 0, %s62
      %s65 = sphi 0, %s64
      %s79 = sphi 0, %s65
      %s83 = sphi 0, %s83
      %s85 = sphi 0, %s83
      %s86 = sphi 0, %s85
      %s100 = sphi 0, %s86
      %s108 = sphi 0, %s110
      %s111 = sphi 0, %s108
      %s112 = sphi 0, %s111
      %s128 = sphi 0, %s112
    $region4: #{cnn_forward.3} parent=1 // loop_header_branch
      %19 = sbr.rel (%p17) target = $region8
    $region5: #{cnn_forward.3} parent=1 // loop_body
      %s21 = ssub.s32 %s16, 1
      %s22 = ssub.s32 %s16, 2
      %s29 = sadd.s32 1, %s24
      %p30 = scmp.ge.s32.totalorder %s29, 1
      %s31 = scalar_select %p30, 0, %s29
      %s32 = sadd.s32 1, %s23
      %s33 = scalar_select %p30, %s32, %s23
      %p34 = scmp.ge.s32.totalorder %s33, 2
      %s35 = scalar_select %p34, 0, %s33
      %s36 = ssub.s32 %s23, %s35
      %p37 = scmp.eq.s32.totalorder %s36, 0
      %s39 = sadd.s32 %s38, 1
      %s40 = scalar_select %p37, %s38, %s39
      %p43 = pneg %p37
      %p44 = scmp.eq.s32.totalorder %s16, 1
      %p45 = por %p43, %p44
      %p46 = scmp.ne.s32.totalorder %s38, %s41
      %p47 = scmp.eq.s32.totalorder %s16, 0
      %p48 = por %p46, %p47
      %p49 = scmp.ne.s32.totalorder %s38, %s41
      %p50 = scmp.eq.s32.totalorder %s21, 1
      %p51 = por %p49, %p50
      %p52 = scmp.ne.s32.totalorder %s41, %s42
      %p53 = scmp.eq.s32.totalorder %s21, 0
      %p54 = por %p52, %p53
      %p55 = scmp.ne.s32.totalorder %s41, %s42
      %p56 = scmp.eq.s32.totalorder %s22, 1
      %p57 = por %p55, %p56
      %p59 = scmp.ne.s32.totalorder %s42, %s58
      %p60 = scmp.eq.s32.totalorder %s22, 0
      %p61 = por %p59, %p60
      %s63 = sadd.s32 %s62, 1
      %p66 = scmp.eq.s32.totalorder %s16, 1
      %p67 = scmp.ne.s32.totalorder %s62, %s64
      %p68 = scmp.eq.s32.totalorder %s16, 0
      %p69 = por %p67, %p68
      %p70 = scmp.ne.s32.totalorder %s62, %s64
      %p71 = scmp.eq.s32.totalorder %s21, 1
      %p72 = por %p70, %p71
      %p73 = scmp.ne.s32.totalorder %s64, %s65
      %p74 = scmp.eq.s32.totalorder %s21, 0
      %p75 = por %p73, %p74
      %p76 = scmp.ne.s32.totalorder %s64, %s65
      %p77 = scmp.eq.s32.totalorder %s22, 1
      %p78 = por %p76, %p77
      %p80 = scmp.ne.s32.totalorder %s65, %s79
      %p81 = scmp.eq.s32.totalorder %s22, 0
      %p82 = por %p80, %p81
      %s84 = sadd.s32 %s83, 1
      %p87 = scmp.eq.s32.totalorder %s16, 1
      %p88 = scmp.ne.s32.totalorder %s83, %s85
      %p89 = scmp.eq.s32.totalorder %s16, 0
      %p90 = por %p88, %p89
      %p91 = scmp.ne.s32.totalorder %s83, %s85
      %p92 = scmp.eq.s32.totalorder %s21, 1
      %p93 = por %p91, %p92
      %p94 = scmp.ne.s32.totalorder %s85, %s86
      %p95 = scmp.eq.s32.totalorder %s21, 0
      %p96 = por %p94, %p95
      %p97 = scmp.ne.s32.totalorder %s85, %s86
      %p98 = scmp.eq.s32.totalorder %s22, 1
      %p99 = por %p97, %p98
      %p101 = scmp.ne.s32.totalorder %s86, %s100
      %p102 = scmp.eq.s32.totalorder %s22, 0
      %p103 = por %p101, %p102
      %s104 = ssub.s32 %s23, %s35
      %s105 = ssub.s32 %s24, %s31
      %s106 = sor.u32 %s104, %s105
      %p107 = scmp.eq.s32.totalorder %s106, 0
      %s109 = sadd.s32 %s108, 1
      %s110 = scalar_select %p107, %s108, %s109
      %p113 = pneg %p107
      %p114 = scmp.eq.s32.totalorder %s16, 1
      %p115 = por %p113, %p114
      %p116 = scmp.ne.s32.totalorder %s108, %s111
      %p117 = scmp.eq.s32.totalorder %s16, 0
      %p118 = por %p116, %p117
      %p119 = scmp.ne.s32.totalorder %s108, %s111
      %p120 = scmp.eq.s32.totalorder %s21, 1
      %p121 = por %p119, %p120
      %p122 = scmp.ne.s32.totalorder %s111, %s112
      %p123 = scmp.eq.s32.totalorder %s21, 0
      %p124 = por %p122, %p123
      %p125 = scmp.ne.s32.totalorder %s111, %s112
      %p126 = scmp.eq.s32.totalorder %s22, 1
      %p127 = por %p125, %p126
      %p129 = scmp.ne.s32.totalorder %s112, %s128
      %p130 = scmp.eq.s32.totalorder %s22, 0
      %p131 = por %p129, %p130
      %p132 = scmp.le.s32.totalorder 1, %s16
      %p133 = scmp.lt.s32.totalorder %s16, 3
      %p134 = pnand %p132, %p133
      %p135 = pneg %p134
      // Predicated region
      $region9: #{cnn_forward.3} parent=5 // pred_check
        _
      $region10: #{cnn_forward.3} parent=5 // pred_check_branch
        %137 = sbr.rel (%p134) target = $region12
      $region11: #{cnn_forward.3} parent=5 // pred_region
        %s138 = ssub.s32 %s16, 1
        // Predicated region
        $region13: #{cnn_forward.3} parent=11 // pred_check
          %p139 = pneg %p75
        $region14: #{cnn_forward.3} parent=11 // pred_check_branch
          %141 = sbr.rel (%p139) target = $region16
        $region15: #{cnn_forward.3} parent=11 // pred_region
          %s143 = ssub.s32 320, 320
          %144 = vsyncadd [#allocation6], %s143
          %s145 = sshll.u32 [#allocation5], 4
          %s146 = int_to_ptr.vmem [resolvable:$true] %s145
          %151 = dma.hbm_to_vmem [thread:$0]  %s1, 320, %s146, [#allocation6], 64, 64, 4
        $region16: #{cnn_forward.3} parent=11 // pred_fallthru
          _
        // Predicated region
        $region17: #{cnn_forward.3} parent=11 // pred_check
          %p152 = pneg %p96
        $region18: #{cnn_forward.3} parent=11 // pred_check_branch
          %154 = sbr.rel (%p152) target = $region20
        $region19: #{cnn_forward.3} parent=11 // pred_region
          %s156 = ssub.s32 16, 16
          %157 = vsyncadd [#allocation6], %s156
          %s159 = sshll.u32 [#allocation7], 4
          %s160 = int_to_ptr.vmem [resolvable:$true] %s159
          %162 = dma.hbm_to_vmem [thread:$0]  %s2, 16, %s160, [#allocation6]
        $region20: #{cnn_forward.3} parent=11 // pred_fallthru
          _
      $region12: #{cnn_forward.3} parent=5 // pred_fallthru
        _
      %p163 = scmp.lt.s32.totalorder %s16, 2
      // Predicated region
      $region21: #{cnn_forward.3} parent=5 // pred_check
        %p164 = pneg %p163
      $region22: #{cnn_forward.3} parent=5 // pred_check_branch
        %166 = sbr.rel (%p164) target = $region24
      $region23: #{cnn_forward.3} parent=5 // pred_region
        // Predicated region
        $region25: #{cnn_forward.3} parent=23 // pred_check
          %p167 = pneg %p48
        $region26: #{cnn_forward.3} parent=23 // pred_check_branch
          %169 = sbr.rel (%p167) target = $region28
        $region27: #{cnn_forward.3} parent=23 // pred_region
          %s170 = sand.u32 %s38, 1
          %s171 = scalar_lea.sflag [#allocation3], %s170
          %s172 = sand.u32 %s38, 1
          %s173 = smul.addr %s172, 128
          %s174 = scalar_lea.vmem [#allocation2], %s173
          %s176 = ssub.s32 2048, 2048
          %177 = vsyncadd %s171, %s176
          %s178 = smul.addr %s23, 32
          %s179 = smul.addr %s178, 64
          %s180 = scalar_lea.hbm %s0, %s179
          %s181 = sshll.u32 %s174, 4
          %s182 = int_to_ptr.vmem [resolvable:$true] %s181
          %187 = dma.hbm_to_vmem [thread:$0]  %s180, 2048, %s182, %s171, 64, 64, 4
        $region28: #{cnn_forward.3} parent=23 // pred_fallthru
          _
      $region24: #{cnn_forward.3} parent=5 // pred_fallthru
        _
      %p188 = scmp.le.s32.totalorder 1, %s16
      %p189 = scmp.lt.s32.totalorder %s16, 3
      %p190 = pnand %p188, %p189
      %p191 = pneg %p190
      // Predicated region
      $region29: #{cnn_forward.3} parent=5 // pred_check
        _
      $region30: #{cnn_forward.3} parent=5 // pred_check_branch
        %193 = sbr.rel (%p190) target = $region32
      $region31: #{cnn_forward.3} parent=5 // pred_region
        %s194 = ssub.s32 %s16, 1
        %s195 = sand.u32 %s41, 1
        %s196 = scalar_lea.sflag [#allocation3], %s195
        %s197 = sand.u32 %s41, 1
        %s198 = smul.addr %s197, 128
        %s199 = scalar_lea.vmem [#allocation2], %s198
        // Predicated region
        $region33: #{cnn_forward.3} parent=31 // pred_check
          %p200 = pneg %p54
        $region34: #{cnn_forward.3} parent=31 // pred_check_branch
          %202 = sbr.rel (%p200) target = $region36
        $region35: #{cnn_forward.3} parent=31 // pred_region
          %203 = dma.done %s196, 2048
        $region36: #{cnn_forward.3} parent=31 // pred_fallthru
          _
        // Predicated region
        $region37: #{cnn_forward.3} parent=31 // pred_check
          %p204 = pneg %p75
        $region38: #{cnn_forward.3} parent=31 // pred_check_branch
          %206 = sbr.rel (%p204) target = $region40
        $region39: #{cnn_forward.3} parent=31 // pred_region
          %207 = dma.done [#allocation6], 320
        $region40: #{cnn_forward.3} parent=31 // pred_fallthru
          _
        // Predicated region
        $region41: #{cnn_forward.3} parent=31 // pred_check
          %p208 = pneg %p96
        $region42: #{cnn_forward.3} parent=31 // pred_check_branch
          %210 = sbr.rel (%p208) target = $region44
        $region43: #{cnn_forward.3} parent=31 // pred_region
          %211 = dma.done [#allocation6], 16
        $region44: #{cnn_forward.3} parent=31 // pred_fallthru
          _
        %s212 = sand.u32 %s41, 1
        %s213 = scalar_lea.sflag [#allocation3], %s212
        %s214 = sand.u32 %s41, 1
        %s215 = smul.addr %s214, 128
        %s216 = scalar_lea.vmem [#allocation2], %s215
        %p217 = pneg %p54
        %p218 = pneg %p51
        %p219 = pneg %p75
        %p220 = pneg %p72
        %p221 = pneg %p96
        %p222 = pneg %p93
        %p223 = pneg %p124
        %p224 = pneg %p121
        %s225 = sand.u32 %s111, 1
        %s226 = scalar_lea.sflag [#allocation4], %s225
        %s227 = sand.u32 %s111, 1
        %s228 = smul.addr %s227, 28
        %s229 = scalar_lea.vmem [#allocation8], %s228
        %s230 = smul.u32 7, %s26
        %s232 = smul.u32 %s26, 14
        %s233 = smul.u32 %s232, 2
        %s234 = smul.addr %s233, 4
        %s235 = scalar_lea.vmem %s199, %s234 [#allocation2]
        %v236 = vld [vmem:[%s235] sm:$0xf]
        %v237 = vld [vmem:[%s235 + $0x4] sm:$0xf]
        %v238 = vld [vmem:[%s235 + $0x8] sm:$0xf]
        %v239 = vld [vmem:[%s235 + $0xc] sm:$0xf]
        %v240 = vld [vmem:[%s235 + $0x10] sm:$0xf]
        %v241 = vld [vmem:[%s235 + $0x14] sm:$0xf]
        %v242 = vld [vmem:[%s235 + $0x18] sm:$0xf]
        %v243 = vld [vmem:[%s235 + $0x1c] sm:$0xf]
        %v244 = vld [vmem:[%s235 + $0x20] sm:$0xf]
        %v245 = vld [vmem:[%s235 + $0x24] sm:$0xf]
        %v246 = vld [vmem:[%s235 + $0x28] sm:$0xf]
        %v247 = vld [vmem:[%s235 + $0x2c] sm:$0xf]
        %v248 = vld [vmem:[%s235 + $0x30] sm:$0xf]
        %v249 = vld [vmem:[%s235 + $0x34] sm:$0xf]
        %v250 = vld [vmem:[%s235 + $0x38] sm:$0xf]
        %v251 = vld [vmem:[%s235 + $0x3c] sm:$0xf]
        %v252 = vld [vmem:[%s235 + $0x40] sm:$0xf]
        %v253 = vld [vmem:[%s235 + $0x44] sm:$0xf]
        %v254 = vld [vmem:[%s235 + $0x48] sm:$0xf]
        %v255 = vld [vmem:[%s235 + $0x4c] sm:$0xf]
        %v256 = vld [vmem:[%s235 + $0x50] sm:$0xf]
        %v257 = vld [vmem:[%s235 + $0x54] sm:$0xf]
        %v258 = vld [vmem:[%s235 + $0x58] sm:$0xf]
        %v259 = vld [vmem:[%s235 + $0x5c] sm:$0xf]
        %v260 = vld [vmem:[%s235 + $0x60] sm:$0xf]
        %v261 = vld [vmem:[%s235 + $0x64] sm:$0xf]
        %v262 = vld [vmem:[%s235 + $0x68] sm:$0xf]
        %v263 = vld [vmem:[%s235 + $0x6c] sm:$0xf]
        %v264 = vld [vmem:[%s235 + $0x70] sm:$0xf]
        %v265 = vld [vmem:[%s235 + $0x74] sm:$0xf]
        %v266 = vld [vmem:[%s235 + $0x78] sm:$0xf]
        %v267 = vld [vmem:[%s235 + $0x7c] sm:$0xf]
        %v296 = vunpack.c.l.b16 %v236
        %v297 = vunpack.c.l.b16 %v237
        %v298 = vunpack.c.l.b16 %v238
        %v299 = vunpack.c.l.b16 %v239
        %v300 = vunpack.c.l.b16 %v240
        %v301 = vunpack.c.l.b16 %v241
        %v302 = vunpack.c.l.b16 %v242
        %v303 = vunpack.c.l.b16 %v243
        %v304 = vunpack.c.l.b16 %v244
        %v305 = vunpack.c.l.b16 %v245
        %v306 = vunpack.c.l.b16 %v246
        %v307 = vunpack.c.l.b16 %v247
        %v308 = vunpack.c.l.b16 %v248
        %v309 = vunpack.c.l.b16 %v249
        %v310 = vunpack.c.l.b16 %v250
        %v311 = vunpack.c.l.b16 %v251
        %v312 = vunpack.c.l.b16 %v252
        %v313 = vunpack.c.l.b16 %v253
        %v314 = vunpack.c.l.b16 %v254
        %v315 = vunpack.c.l.b16 %v255
        %v316 = vunpack.c.l.b16 %v256
        %v317 = vunpack.c.l.b16 %v257
        %v318 = vunpack.c.l.b16 %v258
        %v319 = vunpack.c.l.b16 %v259
        %v320 = vunpack.c.l.b16 %v260
        %v321 = vunpack.c.l.b16 %v261
        %v322 = vunpack.c.l.b16 %v262
        %v323 = vunpack.c.l.b16 %v263
        %v324 = vpack.c.b16 %v297, %v296
        %v325 = vpack.c.b16 %v299, %v298
        %v326 = vpack.c.b16 %v301, %v300
        %v327 = vpack.c.b16 %v303, %v302
        %v328 = vpack.c.b16 %v305, %v304
        %v329 = vpack.c.b16 %v307, %v306
        %v330 = vpack.c.b16 %v309, %v308
        %v331 = vpack.c.b16 %v311, %v310
        %v332 = vpack.c.b16 %v313, %v312
        %v333 = vpack.c.b16 %v315, %v314
        %v334 = vpack.c.b16 %v317, %v316
        %v335 = vpack.c.b16 %v319, %v318
        %v336 = vpack.c.b16 %v321, %v320
        %v337 = vpack.c.b16 %v323, %v322
        %v339 = vshrl.u32 %v324, 16
        %v341 = vshll.u32 %v324, 16
        %v343 = vrot.slane %v341, 1
        %v344 = vor.u32 %v339, %v343
        %v346 = vshrl.u32 %v325, 16
        %v348 = vshll.u32 %v325, 16
        %v350 = vrot.slane %v348, 1
        %v351 = vor.u32 %v346, %v350
        %v353 = vshrl.u32 %v326, 16
        %v355 = vshll.u32 %v326, 16
        %v357 = vrot.slane %v355, 1
        %v358 = vor.u32 %v353, %v357
        %v360 = vshrl.u32 %v327, 16
        %v362 = vshll.u32 %v327, 16
        %v364 = vrot.slane %v362, 1
        %v365 = vor.u32 %v360, %v364
        %v367 = vshrl.u32 %v328, 16
        %v369 = vshll.u32 %v328, 16
        %v371 = vrot.slane %v369, 1
        %v372 = vor.u32 %v367, %v371
        %v374 = vshrl.u32 %v329, 16
        %v376 = vshll.u32 %v329, 16
        %v378 = vrot.slane %v376, 1
        %v379 = vor.u32 %v374, %v378
        %v381 = vshrl.u32 %v330, 16
        %v383 = vshll.u32 %v330, 16
        %v385 = vrot.slane %v383, 1
        %v386 = vor.u32 %v381, %v385
        %v388 = vshrl.u32 %v331, 16
        %v390 = vshll.u32 %v331, 16
        %v392 = vrot.slane %v390, 1
        %v393 = vor.u32 %v388, %v392
        %v395 = vshrl.u32 %v332, 16
        %v397 = vshll.u32 %v332, 16
        %v399 = vrot.slane %v397, 1
        %v400 = vor.u32 %v395, %v399
        %v402 = vshrl.u32 %v333, 16
        %v404 = vshll.u32 %v333, 16
        %v406 = vrot.slane %v404, 1
        %v407 = vor.u32 %v402, %v406
        %v409 = vshrl.u32 %v334, 16
        %v411 = vshll.u32 %v334, 16
        %v413 = vrot.slane %v411, 1
        %v414 = vor.u32 %v409, %v413
        %v416 = vshrl.u32 %v335, 16
        %v418 = vshll.u32 %v335, 16
        %v420 = vrot.slane %v418, 1
        %v421 = vor.u32 %v416, %v420
        %v423 = vshrl.u32 %v336, 16
        %v425 = vshll.u32 %v336, 16
        %v427 = vrot.slane %v425, 1
        %v428 = vor.u32 %v423, %v427
        %v430 = vshrl.u32 %v337, 16
        %v432 = vshll.u32 %v337, 16
        %v434 = vrot.slane %v432, 1
        %v435 = vor.u32 %v430, %v434
        %436 = vrot.lane.b32.xlu0 %v344, 4
        %v437 = vpop.permute.xlu0 %436
        %438 = vrot.lane.b32.xlu0 %v351, 4
        %v439 = vpop.permute.xlu0 %438
        %440 = vrot.lane.b32.xlu0 %v358, 4
        %v441 = vpop.permute.xlu0 %440
        %442 = vrot.lane.b32.xlu0 %v365, 4
        %v443 = vpop.permute.xlu0 %442
        %444 = vrot.lane.b32.xlu0 %v372, 4
        %v445 = vpop.permute.xlu0 %444
        %446 = vrot.lane.b32.xlu0 %v379, 4
        %v447 = vpop.permute.xlu0 %446
        %448 = vrot.lane.b32.xlu0 %v386, 4
        %v449 = vpop.permute.xlu0 %448
        %450 = vrot.lane.b32.xlu0 %v393, 4
        %v451 = vpop.permute.xlu0 %450
        %452 = vrot.lane.b32.xlu0 %v400, 4
        %v453 = vpop.permute.xlu0 %452
        %454 = vrot.lane.b32.xlu0 %v407, 4
        %v455 = vpop.permute.xlu0 %454
        %456 = vrot.lane.b32.xlu0 %v414, 4
        %v457 = vpop.permute.xlu0 %456
        %458 = vrot.lane.b32.xlu0 %v421, 4
        %v459 = vpop.permute.xlu0 %458
        %460 = vrot.lane.b32.xlu0 %v428, 4
        %v461 = vpop.permute.xlu0 %460
        %462 = vrot.lane.b32.xlu0 %v435, 4
        %v463 = vpop.permute.xlu0 %462
        %v464 = vrot.slane %v324, 1
        %v465 = vrot.slane %v325, 1
        %v466 = vrot.slane %v326, 1
        %v467 = vrot.slane %v327, 1
        %v468 = vrot.slane %v328, 1
        %v469 = vrot.slane %v329, 1
        %v470 = vrot.slane %v330, 1
        %v471 = vrot.slane %v331, 1
        %v472 = vrot.slane %v332, 1
        %v473 = vrot.slane %v333, 1
        %v474 = vrot.slane %v334, 1
        %v475 = vrot.slane %v335, 1
        %v476 = vrot.slane %v336, 1
        %v477 = vrot.slane %v337, 1
        %478 = vrot.lane.b32.xlu0 %v464, 8
        %v479 = vpop.permute.xlu0 %478
        %480 = vrot.lane.b32.xlu0 %v465, 8
        %v481 = vpop.permute.xlu0 %480
        %482 = vrot.lane.b32.xlu0 %v466, 8
        %v483 = vpop.permute.xlu0 %482
        %484 = vrot.lane.b32.xlu0 %v467, 8
        %v485 = vpop.permute.xlu0 %484
        %486 = vrot.lane.b32.xlu0 %v468, 8
        %v487 = vpop.permute.xlu0 %486
        %488 = vrot.lane.b32.xlu0 %v469, 8
        %v489 = vpop.permute.xlu0 %488
        %490 = vrot.lane.b32.xlu0 %v470, 8
        %v491 = vpop.permute.xlu0 %490
        %492 = vrot.lane.b32.xlu0 %v471, 8
        %v493 = vpop.permute.xlu0 %492
        %494 = vrot.lane.b32.xlu0 %v472, 8
        %v495 = vpop.permute.xlu0 %494
        %496 = vrot.lane.b32.xlu0 %v473, 8
        %v497 = vpop.permute.xlu0 %496
        %498 = vrot.lane.b32.xlu0 %v474, 8
        %v499 = vpop.permute.xlu0 %498
        %500 = vrot.lane.b32.xlu0 %v475, 8
        %v501 = vpop.permute.xlu0 %500
        %502 = vrot.lane.b32.xlu0 %v476, 8
        %v503 = vpop.permute.xlu0 %502
        %504 = vrot.lane.b32.xlu0 %v477, 8
        %v505 = vpop.permute.xlu0 %504
        %v508 = vunpack.c.l.b16 %v264
        %v509 = vunpack.c.l.b16 %v265
        %v510 = vpack.c.b16 %v509, %v508
        %511 = vrot.lane.b32.xlu0 %v325, 12
        %v512 = vpop.permute.xlu0 %511
        %513 = vrot.lane.b32.xlu0 %v326, 12
        %v514 = vpop.permute.xlu0 %513
        %515 = vrot.lane.b32.xlu0 %v327, 12
        %v516 = vpop.permute.xlu0 %515
        %517 = vrot.lane.b32.xlu0 %v328, 12
        %v518 = vpop.permute.xlu0 %517
        %519 = vrot.lane.b32.xlu0 %v329, 12
        %v520 = vpop.permute.xlu0 %519
        %521 = vrot.lane.b32.xlu0 %v330, 12
        %v522 = vpop.permute.xlu0 %521
        %523 = vrot.lane.b32.xlu0 %v331, 12
        %v524 = vpop.permute.xlu0 %523
        %525 = vrot.lane.b32.xlu0 %v332, 12
        %v526 = vpop.permute.xlu0 %525
        %527 = vrot.lane.b32.xlu0 %v333, 12
        %v528 = vpop.permute.xlu0 %527
        %529 = vrot.lane.b32.xlu0 %v334, 12
        %v530 = vpop.permute.xlu0 %529
        %531 = vrot.lane.b32.xlu0 %v335, 12
        %v532 = vpop.permute.xlu0 %531
        %533 = vrot.lane.b32.xlu0 %v336, 12
        %v534 = vpop.permute.xlu0 %533
        %535 = vrot.lane.b32.xlu0 %v337, 12
        %v536 = vpop.permute.xlu0 %535
        %537 = vrot.lane.b32.xlu0 %v510, 12
        %v538 = vpop.permute.xlu0 %537
        %v540 = vshrl.u32 %v510, 16
        %v542 = vshll.u32 %v510, 16
        %v544 = vrot.slane %v542, 1
        %v545 = vor.u32 %v540, %v544
        %546 = vrot.lane.b32.xlu0 %v351, 16
        %v547 = vpop.permute.xlu0 %546
        %548 = vrot.lane.b32.xlu0 %v358, 16
        %v549 = vpop.permute.xlu0 %548
        %550 = vrot.lane.b32.xlu0 %v365, 16
        %v551 = vpop.permute.xlu0 %550
        %552 = vrot.lane.b32.xlu0 %v372, 16
        %v553 = vpop.permute.xlu0 %552
        %554 = vrot.lane.b32.xlu0 %v379, 16
        %v555 = vpop.permute.xlu0 %554
        %556 = vrot.lane.b32.xlu0 %v386, 16
        %v557 = vpop.permute.xlu0 %556
        %558 = vrot.lane.b32.xlu0 %v393, 16
        %v559 = vpop.permute.xlu0 %558
        %560 = vrot.lane.b32.xlu0 %v400, 16
        %v561 = vpop.permute.xlu0 %560
        %562 = vrot.lane.b32.xlu0 %v407, 16
        %v563 = vpop.permute.xlu0 %562
        %564 = vrot.lane.b32.xlu0 %v414, 16
        %v565 = vpop.permute.xlu0 %564
        %566 = vrot.lane.b32.xlu0 %v421, 16
        %v567 = vpop.permute.xlu0 %566
        %568 = vrot.lane.b32.xlu0 %v428, 16
        %v569 = vpop.permute.xlu0 %568
        %570 = vrot.lane.b32.xlu0 %v435, 16
        %v571 = vpop.permute.xlu0 %570
        %572 = vrot.lane.b32.xlu0 %v545, 16
        %v573 = vpop.permute.xlu0 %572
        %v574 = vrot.slane %v510, 1
        %575 = vrot.lane.b32.xlu0 %v465, 20
        %v576 = vpop.permute.xlu0 %575
        %577 = vrot.lane.b32.xlu0 %v466, 20
        %v578 = vpop.permute.xlu0 %577
        %579 = vrot.lane.b32.xlu0 %v467, 20
        %v580 = vpop.permute.xlu0 %579
        %581 = vrot.lane.b32.xlu0 %v468, 20
        %v582 = vpop.permute.xlu0 %581
        %583 = vrot.lane.b32.xlu0 %v469, 20
        %v584 = vpop.permute.xlu0 %583
        %585 = vrot.lane.b32.xlu0 %v470, 20
        %v586 = vpop.permute.xlu0 %585
        %587 = vrot.lane.b32.xlu0 %v471, 20
        %v588 = vpop.permute.xlu0 %587
        %589 = vrot.lane.b32.xlu0 %v472, 20
        %v590 = vpop.permute.xlu0 %589
        %591 = vrot.lane.b32.xlu0 %v473, 20
        %v592 = vpop.permute.xlu0 %591
        %593 = vrot.lane.b32.xlu0 %v474, 20
        %v594 = vpop.permute.xlu0 %593
        %595 = vrot.lane.b32.xlu0 %v475, 20
        %v596 = vpop.permute.xlu0 %595
        %597 = vrot.lane.b32.xlu0 %v476, 20
        %v598 = vpop.permute.xlu0 %597
        %599 = vrot.lane.b32.xlu0 %v477, 20
        %v600 = vpop.permute.xlu0 %599
        %601 = vrot.lane.b32.xlu0 %v574, 20
        %v602 = vpop.permute.xlu0 %601
        %v605 = vunpack.c.l.b16 %v266
        %v606 = vunpack.c.l.b16 %v267
        %v607 = vpack.c.b16 %v606, %v605
        %608 = vrot.lane.b32.xlu0 %v326, 24
        %v609 = vpop.permute.xlu0 %608
        %610 = vrot.lane.b32.xlu0 %v327, 24
        %v611 = vpop.permute.xlu0 %610
        %612 = vrot.lane.b32.xlu0 %v328, 24
        %v613 = vpop.permute.xlu0 %612
        %614 = vrot.lane.b32.xlu0 %v329, 24
        %v615 = vpop.permute.xlu0 %614
        %616 = vrot.lane.b32.xlu0 %v330, 24
        %v617 = vpop.permute.xlu0 %616
        %618 = vrot.lane.b32.xlu0 %v331, 24
        %v619 = vpop.permute.xlu0 %618
        %620 = vrot.lane.b32.xlu0 %v332, 24
        %v621 = vpop.permute.xlu0 %620
        %622 = vrot.lane.b32.xlu0 %v333, 24
        %v623 = vpop.permute.xlu0 %622
        %624 = vrot.lane.b32.xlu0 %v334, 24
        %v625 = vpop.permute.xlu0 %624
        %626 = vrot.lane.b32.xlu0 %v335, 24
        %v627 = vpop.permute.xlu0 %626
        %628 = vrot.lane.b32.xlu0 %v336, 24
        %v629 = vpop.permute.xlu0 %628
        %630 = vrot.lane.b32.xlu0 %v337, 24
        %v631 = vpop.permute.xlu0 %630
        %632 = vrot.lane.b32.xlu0 %v510, 24
        %v633 = vpop.permute.xlu0 %632
        %634 = vrot.lane.b32.xlu0 %v607, 24
        %v635 = vpop.permute.xlu0 %634
        %v637 = vshrl.u32 %v607, 16
        %v639 = vshll.u32 %v607, 16
        %v641 = vrot.slane %v639, 1
        %v642 = vor.u32 %v637, %v641
        %643 = vrot.lane.b32.xlu0 %v358, 28
        %v644 = vpop.permute.xlu0 %643
        %645 = vrot.lane.b32.xlu0 %v365, 28
        %v646 = vpop.permute.xlu0 %645
        %647 = vrot.lane.b32.xlu0 %v372, 28
        %v648 = vpop.permute.xlu0 %647
        %649 = vrot.lane.b32.xlu0 %v379, 28
        %v650 = vpop.permute.xlu0 %649
        %651 = vrot.lane.b32.xlu0 %v386, 28
        %v652 = vpop.permute.xlu0 %651
        %653 = vrot.lane.b32.xlu0 %v393, 28
        %v654 = vpop.permute.xlu0 %653
        %655 = vrot.lane.b32.xlu0 %v400, 28
        %v656 = vpop.permute.xlu0 %655
        %657 = vrot.lane.b32.xlu0 %v407, 28
        %v658 = vpop.permute.xlu0 %657
        %659 = vrot.lane.b32.xlu0 %v414, 28
        %v660 = vpop.permute.xlu0 %659
        %661 = vrot.lane.b32.xlu0 %v421, 28
        %v662 = vpop.permute.xlu0 %661
        %663 = vrot.lane.b32.xlu0 %v428, 28
        %v664 = vpop.permute.xlu0 %663
        %665 = vrot.lane.b32.xlu0 %v435, 28
        %v666 = vpop.permute.xlu0 %665
        %667 = vrot.lane.b32.xlu0 %v545, 28
        %v668 = vpop.permute.xlu0 %667
        %669 = vrot.lane.b32.xlu0 %v642, 28
        %v670 = vpop.permute.xlu0 %669
        %v671 = vrot.slane %v607, 1
        %672 = vrot.lane.b32.xlu0 %v466, 32
        %v673 = vpop.permute.xlu0 %672
        %674 = vrot.lane.b32.xlu0 %v467, 32
        %v675 = vpop.permute.xlu0 %674
        %676 = vrot.lane.b32.xlu0 %v468, 32
        %v677 = vpop.permute.xlu0 %676
        %678 = vrot.lane.b32.xlu0 %v469, 32
        %v679 = vpop.permute.xlu0 %678
        %680 = vrot.lane.b32.xlu0 %v470, 32
        %v681 = vpop.permute.xlu0 %680
        %682 = vrot.lane.b32.xlu0 %v471, 32
        %v683 = vpop.permute.xlu0 %682
        %684 = vrot.lane.b32.xlu0 %v472, 32
        %v685 = vpop.permute.xlu0 %684
        %686 = vrot.lane.b32.xlu0 %v473, 32
        %v687 = vpop.permute.xlu0 %686
        %688 = vrot.lane.b32.xlu0 %v474, 32
        %v689 = vpop.permute.xlu0 %688
        %690 = vrot.lane.b32.xlu0 %v475, 32
        %v691 = vpop.permute.xlu0 %690
        %692 = vrot.lane.b32.xlu0 %v476, 32
        %v693 = vpop.permute.xlu0 %692
        %694 = vrot.lane.b32.xlu0 %v477, 32
        %v695 = vpop.permute.xlu0 %694
        %696 = vrot.lane.b32.xlu0 %v574, 32
        %v697 = vpop.permute.xlu0 %696
        %698 = vrot.lane.b32.xlu0 %v671, 32
        %v699 = vpop.permute.xlu0 %698
        %vm700 = vcmask 31744
        %v702 = vsel %vm700, %v324, %v437
        %v704 = vsel %vm700, %v325, %v439
        %v706 = vsel %vm700, %v326, %v441
        %v708 = vsel %vm700, %v327, %v443
        %v710 = vsel %vm700, %v328, %v445
        %v712 = vsel %vm700, %v329, %v447
        %v714 = vsel %vm700, %v330, %v449
        %v716 = vsel %vm700, %v331, %v451
        %v718 = vsel %vm700, %v332, %v453
        %v720 = vsel %vm700, %v333, %v455
        %v722 = vsel %vm700, %v334, %v457
        %v724 = vsel %vm700, %v335, %v459
        %v726 = vsel %vm700, %v336, %v461
        %v728 = vsel %vm700, %v337, %v463
        %vm729 = vcmask 64512
        %v731 = vsel %vm729, %v702, %v479
        %v733 = vsel %vm729, %v704, %v481
        %v735 = vsel %vm729, %v706, %v483
        %v737 = vsel %vm729, %v708, %v485
        %v739 = vsel %vm729, %v710, %v487
        %v741 = vsel %vm729, %v712, %v489
        %v743 = vsel %vm729, %v714, %v491
        %v745 = vsel %vm729, %v716, %v493
        %v747 = vsel %vm729, %v718, %v495
        %v749 = vsel %vm729, %v720, %v497
        %v751 = vsel %vm729, %v722, %v499
        %v753 = vsel %vm729, %v724, %v501
        %v755 = vsel %vm729, %v726, %v503
        %v757 = vsel %vm729, %v728, %v505
        %vm758 = vcmask 97280
        %v760 = vsel %vm758, %v731, %v512
        %v762 = vsel %vm758, %v733, %v514
        %v764 = vsel %vm758, %v735, %v516
        %v766 = vsel %vm758, %v737, %v518
        %v768 = vsel %vm758, %v739, %v520
        %v770 = vsel %vm758, %v741, %v522
        %v772 = vsel %vm758, %v743, %v524
        %v774 = vsel %vm758, %v745, %v526
        %v776 = vsel %vm758, %v747, %v528
        %v778 = vsel %vm758, %v749, %v530
        %v780 = vsel %vm758, %v751, %v532
        %v782 = vsel %vm758, %v753, %v534
        %v784 = vsel %vm758, %v755, %v536
        %v786 = vsel %vm758, %v757, %v538
        %vm787 = vcmask 130048
        %v789 = vsel %vm787, %v760, %v547
        %v791 = vsel %vm787, %v762, %v549
        %v793 = vsel %vm787, %v764, %v551
        %v795 = vsel %vm787, %v766, %v553
        %v797 = vsel %vm787, %v768, %v555
        %v799 = vsel %vm787, %v770, %v557
        %v801 = vsel %vm787, %v772, %v559
        %v803 = vsel %vm787, %v774, %v561
        %v805 = vsel %vm787, %v776, %v563
        %v807 = vsel %vm787, %v778, %v565
        %v809 = vsel %vm787, %v780, %v567
        %v811 = vsel %vm787, %v782, %v569
        %v813 = vsel %vm787, %v784, %v571
        %v815 = vsel %vm787, %v786, %v573
        %vm816 = vcmask 162816
        %v818 = vsel %vm816, %v789, %v576
        %v820 = vsel %vm816, %v791, %v578
        %v822 = vsel %vm816, %v793, %v580
        %v824 = vsel %vm816, %v795, %v582
        %v826 = vsel %vm816, %v797, %v584
        %v828 = vsel %vm816, %v799, %v586
        %v830 = vsel %vm816, %v801, %v588
        %v832 = vsel %vm816, %v803, %v590
        %v834 = vsel %vm816, %v805, %v592
        %v836 = vsel %vm816, %v807, %v594
        %v838 = vsel %vm816, %v809, %v596
        %v840 = vsel %vm816, %v811, %v598
        %v842 = vsel %vm816, %v813, %v600
        %v844 = vsel %vm816, %v815, %v602
        %vm845 = vcmask 195584
        %v847 = vsel %vm845, %v818, %v609
        %v849 = vsel %vm845, %v820, %v611
        %v851 = vsel %vm845, %v822, %v613
        %v853 = vsel %vm845, %v824, %v615
        %v855 = vsel %vm845, %v826, %v617
        %v857 = vsel %vm845, %v828, %v619
        %v859 = vsel %vm845, %v830, %v621
        %v861 = vsel %vm845, %v832, %v623
        %v863 = vsel %vm845, %v834, %v625
        %v865 = vsel %vm845, %v836, %v627
        %v867 = vsel %vm845, %v838, %v629
        %v869 = vsel %vm845, %v840, %v631
        %v871 = vsel %vm845, %v842, %v633
        %v873 = vsel %vm845, %v844, %v635
        %vm874 = vcmask 228352
        %v876 = vsel %vm874, %v847, %v644
        %v878 = vsel %vm874, %v849, %v646
        %v880 = vsel %vm874, %v851, %v648
        %v882 = vsel %vm874, %v853, %v650
        %v884 = vsel %vm874, %v855, %v652
        %v886 = vsel %vm874, %v857, %v654
        %v888 = vsel %vm874, %v859, %v656
        %v890 = vsel %vm874, %v861, %v658
        %v892 = vsel %vm874, %v863, %v660
        %v894 = vsel %vm874, %v865, %v662
        %v896 = vsel %vm874, %v867, %v664
        %v898 = vsel %vm874, %v869, %v666
        %v900 = vsel %vm874, %v871, %v668
        %v902 = vsel %vm874, %v873, %v670
        %vm903 = vcmask 261120
        %v905 = vsel %vm903, %v876, %v673
        %v907 = vsel %vm903, %v878, %v675
        %v909 = vsel %vm903, %v880, %v677
        %v911 = vsel %vm903, %v882, %v679
        %v913 = vsel %vm903, %v884, %v681
        %v915 = vsel %vm903, %v886, %v683
        %v917 = vsel %vm903, %v888, %v685
        %v919 = vsel %vm903, %v890, %v687
        %v921 = vsel %vm903, %v892, %v689
        %v923 = vsel %vm903, %v894, %v691
        %v925 = vsel %vm903, %v896, %v693
        %v927 = vsel %vm903, %v898, %v695
        %v929 = vsel %vm903, %v900, %v697
        %v931 = vsel %vm903, %v902, %v699
        %v946 = vcombine.high %v905, %v905
        %v948 = vunpack.c.l.s4 1966171168
        %v949 = vunpack.c.0.s8 %v948
        %v950 = vlaneseq
        %v951 = vshrl.u32 %v950, 7
        %v952 = vsub.s32 %v949, %v951
        %v953 = vrot.slane %v905, %v952
        %v955 = vunpack.c.l.s4 1966171168
        %v956 = vunpack.c.0.s8 %v955
        %v957 = vlaneseq
        %v958 = vshrl.u32 %v957, 7
        %v959 = vsub.s32 %v956, %v958
        %v960 = vrot.slane %v946, %v959
        %v961 = vcombine.high %v953, %v953
        %v962 = vcombine.high %v960, %v960
        %v964 = vunpack.c.l.s4 1966171168
        %v965 = vunpack.c.0.s8 %v964
        %v966 = vlaneseq
        %v967 = vshrl.u32 %v966, 7
        %v968 = vsub.s32 %v965, %v967
        %v969 = vrot.slane %v953, %v968
        %v971 = vunpack.c.l.s4 1966171168
        %v972 = vunpack.c.0.s8 %v971
        %v973 = vlaneseq
        %v974 = vshrl.u32 %v973, 7
        %v975 = vsub.s32 %v972, %v974
        %v976 = vrot.slane %v960, %v975
        %v978 = vunpack.c.l.s4 1966171168
        %v979 = vunpack.c.0.s8 %v978
        %v980 = vlaneseq
        %v981 = vshrl.u32 %v980, 7
        %v982 = vsub.s32 %v979, %v981
        %v983 = vrot.slane %v961, %v982
        %v985 = vunpack.c.l.s4 1966171168
        %v986 = vunpack.c.0.s8 %v985
        %v987 = vlaneseq
        %v988 = vshrl.u32 %v987, 7
        %v989 = vsub.s32 %v986, %v988
        %v990 = vrot.slane %v962, %v989
        %v991 = vcombine.high %v969, %v969
        %v992 = vcombine.high %v976, %v976
        %v993 = vcombine.high %v983, %v983
        %v994 = vcombine.high %v907, %v907
        %v996 = vunpack.c.l.s4 1966171168
        %v997 = vunpack.c.0.s8 %v996
        %v998 = vlaneseq
        %v999 = vshrl.u32 %v998, 7
        %v1000 = vsub.s32 %v997, %v999
        %v1001 = vrot.slane %v907, %v1000
        %v1003 = vunpack.c.l.s4 1966171168
        %v1004 = vunpack.c.0.s8 %v1003
        %v1005 = vlaneseq
        %v1006 = vshrl.u32 %v1005, 7
        %v1007 = vsub.s32 %v1004, %v1006
        %v1008 = vrot.slane %v994, %v1007
        %v1009 = vcombine.high %v1001, %v1001
        %v1010 = vcombine.high %v1008, %v1008
        %v1012 = vunpack.c.l.s4 1966171168
        %v1013 = vunpack.c.0.s8 %v1012
        %v1014 = vlaneseq
        %v1015 = vshrl.u32 %v1014, 7
        %v1016 = vsub.s32 %v1013, %v1015
        %v1017 = vrot.slane %v1001, %v1016
        %v1019 = vunpack.c.l.s4 1966171168
        %v1020 = vunpack.c.0.s8 %v1019
        %v1021 = vlaneseq
        %v1022 = vshrl.u32 %v1021, 7
        %v1023 = vsub.s32 %v1020, %v1022
        %v1024 = vrot.slane %v1008, %v1023
        %v1026 = vunpack.c.l.s4 1966171168
        %v1027 = vunpack.c.0.s8 %v1026
        %v1028 = vlaneseq
        %v1029 = vshrl.u32 %v1028, 7
        %v1030 = vsub.s32 %v1027, %v1029
        %v1031 = vrot.slane %v1009, %v1030
        %v1033 = vunpack.c.l.s4 1966171168
        %v1034 = vunpack.c.0.s8 %v1033
        %v1035 = vlaneseq
        %v1036 = vshrl.u32 %v1035, 7
        %v1037 = vsub.s32 %v1034, %v1036
        %v1038 = vrot.slane %v1010, %v1037
        %v1039 = vcombine.high %v1017, %v1017
        %v1040 = vcombine.high %v1024, %v1024
        %v1041 = vcombine.high %v1031, %v1031
        %v1042 = vcombine.high %v909, %v909
        %v1044 = vunpack.c.l.s4 1966171168
        %v1045 = vunpack.c.0.s8 %v1044
        %v1046 = vlaneseq
        %v1047 = vshrl.u32 %v1046, 7
        %v1048 = vsub.s32 %v1045, %v1047
        %v1049 = vrot.slane %v909, %v1048
        %v1051 = vunpack.c.l.s4 1966171168
        %v1052 = vunpack.c.0.s8 %v1051
        %v1053 = vlaneseq
        %v1054 = vshrl.u32 %v1053, 7
        %v1055 = vsub.s32 %v1052, %v1054
        %v1056 = vrot.slane %v1042, %v1055
        %v1057 = vcombine.high %v1049, %v1049
        %v1058 = vcombine.high %v1056, %v1056
        %v1060 = vunpack.c.l.s4 1966171168
        %v1061 = vunpack.c.0.s8 %v1060
        %v1062 = vlaneseq
        %v1063 = vshrl.u32 %v1062, 7
        %v1064 = vsub.s32 %v1061, %v1063
        %v1065 = vrot.slane %v1049, %v1064
        %v1067 = vunpack.c.l.s4 1966171168
        %v1068 = vunpack.c.0.s8 %v1067
        %v1069 = vlaneseq
        %v1070 = vshrl.u32 %v1069, 7
        %v1071 = vsub.s32 %v1068, %v1070
        %v1072 = vrot.slane %v1056, %v1071
        %v1074 = vunpack.c.l.s4 1966171168
        %v1075 = vunpack.c.0.s8 %v1074
        %v1076 = vlaneseq
        %v1077 = vshrl.u32 %v1076, 7
        %v1078 = vsub.s32 %v1075, %v1077
        %v1079 = vrot.slane %v1057, %v1078
        %v1081 = vunpack.c.l.s4 1966171168
        %v1082 = vunpack.c.0.s8 %v1081
        %v1083 = vlaneseq
        %v1084 = vshrl.u32 %v1083, 7
        %v1085 = vsub.s32 %v1082, %v1084
        %v1086 = vrot.slane %v1058, %v1085
        %v1087 = vcombine.high %v1065, %v1065
        %v1088 = vcombine.high %v1072, %v1072
        %v1089 = vcombine.high %v1079, %v1079
        %v1090 = vcombine.high %v911, %v911
        %v1092 = vunpack.c.l.s4 1966171168
        %v1093 = vunpack.c.0.s8 %v1092
        %v1094 = vlaneseq
        %v1095 = vshrl.u32 %v1094, 7
        %v1096 = vsub.s32 %v1093, %v1095
        %v1097 = vrot.slane %v911, %v1096
        %v1099 = vunpack.c.l.s4 1966171168
        %v1100 = vunpack.c.0.s8 %v1099
        %v1101 = vlaneseq
        %v1102 = vshrl.u32 %v1101, 7
        %v1103 = vsub.s32 %v1100, %v1102
        %v1104 = vrot.slane %v1090, %v1103
        %v1105 = vcombine.high %v1097, %v1097
        %v1106 = vcombine.high %v1104, %v1104
        %v1108 = vunpack.c.l.s4 1966171168
        %v1109 = vunpack.c.0.s8 %v1108
        %v1110 = vlaneseq
        %v1111 = vshrl.u32 %v1110, 7
        %v1112 = vsub.s32 %v1109, %v1111
        %v1113 = vrot.slane %v1097, %v1112
        %v1115 = vunpack.c.l.s4 1966171168
        %v1116 = vunpack.c.0.s8 %v1115
        %v1117 = vlaneseq
        %v1118 = vshrl.u32 %v1117, 7
        %v1119 = vsub.s32 %v1116, %v1118
        %v1120 = vrot.slane %v1104, %v1119
        %v1122 = vunpack.c.l.s4 1966171168
        %v1123 = vunpack.c.0.s8 %v1122
        %v1124 = vlaneseq
        %v1125 = vshrl.u32 %v1124, 7
        %v1126 = vsub.s32 %v1123, %v1125
        %v1127 = vrot.slane %v1105, %v1126
        %v1129 = vunpack.c.l.s4 1966171168
        %v1130 = vunpack.c.0.s8 %v1129
        %v1131 = vlaneseq
        %v1132 = vshrl.u32 %v1131, 7
        %v1133 = vsub.s32 %v1130, %v1132
        %v1134 = vrot.slane %v1106, %v1133
        %v1135 = vcombine.high %v1113, %v1113
        %v1136 = vcombine.high %v1120, %v1120
        %v1137 = vcombine.high %v1127, %v1127
        %v1138 = vcombine.high %v913, %v913
        %v1140 = vunpack.c.l.s4 1966171168
        %v1141 = vunpack.c.0.s8 %v1140
        %v1142 = vlaneseq
        %v1143 = vshrl.u32 %v1142, 7
        %v1144 = vsub.s32 %v1141, %v1143
        %v1145 = vrot.slane %v913, %v1144
        %v1147 = vunpack.c.l.s4 1966171168
        %v1148 = vunpack.c.0.s8 %v1147
        %v1149 = vlaneseq
        %v1150 = vshrl.u32 %v1149, 7
        %v1151 = vsub.s32 %v1148, %v1150
        %v1152 = vrot.slane %v1138, %v1151
        %v1153 = vcombine.high %v1145, %v1145
        %v1154 = vcombine.high %v1152, %v1152
        %v1156 = vunpack.c.l.s4 1966171168
        %v1157 = vunpack.c.0.s8 %v1156
        %v1158 = vlaneseq
        %v1159 = vshrl.u32 %v1158, 7
        %v1160 = vsub.s32 %v1157, %v1159
        %v1161 = vrot.slane %v1145, %v1160
        %v1163 = vunpack.c.l.s4 1966171168
        %v1164 = vunpack.c.0.s8 %v1163
        %v1165 = vlaneseq
        %v1166 = vshrl.u32 %v1165, 7
        %v1167 = vsub.s32 %v1164, %v1166
        %v1168 = vrot.slane %v1152, %v1167
        %v1170 = vunpack.c.l.s4 1966171168
        %v1171 = vunpack.c.0.s8 %v1170
        %v1172 = vlaneseq
        %v1173 = vshrl.u32 %v1172, 7
        %v1174 = vsub.s32 %v1171, %v1173
        %v1175 = vrot.slane %v1153, %v1174
        %v1177 = vunpack.c.l.s4 1966171168
        %v1178 = vunpack.c.0.s8 %v1177
        %v1179 = vlaneseq
        %v1180 = vshrl.u32 %v1179, 7
        %v1181 = vsub.s32 %v1178, %v1180
        %v1182 = vrot.slane %v1154, %v1181
        %v1183 = vcombine.high %v1161, %v1161
        %v1184 = vcombine.high %v1168, %v1168
        %v1185 = vcombine.high %v1175, %v1175
        %v1186 = vcombine.high %v915, %v915
        %v1188 = vunpack.c.l.s4 1966171168
        %v1189 = vunpack.c.0.s8 %v1188
        %v1190 = vlaneseq
        %v1191 = vshrl.u32 %v1190, 7
        %v1192 = vsub.s32 %v1189, %v1191
        %v1193 = vrot.slane %v915, %v1192
        %v1195 = vunpack.c.l.s4 1966171168
        %v1196 = vunpack.c.0.s8 %v1195
        %v1197 = vlaneseq
        %v1198 = vshrl.u32 %v1197, 7
        %v1199 = vsub.s32 %v1196, %v1198
        %v1200 = vrot.slane %v1186, %v1199
        %v1201 = vcombine.high %v1193, %v1193
        %v1202 = vcombine.high %v1200, %v1200
        %v1204 = vunpack.c.l.s4 1966171168
        %v1205 = vunpack.c.0.s8 %v1204
        %v1206 = vlaneseq
        %v1207 = vshrl.u32 %v1206, 7
        %v1208 = vsub.s32 %v1205, %v1207
        %v1209 = vrot.slane %v1193, %v1208
        %v1211 = vunpack.c.l.s4 1966171168
        %v1212 = vunpack.c.0.s8 %v1211
        %v1213 = vlaneseq
        %v1214 = vshrl.u32 %v1213, 7
        %v1215 = vsub.s32 %v1212, %v1214
        %v1216 = vrot.slane %v1200, %v1215
        %v1218 = vunpack.c.l.s4 1966171168
        %v1219 = vunpack.c.0.s8 %v1218
        %v1220 = vlaneseq
        %v1221 = vshrl.u32 %v1220, 7
        %v1222 = vsub.s32 %v1219, %v1221
        %v1223 = vrot.slane %v1201, %v1222
        %v1225 = vunpack.c.l.s4 1966171168
        %v1226 = vunpack.c.0.s8 %v1225
        %v1227 = vlaneseq
        %v1228 = vshrl.u32 %v1227, 7
        %v1229 = vsub.s32 %v1226, %v1228
        %v1230 = vrot.slane %v1202, %v1229
        %v1231 = vcombine.high %v1209, %v1209
        %v1232 = vcombine.high %v1216, %v1216
        %v1233 = vcombine.high %v1223, %v1223
        %v1234 = vcombine.high %v917, %v917
        %v1236 = vunpack.c.l.s4 1966171168
        %v1237 = vunpack.c.0.s8 %v1236
        %v1238 = vlaneseq
        %v1239 = vshrl.u32 %v1238, 7
        %v1240 = vsub.s32 %v1237, %v1239
        %v1241 = vrot.slane %v917, %v1240
        %v1243 = vunpack.c.l.s4 1966171168
        %v1244 = vunpack.c.0.s8 %v1243
        %v1245 = vlaneseq
        %v1246 = vshrl.u32 %v1245, 7
        %v1247 = vsub.s32 %v1244, %v1246
        %v1248 = vrot.slane %v1234, %v1247
        %v1249 = vcombine.high %v1241, %v1241
        %v1250 = vcombine.high %v1248, %v1248
        %v1252 = vunpack.c.l.s4 1966171168
        %v1253 = vunpack.c.0.s8 %v1252
        %v1254 = vlaneseq
        %v1255 = vshrl.u32 %v1254, 7
        %v1256 = vsub.s32 %v1253, %v1255
        %v1257 = vrot.slane %v1241, %v1256
        %v1259 = vunpack.c.l.s4 1966171168
        %v1260 = vunpack.c.0.s8 %v1259
        %v1261 = vlaneseq
        %v1262 = vshrl.u32 %v1261, 7
        %v1263 = vsub.s32 %v1260, %v1262
        %v1264 = vrot.slane %v1248, %v1263
        %v1266 = vunpack.c.l.s4 1966171168
        %v1267 = vunpack.c.0.s8 %v1266
        %v1268 = vlaneseq
        %v1269 = vshrl.u32 %v1268, 7
        %v1270 = vsub.s32 %v1267, %v1269
        %v1271 = vrot.slane %v1249, %v1270
        %v1273 = vunpack.c.l.s4 1966171168
        %v1274 = vunpack.c.0.s8 %v1273
        %v1275 = vlaneseq
        %v1276 = vshrl.u32 %v1275, 7
        %v1277 = vsub.s32 %v1274, %v1276
        %v1278 = vrot.slane %v1250, %v1277
        %v1279 = vcombine.high %v1257, %v1257
        %v1280 = vcombine.high %v1264, %v1264
        %v1281 = vcombine.high %v1271, %v1271
        %v1282 = vcombine.high %v919, %v919
        %v1284 = vunpack.c.l.s4 1966171168
        %v1285 = vunpack.c.0.s8 %v1284
        %v1286 = vlaneseq
        %v1287 = vshrl.u32 %v1286, 7
        %v1288 = vsub.s32 %v1285, %v1287
        %v1289 = vrot.slane %v919, %v1288
        %v1291 = vunpack.c.l.s4 1966171168
        %v1292 = vunpack.c.0.s8 %v1291
        %v1293 = vlaneseq
        %v1294 = vshrl.u32 %v1293, 7
        %v1295 = vsub.s32 %v1292, %v1294
        %v1296 = vrot.slane %v1282, %v1295
        %v1297 = vcombine.high %v1289, %v1289
        %v1298 = vcombine.high %v1296, %v1296
        %v1300 = vunpack.c.l.s4 1966171168
        %v1301 = vunpack.c.0.s8 %v1300
        %v1302 = vlaneseq
        %v1303 = vshrl.u32 %v1302, 7
        %v1304 = vsub.s32 %v1301, %v1303
        %v1305 = vrot.slane %v1289, %v1304
        %v1307 = vunpack.c.l.s4 1966171168
        %v1308 = vunpack.c.0.s8 %v1307
        %v1309 = vlaneseq
        %v1310 = vshrl.u32 %v1309, 7
        %v1311 = vsub.s32 %v1308, %v1310
        %v1312 = vrot.slane %v1296, %v1311
        %v1314 = vunpack.c.l.s4 1966171168
        %v1315 = vunpack.c.0.s8 %v1314
        %v1316 = vlaneseq
        %v1317 = vshrl.u32 %v1316, 7
        %v1318 = vsub.s32 %v1315, %v1317
        %v1319 = vrot.slane %v1297, %v1318
        %v1321 = vunpack.c.l.s4 1966171168
        %v1322 = vunpack.c.0.s8 %v1321
        %v1323 = vlaneseq
        %v1324 = vshrl.u32 %v1323, 7
        %v1325 = vsub.s32 %v1322, %v1324
        %v1326 = vrot.slane %v1298, %v1325
        %v1327 = vcombine.high %v1305, %v1305
        %v1328 = vcombine.high %v1312, %v1312
        %v1329 = vcombine.high %v1319, %v1319
        %v1330 = vcombine.high %v921, %v921
        %v1332 = vunpack.c.l.s4 1966171168
        %v1333 = vunpack.c.0.s8 %v1332
        %v1334 = vlaneseq
        %v1335 = vshrl.u32 %v1334, 7
        %v1336 = vsub.s32 %v1333, %v1335
        %v1337 = vrot.slane %v921, %v1336
        %v1339 = vunpack.c.l.s4 1966171168
        %v1340 = vunpack.c.0.s8 %v1339
        %v1341 = vlaneseq
        %v1342 = vshrl.u32 %v1341, 7
        %v1343 = vsub.s32 %v1340, %v1342
        %v1344 = vrot.slane %v1330, %v1343
        %v1345 = vcombine.high %v1337, %v1337
        %v1346 = vcombine.high %v1344, %v1344
        %v1348 = vunpack.c.l.s4 1966171168
        %v1349 = vunpack.c.0.s8 %v1348
        %v1350 = vlaneseq
        %v1351 = vshrl.u32 %v1350, 7
        %v1352 = vsub.s32 %v1349, %v1351
        %v1353 = vrot.slane %v1337, %v1352
        %v1355 = vunpack.c.l.s4 1966171168
        %v1356 = vunpack.c.0.s8 %v1355
        %v1357 = vlaneseq
        %v1358 = vshrl.u32 %v1357, 7
        %v1359 = vsub.s32 %v1356, %v1358
        %v1360 = vrot.slane %v1344, %v1359
        %v1362 = vunpack.c.l.s4 1966171168
        %v1363 = vunpack.c.0.s8 %v1362
        %v1364 = vlaneseq
        %v1365 = vshrl.u32 %v1364, 7
        %v1366 = vsub.s32 %v1363, %v1365
        %v1367 = vrot.slane %v1345, %v1366
        %v1369 = vunpack.c.l.s4 1966171168
        %v1370 = vunpack.c.0.s8 %v1369
        %v1371 = vlaneseq
        %v1372 = vshrl.u32 %v1371, 7
        %v1373 = vsub.s32 %v1370, %v1372
        %v1374 = vrot.slane %v1346, %v1373
        %v1375 = vcombine.high %v1353, %v1353
        %v1376 = vcombine.high %v1360, %v1360
        %v1377 = vcombine.high %v1367, %v1367
        %v1378 = vcombine.high %v923, %v923
        %v1380 = vunpack.c.l.s4 1966171168
        %v1381 = vunpack.c.0.s8 %v1380
        %v1382 = vlaneseq
        %v1383 = vshrl.u32 %v1382, 7
        %v1384 = vsub.s32 %v1381, %v1383
        %v1385 = vrot.slane %v923, %v1384
        %v1387 = vunpack.c.l.s4 1966171168
        %v1388 = vunpack.c.0.s8 %v1387
        %v1389 = vlaneseq
        %v1390 = vshrl.u32 %v1389, 7
        %v1391 = vsub.s32 %v1388, %v1390
        %v1392 = vrot.slane %v1378, %v1391
        %v1393 = vcombine.high %v1385, %v1385
        %v1394 = vcombine.high %v1392, %v1392
        %v1396 = vunpack.c.l.s4 1966171168
        %v1397 = vunpack.c.0.s8 %v1396
        %v1398 = vlaneseq
        %v1399 = vshrl.u32 %v1398, 7
        %v1400 = vsub.s32 %v1397, %v1399
        %v1401 = vrot.slane %v1385, %v1400
        %v1403 = vunpack.c.l.s4 1966171168
        %v1404 = vunpack.c.0.s8 %v1403
        %v1405 = vlaneseq
        %v1406 = vshrl.u32 %v1405, 7
        %v1407 = vsub.s32 %v1404, %v1406
        %v1408 = vrot.slane %v1392, %v1407
        %v1410 = vunpack.c.l.s4 1966171168
        %v1411 = vunpack.c.0.s8 %v1410
        %v1412 = vlaneseq
        %v1413 = vshrl.u32 %v1412, 7
        %v1414 = vsub.s32 %v1411, %v1413
        %v1415 = vrot.slane %v1393, %v1414
        %v1417 = vunpack.c.l.s4 1966171168
        %v1418 = vunpack.c.0.s8 %v1417
        %v1419 = vlaneseq
        %v1420 = vshrl.u32 %v1419, 7
        %v1421 = vsub.s32 %v1418, %v1420
        %v1422 = vrot.slane %v1394, %v1421
        %v1423 = vcombine.high %v1401, %v1401
        %v1424 = vcombine.high %v1408, %v1408
        %v1425 = vcombine.high %v1415, %v1415
        %v1426 = vcombine.high %v925, %v925
        %v1428 = vunpack.c.l.s4 1966171168
        %v1429 = vunpack.c.0.s8 %v1428
        %v1430 = vlaneseq
        %v1431 = vshrl.u32 %v1430, 7
        %v1432 = vsub.s32 %v1429, %v1431
        %v1433 = vrot.slane %v925, %v1432
        %v1435 = vunpack.c.l.s4 1966171168
        %v1436 = vunpack.c.0.s8 %v1435
        %v1437 = vlaneseq
        %v1438 = vshrl.u32 %v1437, 7
        %v1439 = vsub.s32 %v1436, %v1438
        %v1440 = vrot.slane %v1426, %v1439
        %v1441 = vcombine.high %v1433, %v1433
        %v1442 = vcombine.high %v1440, %v1440
        %v1444 = vunpack.c.l.s4 1966171168
        %v1445 = vunpack.c.0.s8 %v1444
        %v1446 = vlaneseq
        %v1447 = vshrl.u32 %v1446, 7
        %v1448 = vsub.s32 %v1445, %v1447
        %v1449 = vrot.slane %v1433, %v1448
        %v1451 = vunpack.c.l.s4 1966171168
        %v1452 = vunpack.c.0.s8 %v1451
        %v1453 = vlaneseq
        %v1454 = vshrl.u32 %v1453, 7
        %v1455 = vsub.s32 %v1452, %v1454
        %v1456 = vrot.slane %v1440, %v1455
        %v1458 = vunpack.c.l.s4 1966171168
        %v1459 = vunpack.c.0.s8 %v1458
        %v1460 = vlaneseq
        %v1461 = vshrl.u32 %v1460, 7
        %v1462 = vsub.s32 %v1459, %v1461
        %v1463 = vrot.slane %v1441, %v1462
        %v1465 = vunpack.c.l.s4 1966171168
        %v1466 = vunpack.c.0.s8 %v1465
        %v1467 = vlaneseq
        %v1468 = vshrl.u32 %v1467, 7
        %v1469 = vsub.s32 %v1466, %v1468
        %v1470 = vrot.slane %v1442, %v1469
        %v1471 = vcombine.high %v1449, %v1449
        %v1472 = vcombine.high %v1456, %v1456
        %v1473 = vcombine.high %v1463, %v1463
        %v1474 = vcombine.high %v927, %v927
        %v1476 = vunpack.c.l.s4 1966171168
        %v1477 = vunpack.c.0.s8 %v1476
        %v1478 = vlaneseq
        %v1479 = vshrl.u32 %v1478, 7
        %v1480 = vsub.s32 %v1477, %v1479
        %v1481 = vrot.slane %v927, %v1480
        %v1483 = vunpack.c.l.s4 1966171168
        %v1484 = vunpack.c.0.s8 %v1483
        %v1485 = vlaneseq
        %v1486 = vshrl.u32 %v1485, 7
        %v1487 = vsub.s32 %v1484, %v1486
        %v1488 = vrot.slane %v1474, %v1487
        %v1489 = vcombine.high %v1481, %v1481
        %v1490 = vcombine.high %v1488, %v1488
        %v1492 = vunpack.c.l.s4 1966171168
        %v1493 = vunpack.c.0.s8 %v1492
        %v1494 = vlaneseq
        %v1495 = vshrl.u32 %v1494, 7
        %v1496 = vsub.s32 %v1493, %v1495
        %v1497 = vrot.slane %v1481, %v1496
        %v1499 = vunpack.c.l.s4 1966171168
        %v1500 = vunpack.c.0.s8 %v1499
        %v1501 = vlaneseq
        %v1502 = vshrl.u32 %v1501, 7
        %v1503 = vsub.s32 %v1500, %v1502
        %v1504 = vrot.slane %v1488, %v1503
        %v1506 = vunpack.c.l.s4 1966171168
        %v1507 = vunpack.c.0.s8 %v1506
        %v1508 = vlaneseq
        %v1509 = vshrl.u32 %v1508, 7
        %v1510 = vsub.s32 %v1507, %v1509
        %v1511 = vrot.slane %v1489, %v1510
        %v1513 = vunpack.c.l.s4 1966171168
        %v1514 = vunpack.c.0.s8 %v1513
        %v1515 = vlaneseq
        %v1516 = vshrl.u32 %v1515, 7
        %v1517 = vsub.s32 %v1514, %v1516
        %v1518 = vrot.slane %v1490, %v1517
        %v1519 = vcombine.high %v1497, %v1497
        %v1520 = vcombine.high %v1504, %v1504
        %v1521 = vcombine.high %v1511, %v1511
        %v1522 = vcombine.high %v929, %v929
        %v1524 = vunpack.c.l.s4 1966171168
        %v1525 = vunpack.c.0.s8 %v1524
        %v1526 = vlaneseq
        %v1527 = vshrl.u32 %v1526, 7
        %v1528 = vsub.s32 %v1525, %v1527
        %v1529 = vrot.slane %v929, %v1528
        %v1531 = vunpack.c.l.s4 1966171168
        %v1532 = vunpack.c.0.s8 %v1531
        %v1533 = vlaneseq
        %v1534 = vshrl.u32 %v1533, 7
        %v1535 = vsub.s32 %v1532, %v1534
        %v1536 = vrot.slane %v1522, %v1535
        %v1537 = vcombine.high %v1529, %v1529
        %v1538 = vcombine.high %v1536, %v1536
        %v1540 = vunpack.c.l.s4 1966171168
        %v1541 = vunpack.c.0.s8 %v1540
        %v1542 = vlaneseq
        %v1543 = vshrl.u32 %v1542, 7
        %v1544 = vsub.s32 %v1541, %v1543
        %v1545 = vrot.slane %v1529, %v1544
        %v1547 = vunpack.c.l.s4 1966171168
        %v1548 = vunpack.c.0.s8 %v1547
        %v1549 = vlaneseq
        %v1550 = vshrl.u32 %v1549, 7
        %v1551 = vsub.s32 %v1548, %v1550
        %v1552 = vrot.slane %v1536, %v1551
        %v1554 = vunpack.c.l.s4 1966171168
        %v1555 = vunpack.c.0.s8 %v1554
        %v1556 = vlaneseq
        %v1557 = vshrl.u32 %v1556, 7
        %v1558 = vsub.s32 %v1555, %v1557
        %v1559 = vrot.slane %v1537, %v1558
        %v1561 = vunpack.c.l.s4 1966171168
        %v1562 = vunpack.c.0.s8 %v1561
        %v1563 = vlaneseq
        %v1564 = vshrl.u32 %v1563, 7
        %v1565 = vsub.s32 %v1562, %v1564
        %v1566 = vrot.slane %v1538, %v1565
        %v1567 = vcombine.high %v1545, %v1545
        %v1568 = vcombine.high %v1552, %v1552
        %v1569 = vcombine.high %v1559, %v1559
        %v1570 = vcombine.high %v931, %v931
        %v1572 = vunpack.c.l.s4 1966171168
        %v1573 = vunpack.c.0.s8 %v1572
        %v1574 = vlaneseq
        %v1575 = vshrl.u32 %v1574, 7
        %v1576 = vsub.s32 %v1573, %v1575
        %v1577 = vrot.slane %v931, %v1576
        %v1579 = vunpack.c.l.s4 1966171168
        %v1580 = vunpack.c.0.s8 %v1579
        %v1581 = vlaneseq
        %v1582 = vshrl.u32 %v1581, 7
        %v1583 = vsub.s32 %v1580, %v1582
        %v1584 = vrot.slane %v1570, %v1583
        %v1585 = vcombine.high %v1577, %v1577
        %v1586 = vcombine.high %v1584, %v1584
        %v1588 = vunpack.c.l.s4 1966171168
        %v1589 = vunpack.c.0.s8 %v1588
        %v1590 = vlaneseq
        %v1591 = vshrl.u32 %v1590, 7
        %v1592 = vsub.s32 %v1589, %v1591
        %v1593 = vrot.slane %v1577, %v1592
        %v1595 = vunpack.c.l.s4 1966171168
        %v1596 = vunpack.c.0.s8 %v1595
        %v1597 = vlaneseq
        %v1598 = vshrl.u32 %v1597, 7
        %v1599 = vsub.s32 %v1596, %v1598
        %v1600 = vrot.slane %v1584, %v1599
        %v1602 = vunpack.c.l.s4 1966171168
        %v1603 = vunpack.c.0.s8 %v1602
        %v1604 = vlaneseq
        %v1605 = vshrl.u32 %v1604, 7
        %v1606 = vsub.s32 %v1603, %v1605
        %v1607 = vrot.slane %v1585, %v1606
        %v1609 = vunpack.c.l.s4 1966171168
        %v1610 = vunpack.c.0.s8 %v1609
        %v1611 = vlaneseq
        %v1612 = vshrl.u32 %v1611, 7
        %v1613 = vsub.s32 %v1610, %v1612
        %v1614 = vrot.slane %v1586, %v1613
        %v1615 = vcombine.high %v1593, %v1593
        %v1616 = vcombine.high %v1600, %v1600
        %v1617 = vcombine.high %v1607, %v1607
        %v1618 = vld [vmem:[#allocation5] sm:$0xf]
        %v1619 = vld [vmem:[#allocation5 + $0x4] sm:$0xf]
        %v1620 = vld [vmem:[#allocation5 + $0x8] sm:$0xf]
        %v1621 = vld [vmem:[#allocation5 + $0xc] sm:$0xf]
        %v1622 = vld [vmem:[#allocation5 + $0x10] sm:$0x3]
        %v1623 = vcombine.low %v969, %v983
        %v1624 = vcombine.low %v991, %v993
        %v1625 = vcombine.low %v976, %v990
        %v1626 = vcombine.low %v992, %v1017
        %v1628 = vunpack.c.l.s4 1966171168
        %v1629 = vunpack.c.0.s8 %v1628
        %v1630 = vlaneseq
        %v1631 = vshrl.u32 %v1630, 7
        %v1632 = vsub.s32 %v1629, %v1631
        %v1633 = vrot.slane %v1623, %v1632
        %v1635 = vunpack.c.l.s4 1966171168
        %v1636 = vunpack.c.0.s8 %v1635
        %v1637 = vlaneseq
        %v1638 = vshrl.u32 %v1637, 7
        %v1639 = vsub.s32 %v1636, %v1638
        %v1640 = vrot.slane %v1624, %v1639
        %v1642 = vunpack.c.l.s4 1966171168
        %v1643 = vunpack.c.0.s8 %v1642
        %v1644 = vlaneseq
        %v1645 = vshrl.u32 %v1644, 7
        %v1646 = vsub.s32 %v1643, %v1645
        %v1647 = vrot.slane %v1625, %v1646
        %v1649 = vunpack.c.l.s4 1966171168
        %v1650 = vunpack.c.0.s8 %v1649
        %v1651 = vlaneseq
        %v1652 = vshrl.u32 %v1651, 7
        %v1653 = vsub.s32 %v1650, %v1652
        %v1654 = vrot.slane %v1626, %v1653
        %v1655 = vcombine.low %v1633, %v1640
        %v1656 = vcombine.low %v1647, %v1654
        %v1658 = vunpack.c.l.s4 1966171168
        %v1659 = vunpack.c.0.s8 %v1658
        %v1660 = vlaneseq
        %v1661 = vshrl.u32 %v1660, 7
        %v1662 = vsub.s32 %v1659, %v1661
        %v1663 = vrot.slane %v1655, %v1662
        %v1665 = vunpack.c.l.s4 1966171168
        %v1666 = vunpack.c.0.s8 %v1665
        %v1667 = vlaneseq
        %v1668 = vshrl.u32 %v1667, 7
        %v1669 = vsub.s32 %v1666, %v1668
        %v1670 = vrot.slane %v1656, %v1669
        %v1671 = vcombine.low %v1663, %v1670
        %v1672 = vcombine.low %v1031, %v1039
        %v1673 = vcombine.low %v1041, %v1024
        %v1674 = vcombine.low %v1038, %v1040
        %v1675 = vcombine.low %v1065, %v1079
        %v1677 = vunpack.c.l.s4 1966171168
        %v1678 = vunpack.c.0.s8 %v1677
        %v1679 = vlaneseq
        %v1680 = vshrl.u32 %v1679, 7
        %v1681 = vsub.s32 %v1678, %v1680
        %v1682 = vrot.slane %v1672, %v1681
        %v1684 = vunpack.c.l.s4 1966171168
        %v1685 = vunpack.c.0.s8 %v1684
        %v1686 = vlaneseq
        %v1687 = vshrl.u32 %v1686, 7
        %v1688 = vsub.s32 %v1685, %v1687
        %v1689 = vrot.slane %v1673, %v1688
        %v1691 = vunpack.c.l.s4 1966171168
        %v1692 = vunpack.c.0.s8 %v1691
        %v1693 = vlaneseq
        %v1694 = vshrl.u32 %v1693, 7
        %v1695 = vsub.s32 %v1692, %v1694
        %v1696 = vrot.slane %v1674, %v1695
        %v1698 = vunpack.c.l.s4 1966171168
        %v1699 = vunpack.c.0.s8 %v1698
        %v1700 = vlaneseq
        %v1701 = vshrl.u32 %v1700, 7
        %v1702 = vsub.s32 %v1699, %v1701
        %v1703 = vrot.slane %v1675, %v1702
        %v1704 = vcombine.low %v1682, %v1689
        %v1705 = vcombine.low %v1696, %v1703
        %v1707 = vunpack.c.l.s4 1966171168
        %v1708 = vunpack.c.0.s8 %v1707
        %v1709 = vlaneseq
        %v1710 = vshrl.u32 %v1709, 7
        %v1711 = vsub.s32 %v1708, %v1710
        %v1712 = vrot.slane %v1704, %v1711
        %v1714 = vunpack.c.l.s4 1966171168
        %v1715 = vunpack.c.0.s8 %v1714
        %v1716 = vlaneseq
        %v1717 = vshrl.u32 %v1716, 7
        %v1718 = vsub.s32 %v1715, %v1717
        %v1719 = vrot.slane %v1705, %v1718
        %v1720 = vcombine.low %v1712, %v1719
        %v1721 = vcombine.low %v1087, %v1089
        %v1722 = vcombine.low %v1072, %v1086
        %v1723 = vcombine.low %v1088, %v1113
        %v1724 = vcombine.low %v1127, %v1135
        %v1726 = vunpack.c.l.s4 1966171168
        %v1727 = vunpack.c.0.s8 %v1726
        %v1728 = vlaneseq
        %v1729 = vshrl.u32 %v1728, 7
        %v1730 = vsub.s32 %v1727, %v1729
        %v1731 = vrot.slane %v1721, %v1730
        %v1733 = vunpack.c.l.s4 1966171168
        %v1734 = vunpack.c.0.s8 %v1733
        %v1735 = vlaneseq
        %v1736 = vshrl.u32 %v1735, 7
        %v1737 = vsub.s32 %v1734, %v1736
        %v1738 = vrot.slane %v1722, %v1737
        %v1740 = vunpack.c.l.s4 1966171168
        %v1741 = vunpack.c.0.s8 %v1740
        %v1742 = vlaneseq
        %v1743 = vshrl.u32 %v1742, 7
        %v1744 = vsub.s32 %v1741, %v1743
        %v1745 = vrot.slane %v1723, %v1744
        %v1747 = vunpack.c.l.s4 1966171168
        %v1748 = vunpack.c.0.s8 %v1747
        %v1749 = vlaneseq
        %v1750 = vshrl.u32 %v1749, 7
        %v1751 = vsub.s32 %v1748, %v1750
        %v1752 = vrot.slane %v1724, %v1751
        %v1753 = vcombine.low %v1731, %v1738
        %v1754 = vcombine.low %v1745, %v1752
        %v1756 = vunpack.c.l.s4 1966171168
        %v1757 = vunpack.c.0.s8 %v1756
        %v1758 = vlaneseq
        %v1759 = vshrl.u32 %v1758, 7
        %v1760 = vsub.s32 %v1757, %v1759
        %v1761 = vrot.slane %v1753, %v1760
        %v1763 = vunpack.c.l.s4 1966171168
        %v1764 = vunpack.c.0.s8 %v1763
        %v1765 = vlaneseq
        %v1766 = vshrl.u32 %v1765, 7
        %v1767 = vsub.s32 %v1764, %v1766
        %v1768 = vrot.slane %v1754, %v1767
        %v1769 = vcombine.low %v1761, %v1768
        %v1770 = vcombine.low %v1137, %v1120
        %v1771 = vcombine.low %v1134, %v1136
        %v1772 = vcombine.low %v1161, %v1175
        %v1773 = vcombine.low %v1183, %v1185
        %v1775 = vunpack.c.l.s4 1966171168
        %v1776 = vunpack.c.0.s8 %v1775
        %v1777 = vlaneseq
        %v1778 = vshrl.u32 %v1777, 7
        %v1779 = vsub.s32 %v1776, %v1778
        %v1780 = vrot.slane %v1770, %v1779
        %v1782 = vunpack.c.l.s4 1966171168
        %v1783 = vunpack.c.0.s8 %v1782
        %v1784 = vlaneseq
        %v1785 = vshrl.u32 %v1784, 7
        %v1786 = vsub.s32 %v1783, %v1785
        %v1787 = vrot.slane %v1771, %v1786
        %v1789 = vunpack.c.l.s4 1966171168
        %v1790 = vunpack.c.0.s8 %v1789
        %v1791 = vlaneseq
        %v1792 = vshrl.u32 %v1791, 7
        %v1793 = vsub.s32 %v1790, %v1792
        %v1794 = vrot.slane %v1772, %v1793
        %v1796 = vunpack.c.l.s4 1966171168
        %v1797 = vunpack.c.0.s8 %v1796
        %v1798 = vlaneseq
        %v1799 = vshrl.u32 %v1798, 7
        %v1800 = vsub.s32 %v1797, %v1799
        %v1801 = vrot.slane %v1773, %v1800
        %v1802 = vcombine.low %v1780, %v1787
        %v1803 = vcombine.low %v1794, %v1801
        %v1805 = vunpack.c.l.s4 1966171168
        %v1806 = vunpack.c.0.s8 %v1805
        %v1807 = vlaneseq
        %v1808 = vshrl.u32 %v1807, 7
        %v1809 = vsub.s32 %v1806, %v1808
        %v1810 = vrot.slane %v1802, %v1809
        %v1812 = vunpack.c.l.s4 1966171168
        %v1813 = vunpack.c.0.s8 %v1812
        %v1814 = vlaneseq
        %v1815 = vshrl.u32 %v1814, 7
        %v1816 = vsub.s32 %v1813, %v1815
        %v1817 = vrot.slane %v1803, %v1816
        %v1818 = vcombine.low %v1810, %v1817
        %v1819 = vcombine.low %v1168, %v1182
        %v1820 = vcombine.low %v1184, %v1209
        %v1821 = vcombine.low %v1223, %v1231
        %v1822 = vcombine.low %v1233, %v1216
        %v1824 = vunpack.c.l.s4 1966171168
        %v1825 = vunpack.c.0.s8 %v1824
        %v1826 = vlaneseq
        %v1827 = vshrl.u32 %v1826, 7
        %v1828 = vsub.s32 %v1825, %v1827
        %v1829 = vrot.slane %v1819, %v1828
        %v1831 = vunpack.c.l.s4 1966171168
        %v1832 = vunpack.c.0.s8 %v1831
        %v1833 = vlaneseq
        %v1834 = vshrl.u32 %v1833, 7
        %v1835 = vsub.s32 %v1832, %v1834
        %v1836 = vrot.slane %v1820, %v1835
        %v1838 = vunpack.c.l.s4 1966171168
        %v1839 = vunpack.c.0.s8 %v1838
        %v1840 = vlaneseq
        %v1841 = vshrl.u32 %v1840, 7
        %v1842 = vsub.s32 %v1839, %v1841
        %v1843 = vrot.slane %v1821, %v1842
        %v1845 = vunpack.c.l.s4 1966171168
        %v1846 = vunpack.c.0.s8 %v1845
        %v1847 = vlaneseq
        %v1848 = vshrl.u32 %v1847, 7
        %v1849 = vsub.s32 %v1846, %v1848
        %v1850 = vrot.slane %v1822, %v1849
        %v1851 = vcombine.low %v1829, %v1836
        %v1852 = vcombine.low %v1843, %v1850
        %v1854 = vunpack.c.l.s4 1966171168
        %v1855 = vunpack.c.0.s8 %v1854
        %v1856 = vlaneseq
        %v1857 = vshrl.u32 %v1856, 7
        %v1858 = vsub.s32 %v1855, %v1857
        %v1859 = vrot.slane %v1851, %v1858
        %v1861 = vunpack.c.l.s4 1966171168
        %v1862 = vunpack.c.0.s8 %v1861
        %v1863 = vlaneseq
        %v1864 = vshrl.u32 %v1863, 7
        %v1865 = vsub.s32 %v1862, %v1864
        %v1866 = vrot.slane %v1852, %v1865
        %v1867 = vcombine.low %v1859, %v1866
        %v1868 = vcombine.low %v1230, %v1232
        %v1869 = vcombine.low %v1257, %v1271
        %v1870 = vcombine.low %v1279, %v1281
        %v1871 = vcombine.low %v1264, %v1278
        %v1873 = vunpack.c.l.s4 1966171168
        %v1874 = vunpack.c.0.s8 %v1873
        %v1875 = vlaneseq
        %v1876 = vshrl.u32 %v1875, 7
        %v1877 = vsub.s32 %v1874, %v1876
        %v1878 = vrot.slane %v1868, %v1877
        %v1880 = vunpack.c.l.s4 1966171168
        %v1881 = vunpack.c.0.s8 %v1880
        %v1882 = vlaneseq
        %v1883 = vshrl.u32 %v1882, 7
        %v1884 = vsub.s32 %v1881, %v1883
        %v1885 = vrot.slane %v1869, %v1884
        %v1887 = vunpack.c.l.s4 1966171168
        %v1888 = vunpack.c.0.s8 %v1887
        %v1889 = vlaneseq
        %v1890 = vshrl.u32 %v1889, 7
        %v1891 = vsub.s32 %v1888, %v1890
        %v1892 = vrot.slane %v1870, %v1891
        %v1894 = vunpack.c.l.s4 1966171168
        %v1895 = vunpack.c.0.s8 %v1894
        %v1896 = vlaneseq
        %v1897 = vshrl.u32 %v1896, 7
        %v1898 = vsub.s32 %v1895, %v1897
        %v1899 = vrot.slane %v1871, %v1898
        %v1900 = vcombine.low %v1878, %v1885
        %v1901 = vcombine.low %v1892, %v1899
        %v1903 = vunpack.c.l.s4 1966171168
        %v1904 = vunpack.c.0.s8 %v1903
        %v1905 = vlaneseq
        %v1906 = vshrl.u32 %v1905, 7
        %v1907 = vsub.s32 %v1904, %v1906
        %v1908 = vrot.slane %v1900, %v1907
        %v1910 = vunpack.c.l.s4 1966171168
        %v1911 = vunpack.c.0.s8 %v1910
        %v1912 = vlaneseq
        %v1913 = vshrl.u32 %v1912, 7
        %v1914 = vsub.s32 %v1911, %v1913
        %v1915 = vrot.slane %v1901, %v1914
        %v1916 = vcombine.low %v1908, %v1915
        %v1917 = vcombine.low %v1280, %v1305
        %v1918 = vcombine.low %v1319, %v1327
        %v1919 = vcombine.low %v1329, %v1312
        %v1920 = vcombine.low %v1326, %v1328
        %v1922 = vunpack.c.l.s4 1966171168
        %v1923 = vunpack.c.0.s8 %v1922
        %v1924 = vlaneseq
        %v1925 = vshrl.u32 %v1924, 7
        %v1926 = vsub.s32 %v1923, %v1925
        %v1927 = vrot.slane %v1917, %v1926
        %v1929 = vunpack.c.l.s4 1966171168
        %v1930 = vunpack.c.0.s8 %v1929
        %v1931 = vlaneseq
        %v1932 = vshrl.u32 %v1931, 7
        %v1933 = vsub.s32 %v1930, %v1932
        %v1934 = vrot.slane %v1918, %v1933
        %v1936 = vunpack.c.l.s4 1966171168
        %v1937 = vunpack.c.0.s8 %v1936
        %v1938 = vlaneseq
        %v1939 = vshrl.u32 %v1938, 7
        %v1940 = vsub.s32 %v1937, %v1939
        %v1941 = vrot.slane %v1919, %v1940
        %v1943 = vunpack.c.l.s4 1966171168
        %v1944 = vunpack.c.0.s8 %v1943
        %v1945 = vlaneseq
        %v1946 = vshrl.u32 %v1945, 7
        %v1947 = vsub.s32 %v1944, %v1946
        %v1948 = vrot.slane %v1920, %v1947
        %v1949 = vcombine.low %v1927, %v1934
        %v1950 = vcombine.low %v1941, %v1948
        %v1952 = vunpack.c.l.s4 1966171168
        %v1953 = vunpack.c.0.s8 %v1952
        %v1954 = vlaneseq
        %v1955 = vshrl.u32 %v1954, 7
        %v1956 = vsub.s32 %v1953, %v1955
        %v1957 = vrot.slane %v1949, %v1956
        %v1959 = vunpack.c.l.s4 1966171168
        %v1960 = vunpack.c.0.s8 %v1959
        %v1961 = vlaneseq
        %v1962 = vshrl.u32 %v1961, 7
        %v1963 = vsub.s32 %v1960, %v1962
        %v1964 = vrot.slane %v1950, %v1963
        %v1965 = vcombine.low %v1957, %v1964
        %v1966 = vcombine.low %v1353, %v1367
        %v1967 = vcombine.low %v1375, %v1377
        %v1968 = vcombine.low %v1360, %v1374
        %v1969 = vcombine.low %v1376, %v1401
        %v1971 = vunpack.c.l.s4 1966171168
        %v1972 = vunpack.c.0.s8 %v1971
        %v1973 = vlaneseq
        %v1974 = vshrl.u32 %v1973, 7
        %v1975 = vsub.s32 %v1972, %v1974
        %v1976 = vrot.slane %v1966, %v1975
        %v1978 = vunpack.c.l.s4 1966171168
        %v1979 = vunpack.c.0.s8 %v1978
        %v1980 = vlaneseq
        %v1981 = vshrl.u32 %v1980, 7
        %v1982 = vsub.s32 %v1979, %v1981
        %v1983 = vrot.slane %v1967, %v1982
        %v1985 = vunpack.c.l.s4 1966171168
        %v1986 = vunpack.c.0.s8 %v1985
        %v1987 = vlaneseq
        %v1988 = vshrl.u32 %v1987, 7
        %v1989 = vsub.s32 %v1986, %v1988
        %v1990 = vrot.slane %v1968, %v1989
        %v1992 = vunpack.c.l.s4 1966171168
        %v1993 = vunpack.c.0.s8 %v1992
        %v1994 = vlaneseq
        %v1995 = vshrl.u32 %v1994, 7
        %v1996 = vsub.s32 %v1993, %v1995
        %v1997 = vrot.slane %v1969, %v1996
        %v1998 = vcombine.low %v1976, %v1983
        %v1999 = vcombine.low %v1990, %v1997
        %v2001 = vunpack.c.l.s4 1966171168
        %v2002 = vunpack.c.0.s8 %v2001
        %v2003 = vlaneseq
        %v2004 = vshrl.u32 %v2003, 7
        %v2005 = vsub.s32 %v2002, %v2004
        %v2006 = vrot.slane %v1998, %v2005
        %v2008 = vunpack.c.l.s4 1966171168
        %v2009 = vunpack.c.0.s8 %v2008
        %v2010 = vlaneseq
        %v2011 = vshrl.u32 %v2010, 7
        %v2012 = vsub.s32 %v2009, %v2011
        %v2013 = vrot.slane %v1999, %v2012
        %v2014 = vcombine.low %v2006, %v2013
        %v2015 = vcombine.low %v1415, %v1423
        %v2016 = vcombine.low %v1425, %v1408
        %v2017 = vcombine.low %v1422, %v1424
        %v2018 = vcombine.low %v1449, %v1463
        %v2020 = vunpack.c.l.s4 1966171168
        %v2021 = vunpack.c.0.s8 %v2020
        %v2022 = vlaneseq
        %v2023 = vshrl.u32 %v2022, 7
        %v2024 = vsub.s32 %v2021, %v2023
        %v2025 = vrot.slane %v2015, %v2024
        %v2027 = vunpack.c.l.s4 1966171168
        %v2028 = vunpack.c.0.s8 %v2027
        %v2029 = vlaneseq
        %v2030 = vshrl.u32 %v2029, 7
        %v2031 = vsub.s32 %v2028, %v2030
        %v2032 = vrot.slane %v2016, %v2031
        %v2034 = vunpack.c.l.s4 1966171168
        %v2035 = vunpack.c.0.s8 %v2034
        %v2036 = vlaneseq
        %v2037 = vshrl.u32 %v2036, 7
        %v2038 = vsub.s32 %v2035, %v2037
        %v2039 = vrot.slane %v2017, %v2038
        %v2041 = vunpack.c.l.s4 1966171168
        %v2042 = vunpack.c.0.s8 %v2041
        %v2043 = vlaneseq
        %v2044 = vshrl.u32 %v2043, 7
        %v2045 = vsub.s32 %v2042, %v2044
        %v2046 = vrot.slane %v2018, %v2045
        %v2047 = vcombine.low %v2025, %v2032
        %v2048 = vcombine.low %v2039, %v2046
        %v2050 = vunpack.c.l.s4 1966171168
        %v2051 = vunpack.c.0.s8 %v2050
        %v2052 = vlaneseq
        %v2053 = vshrl.u32 %v2052, 7
        %v2054 = vsub.s32 %v2051, %v2053
        %v2055 = vrot.slane %v2047, %v2054
        %v2057 = vunpack.c.l.s4 1966171168
        %v2058 = vunpack.c.0.s8 %v2057
        %v2059 = vlaneseq
        %v2060 = vshrl.u32 %v2059, 7
        %v2061 = vsub.s32 %v2058, %v2060
        %v2062 = vrot.slane %v2048, %v2061
        %v2063 = vcombine.low %v2055, %v2062
        %v2064 = vcombine.low %v1471, %v1473
        %v2065 = vcombine.low %v1456, %v1470
        %v2066 = vcombine.low %v1472, %v1497
        %v2067 = vcombine.low %v1511, %v1519
        %v2069 = vunpack.c.l.s4 1966171168
        %v2070 = vunpack.c.0.s8 %v2069
        %v2071 = vlaneseq
        %v2072 = vshrl.u32 %v2071, 7
        %v2073 = vsub.s32 %v2070, %v2072
        %v2074 = vrot.slane %v2064, %v2073
        %v2076 = vunpack.c.l.s4 1966171168
        %v2077 = vunpack.c.0.s8 %v2076
        %v2078 = vlaneseq
        %v2079 = vshrl.u32 %v2078, 7
        %v2080 = vsub.s32 %v2077, %v2079
        %v2081 = vrot.slane %v2065, %v2080
        %v2083 = vunpack.c.l.s4 1966171168
        %v2084 = vunpack.c.0.s8 %v2083
        %v2085 = vlaneseq
        %v2086 = vshrl.u32 %v2085, 7
        %v2087 = vsub.s32 %v2084, %v2086
        %v2088 = vrot.slane %v2066, %v2087
        %v2090 = vunpack.c.l.s4 1966171168
        %v2091 = vunpack.c.0.s8 %v2090
        %v2092 = vlaneseq
        %v2093 = vshrl.u32 %v2092, 7
        %v2094 = vsub.s32 %v2091, %v2093
        %v2095 = vrot.slane %v2067, %v2094
        %v2096 = vcombine.low %v2074, %v2081
        %v2097 = vcombine.low %v2088, %v2095
        %v2099 = vunpack.c.l.s4 1966171168
        %v2100 = vunpack.c.0.s8 %v2099
        %v2101 = vlaneseq
        %v2102 = vshrl.u32 %v2101, 7
        %v2103 = vsub.s32 %v2100, %v2102
        %v2104 = vrot.slane %v2096, %v2103
        %v2106 = vunpack.c.l.s4 1966171168
        %v2107 = vunpack.c.0.s8 %v2106
        %v2108 = vlaneseq
        %v2109 = vshrl.u32 %v2108, 7
        %v2110 = vsub.s32 %v2107, %v2109
        %v2111 = vrot.slane %v2097, %v2110
        %v2112 = vcombine.low %v2104, %v2111
        %v2113 = vcombine.low %v1521, %v1504
        %v2114 = vcombine.low %v1518, %v1520
        %v2115 = vcombine.low %v1545, %v1559
        %v2116 = vcombine.low %v1567, %v1569
        %v2118 = vunpack.c.l.s4 1966171168
        %v2119 = vunpack.c.0.s8 %v2118
        %v2120 = vlaneseq
        %v2121 = vshrl.u32 %v2120, 7
        %v2122 = vsub.s32 %v2119, %v2121
        %v2123 = vrot.slane %v2113, %v2122
        %v2125 = vunpack.c.l.s4 1966171168
        %v2126 = vunpack.c.0.s8 %v2125
        %v2127 = vlaneseq
        %v2128 = vshrl.u32 %v2127, 7
        %v2129 = vsub.s32 %v2126, %v2128
        %v2130 = vrot.slane %v2114, %v2129
        %v2132 = vunpack.c.l.s4 1966171168
        %v2133 = vunpack.c.0.s8 %v2132
        %v2134 = vlaneseq
        %v2135 = vshrl.u32 %v2134, 7
        %v2136 = vsub.s32 %v2133, %v2135
        %v2137 = vrot.slane %v2115, %v2136
        %v2139 = vunpack.c.l.s4 1966171168
        %v2140 = vunpack.c.0.s8 %v2139
        %v2141 = vlaneseq
        %v2142 = vshrl.u32 %v2141, 7
        %v2143 = vsub.s32 %v2140, %v2142
        %v2144 = vrot.slane %v2116, %v2143
        %v2145 = vcombine.low %v2123, %v2130
        %v2146 = vcombine.low %v2137, %v2144
        %v2148 = vunpack.c.l.s4 1966171168
        %v2149 = vunpack.c.0.s8 %v2148
        %v2150 = vlaneseq
        %v2151 = vshrl.u32 %v2150, 7
        %v2152 = vsub.s32 %v2149, %v2151
        %v2153 = vrot.slane %v2145, %v2152
        %v2155 = vunpack.c.l.s4 1966171168
        %v2156 = vunpack.c.0.s8 %v2155
        %v2157 = vlaneseq
        %v2158 = vshrl.u32 %v2157, 7
        %v2159 = vsub.s32 %v2156, %v2158
        %v2160 = vrot.slane %v2146, %v2159
        %v2161 = vcombine.low %v2153, %v2160
        %v2162 = vcombine.low %v1552, %v1566
        %v2163 = vcombine.low %v1568, %v1593
        %v2164 = vcombine.low %v1607, %v1615
        %v2165 = vcombine.low %v1617, %v1600
        %v2167 = vunpack.c.l.s4 1966171168
        %v2168 = vunpack.c.0.s8 %v2167
        %v2169 = vlaneseq
        %v2170 = vshrl.u32 %v2169, 7
        %v2171 = vsub.s32 %v2168, %v2170
        %v2172 = vrot.slane %v2162, %v2171
        %v2174 = vunpack.c.l.s4 1966171168
        %v2175 = vunpack.c.0.s8 %v2174
        %v2176 = vlaneseq
        %v2177 = vshrl.u32 %v2176, 7
        %v2178 = vsub.s32 %v2175, %v2177
        %v2179 = vrot.slane %v2163, %v2178
        %v2181 = vunpack.c.l.s4 1966171168
        %v2182 = vunpack.c.0.s8 %v2181
        %v2183 = vlaneseq
        %v2184 = vshrl.u32 %v2183, 7
        %v2185 = vsub.s32 %v2182, %v2184
        %v2186 = vrot.slane %v2164, %v2185
        %v2188 = vunpack.c.l.s4 1966171168
        %v2189 = vunpack.c.0.s8 %v2188
        %v2190 = vlaneseq
        %v2191 = vshrl.u32 %v2190, 7
        %v2192 = vsub.s32 %v2189, %v2191
        %v2193 = vrot.slane %v2165, %v2192
        %v2194 = vcombine.low %v2172, %v2179
        %v2195 = vcombine.low %v2186, %v2193
        %v2197 = vunpack.c.l.s4 1966171168
        %v2198 = vunpack.c.0.s8 %v2197
        %v2199 = vlaneseq
        %v2200 = vshrl.u32 %v2199, 7
        %v2201 = vsub.s32 %v2198, %v2200
        %v2202 = vrot.slane %v2194, %v2201
        %v2204 = vunpack.c.l.s4 1966171168
        %v2205 = vunpack.c.0.s8 %v2204
        %v2206 = vlaneseq
        %v2207 = vshrl.u32 %v2206, 7
        %v2208 = vsub.s32 %v2205, %v2207
        %v2209 = vrot.slane %v2195, %v2208
        %v2210 = vcombine.low %v2202, %v2209
        %v2211 = vcombine.low %v1614, %v1616
        %v2213 = vunpack.c.l.s4 1966171168
        %v2214 = vunpack.c.0.s8 %v2213
        %v2215 = vlaneseq
        %v2216 = vshrl.u32 %v2215, 7
        %v2217 = vsub.s32 %v2214, %v2216
        %v2218 = vrot.slane %v2211, %v2217
        %v2220 = vunpack.c.l.s4 1966171168
        %v2221 = vunpack.c.0.s8 %v2220
        %v2222 = vlaneseq
        %v2223 = vshrl.u32 %v2222, 7
        %v2224 = vsub.s32 %v2221, %v2223
        %v2225 = vrot.slane %v2218, %v2224
        %v2231 = vunpack.c.l.b16 %v1618
        %v2232 = vunpack.c.l.b16 %v1619
        %v2233 = vunpack.c.l.b16 %v1620
        %v2234 = vunpack.c.l.b16 %v1621
        %v2235 = vunpack.c.l.b16 %v1622
        %v2236 = vpack.c.b16 %v2232, %v2231
        %v2237 = vpack.c.b16 %v2234, %v2233
        %v2238 = vpack.c.b16 %v2235, %v2235
        %vm2241 = vcmask 293888
        %v2243 = vsel %vm2241, %v1671, 0
        %v2246 = vsel %vm2241, %v1720, 0
        %v2249 = vsel %vm2241, %v1769, 0
        %v2252 = vsel %vm2241, %v1818, 0
        %v2255 = vsel %vm2241, %v1867, 0
        %v2258 = vsel %vm2241, %v1916, 0
        %v2261 = vsel %vm2241, %v1965, 0
        %v2264 = vsel %vm2241, %v2014, 0
        %v2267 = vsel %vm2241, %v2063, 0
        %v2270 = vsel %vm2241, %v2112, 0
        %v2273 = vsel %vm2241, %v2161, 0
        %v2276 = vsel %vm2241, %v2210, 0
        %v2279 = vsel %vm2241, %v2225, 0
        %vm2281 = vcmask 1041408
        %v2283 = vsel %vm2281, %v2238, 0
        %2285 = vmatprep.subr.bf16.mxu0 0
        %2286 = vmatpush1.bf16.msra.mxu0 %v2236
        %2287 = vmatprep.subr.bf16.mxu0 0
        %2288 = vmatpush1.bf16.msra.mxu0 %v2237
        %2289 = vmatprep.subr.bf16.mxu0 0
        %2290 = vmatpush1.bf16.msra.mxu0 %v2283
        %2291 = vmatprep.subr.bf16.mxu0 0
        %2292 = vmatpush1.bf16.msra.mxu0 0
        %2293 = vmatprep.subr.bf16.mxu0 0
        %2294 = vmatpush1.bf16.msra.mxu0 0
        %2295 = vmatprep.subr.bf16.mxu0 0
        %2296 = vmatpush1.bf16.msra.mxu0 0
        %2297 = vmatprep.subr.bf16.mxu0 0
        %2298 = vmatpush1.bf16.msra.mxu0 0
        %2299 = vmatprep.subr.bf16.mxu0 0
        %2300 = vmatpush1.bf16.msra.mxu0 0
        %2301 = vmatprep.subr.bf16.mxu0 0
        %2302 = vmatpush1.bf16.msra.mxu0 0
        %2303 = vmatprep.subr.bf16.mxu0 0
        %2304 = vmatpush1.bf16.msra.mxu0 0
        %2305 = vmatprep.subr.bf16.mxu0 0
        %2306 = vmatpush1.bf16.msra.mxu0 0
        %2307 = vmatprep.subr.bf16.mxu0 0
        %2308 = vmatpush1.bf16.msra.mxu0 0
        %2309 = vmatprep.subr.bf16.mxu0 0
        %2310 = vmatpush1.bf16.msra.mxu0 0
        %2311 = vmatprep.subr.bf16.mxu0 0
        %2312 = vmatpush1.bf16.msra.mxu0 0
        %2313 = vmatprep.subr.bf16.mxu0 0
        %2314 = vmatpush1.bf16.msra.mxu0 0
        %2315 = vmatprep.subr.bf16.mxu0 0
        %2316 = vmatpush1.bf16.msra.mxu0 0
        %2317 = vmatprep.mubr.bf16.mxu0 0
        %2318 = vmatmul.mubr.bf16.gmra.mrb[0].mxu0 %v2243
        %v2319 = vpop.f32.mrb[0].mxu0
        %v2320 = vadd.f32 0.0, %v2319
        %v2321 = vpop.f32.mrb[0].mxu0
        %v2322 = vpop.f32.mrb[0].mxu0
        %v2323 = vadd.f32 0.0, %v2322
        %v2324 = vpop.f32.mrb[0].mxu0
        %2325 = vmatprep.mubr.bf16.mxu0 0
        %2326 = vmatmul.mubr.bf16.gmra.mrb[0].mxu0 %v2246
        %v2327 = vpop.f32.mrb[0].mxu0
        %v2328 = vadd.f32 0.0, %v2327
        %v2329 = vpop.f32.mrb[0].mxu0
        %v2330 = vpop.f32.mrb[0].mxu0
        %v2331 = vadd.f32 0.0, %v2330
        %v2332 = vpop.f32.mrb[0].mxu0
        %2333 = vmatprep.mubr.bf16.mxu0 0
        %2334 = vmatmul.mubr.bf16.gmra.mrb[0].mxu0 %v2249
        %v2335 = vpop.f32.mrb[0].mxu0
        %v2336 = vadd.f32 0.0, %v2335
        %v2337 = vpop.f32.mrb[0].mxu0
        %v2338 = vpop.f32.mrb[0].mxu0
        %v2339 = vadd.f32 0.0, %v2338
        %v2340 = vpop.f32.mrb[0].mxu0
        %2341 = vmatprep.mubr.bf16.mxu0 0
        %2342 = vmatmul.mubr.bf16.gmra.mrb[0].mxu0 %v2252
        %v2343 = vpop.f32.mrb[0].mxu0
        %v2344 = vadd.f32 0.0, %v2343
        %v2345 = vpop.f32.mrb[0].mxu0
        %v2346 = vpop.f32.mrb[0].mxu0
        %v2347 = vadd.f32 0.0, %v2346
        %v2348 = vpop.f32.mrb[0].mxu0
        %2349 = vmatprep.mubr.bf16.mxu0 0
        %2350 = vmatmul.mubr.bf16.gmra.mrb[0].mxu0 %v2255
        %v2351 = vpop.f32.mrb[0].mxu0
        %v2352 = vadd.f32 0.0, %v2351
        %v2353 = vpop.f32.mrb[0].mxu0
        %v2354 = vpop.f32.mrb[0].mxu0
        %v2355 = vadd.f32 0.0, %v2354
        %v2356 = vpop.f32.mrb[0].mxu0
        %2357 = vmatprep.mubr.bf16.mxu0 0
        %2358 = vmatmul.mubr.bf16.gmra.mrb[0].mxu0 %v2258
        %v2359 = vpop.f32.mrb[0].mxu0
        %v2360 = vadd.f32 0.0, %v2359
        %v2361 = vpop.f32.mrb[0].mxu0
        %v2362 = vpop.f32.mrb[0].mxu0
        %v2363 = vadd.f32 0.0, %v2362
        %v2364 = vpop.f32.mrb[0].mxu0
        %2365 = vmatprep.mubr.bf16.mxu0 0
        %2366 = vmatmul.mubr.bf16.gmra.mrb[0].mxu0 %v2261
        %v2367 = vpop.f32.mrb[0].mxu0
        %v2368 = vadd.f32 0.0, %v2367
        %v2369 = vpop.f32.mrb[0].mxu0
        %v2370 = vpop.f32.mrb[0].mxu0
        %v2371 = vadd.f32 0.0, %v2370
        %v2372 = vpop.f32.mrb[0].mxu0
        %2373 = vmatprep.mubr.bf16.mxu0 0
        %2374 = vmatmul.mubr.bf16.gmra.mrb[0].mxu0 %v2264
        %v2375 = vpop.f32.mrb[0].mxu0
        %v2376 = vadd.f32 0.0, %v2375
        %v2377 = vpop.f32.mrb[0].mxu0
        %v2378 = vpop.f32.mrb[0].mxu0
        %v2379 = vadd.f32 0.0, %v2378
        %v2380 = vpop.f32.mrb[0].mxu0
        %2381 = vmatprep.mubr.bf16.mxu0 0
        %2382 = vmatmul.mubr.bf16.gmra.mrb[0].mxu0 %v2267
        %v2383 = vpop.f32.mrb[0].mxu0
        %v2384 = vadd.f32 0.0, %v2383
        %v2385 = vpop.f32.mrb[0].mxu0
        %v2386 = vpop.f32.mrb[0].mxu0
        %v2387 = vadd.f32 0.0, %v2386
        %v2388 = vpop.f32.mrb[0].mxu0
        %2389 = vmatprep.mubr.bf16.mxu0 0
        %2390 = vmatmul.mubr.bf16.gmra.mrb[0].mxu0 %v2270
        %v2391 = vpop.f32.mrb[0].mxu0
        %v2392 = vadd.f32 0.0, %v2391
        %v2393 = vpop.f32.mrb[0].mxu0
        %v2394 = vpop.f32.mrb[0].mxu0
        %v2395 = vadd.f32 0.0, %v2394
        %v2396 = vpop.f32.mrb[0].mxu0
        %2397 = vmatprep.mubr.bf16.mxu0 0
        %2398 = vmatmul.mubr.bf16.gmra.mrb[0].mxu0 %v2273
        %v2399 = vpop.f32.mrb[0].mxu0
        %v2400 = vadd.f32 0.0, %v2399
        %v2401 = vpop.f32.mrb[0].mxu0
        %v2402 = vpop.f32.mrb[0].mxu0
        %v2403 = vadd.f32 0.0, %v2402
        %v2404 = vpop.f32.mrb[0].mxu0
        %2405 = vmatprep.mubr.bf16.mxu0 0
        %2406 = vmatmul.mubr.bf16.gmra.mrb[0].mxu0 %v2276
        %v2407 = vpop.f32.mrb[0].mxu0
        %v2408 = vadd.f32 0.0, %v2407
        %v2409 = vpop.f32.mrb[0].mxu0
        %v2410 = vpop.f32.mrb[0].mxu0
        %v2411 = vadd.f32 0.0, %v2410
        %v2412 = vpop.f32.mrb[0].mxu0
        %2413 = vmatprep.mubr.bf16.mxu0 0
        %2414 = vmatmul.mubr.bf16.gmra.mrb[0].mxu0 %v2279
        %v2415 = vpop.f32.mrb[0].mxu0
        %v2416 = vadd.f32 0.0, %v2415
        %v2417 = vpop.f32.mrb[0].mxu0
        %v2418 = vpop.f32.mrb[0].mxu0
        %v2419 = vpop.f32.mrb[0].mxu0
        %2420 = vdwg.mxu0
        %v2446 = vcombine.high %v2320, %v2320
        %v2448 = vunpack.c.l.s4 1983009808
        %v2449 = vunpack.c.0.s8 %v2448
        %v2450 = vlaneseq
        %v2451 = vshrl.u32 %v2450, 7
        %v2452 = vsub.s32 %v2449, %v2451
        %v2453 = vrot.slane %v2320, %v2452
        %v2455 = vunpack.c.l.s4 1983009808
        %v2456 = vunpack.c.0.s8 %v2455
        %v2457 = vlaneseq
        %v2458 = vshrl.u32 %v2457, 7
        %v2459 = vsub.s32 %v2456, %v2458
        %v2460 = vrot.slane %v2446, %v2459
        %v2461 = vcombine.high %v2453, %v2453
        %v2462 = vcombine.high %v2460, %v2460
        %v2463 = vcombine.high %v2323, %v2323
        %v2465 = vunpack.c.l.s4 1983009808
        %v2466 = vunpack.c.0.s8 %v2465
        %v2467 = vlaneseq
        %v2468 = vshrl.u32 %v2467, 7
        %v2469 = vsub.s32 %v2466, %v2468
        %v2470 = vrot.slane %v2323, %v2469
        %v2472 = vunpack.c.l.s4 1983009808
        %v2473 = vunpack.c.0.s8 %v2472
        %v2474 = vlaneseq
        %v2475 = vshrl.u32 %v2474, 7
        %v2476 = vsub.s32 %v2473, %v2475
        %v2477 = vrot.slane %v2463, %v2476
        %v2478 = vcombine.high %v2470, %v2470
        %v2479 = vcombine.high %v2477, %v2477
        %v2480 = vcombine.high %v2328, %v2328
        %v2482 = vunpack.c.l.s4 1983009808
        %v2483 = vunpack.c.0.s8 %v2482
        %v2484 = vlaneseq
        %v2485 = vshrl.u32 %v2484, 7
        %v2486 = vsub.s32 %v2483, %v2485
        %v2487 = vrot.slane %v2328, %v2486
        %v2489 = vunpack.c.l.s4 1983009808
        %v2490 = vunpack.c.0.s8 %v2489
        %v2491 = vlaneseq
        %v2492 = vshrl.u32 %v2491, 7
        %v2493 = vsub.s32 %v2490, %v2492
        %v2494 = vrot.slane %v2480, %v2493
        %v2495 = vcombine.high %v2487, %v2487
        %v2496 = vcombine.high %v2494, %v2494
        %v2497 = vcombine.high %v2331, %v2331
        %v2499 = vunpack.c.l.s4 1983009808
        %v2500 = vunpack.c.0.s8 %v2499
        %v2501 = vlaneseq
        %v2502 = vshrl.u32 %v2501, 7
        %v2503 = vsub.s32 %v2500, %v2502
        %v2504 = vrot.slane %v2331, %v2503
        %v2506 = vunpack.c.l.s4 1983009808
        %v2507 = vunpack.c.0.s8 %v2506
        %v2508 = vlaneseq
        %v2509 = vshrl.u32 %v2508, 7
        %v2510 = vsub.s32 %v2507, %v2509
        %v2511 = vrot.slane %v2497, %v2510
        %v2512 = vcombine.high %v2504, %v2504
        %v2513 = vcombine.high %v2511, %v2511
        %v2514 = vcombine.high %v2336, %v2336
        %v2516 = vunpack.c.l.s4 1983009808
        %v2517 = vunpack.c.0.s8 %v2516
        %v2518 = vlaneseq
        %v2519 = vshrl.u32 %v2518, 7
        %v2520 = vsub.s32 %v2517, %v2519
        %v2521 = vrot.slane %v2336, %v2520
        %v2523 = vunpack.c.l.s4 1983009808
        %v2524 = vunpack.c.0.s8 %v2523
        %v2525 = vlaneseq
        %v2526 = vshrl.u32 %v2525, 7
        %v2527 = vsub.s32 %v2524, %v2526
        %v2528 = vrot.slane %v2514, %v2527
        %v2529 = vcombine.high %v2521, %v2521
        %v2530 = vcombine.high %v2528, %v2528
        %v2531 = vcombine.high %v2339, %v2339
        %v2533 = vunpack.c.l.s4 1983009808
        %v2534 = vunpack.c.0.s8 %v2533
        %v2535 = vlaneseq
        %v2536 = vshrl.u32 %v2535, 7
        %v2537 = vsub.s32 %v2534, %v2536
        %v2538 = vrot.slane %v2339, %v2537
        %v2540 = vunpack.c.l.s4 1983009808
        %v2541 = vunpack.c.0.s8 %v2540
        %v2542 = vlaneseq
        %v2543 = vshrl.u32 %v2542, 7
        %v2544 = vsub.s32 %v2541, %v2543
        %v2545 = vrot.slane %v2531, %v2544
        %v2546 = vcombine.high %v2538, %v2538
        %v2547 = vcombine.high %v2545, %v2545
        %v2548 = vcombine.high %v2344, %v2344
        %v2550 = vunpack.c.l.s4 1983009808
        %v2551 = vunpack.c.0.s8 %v2550
        %v2552 = vlaneseq
        %v2553 = vshrl.u32 %v2552, 7
        %v2554 = vsub.s32 %v2551, %v2553
        %v2555 = vrot.slane %v2344, %v2554
        %v2557 = vunpack.c.l.s4 1983009808
        %v2558 = vunpack.c.0.s8 %v2557
        %v2559 = vlaneseq
        %v2560 = vshrl.u32 %v2559, 7
        %v2561 = vsub.s32 %v2558, %v2560
        %v2562 = vrot.slane %v2548, %v2561
        %v2563 = vcombine.high %v2555, %v2555
        %v2564 = vcombine.high %v2562, %v2562
        %v2565 = vcombine.high %v2347, %v2347
        %v2567 = vunpack.c.l.s4 1983009808
        %v2568 = vunpack.c.0.s8 %v2567
        %v2569 = vlaneseq
        %v2570 = vshrl.u32 %v2569, 7
        %v2571 = vsub.s32 %v2568, %v2570
        %v2572 = vrot.slane %v2347, %v2571
        %v2574 = vunpack.c.l.s4 1983009808
        %v2575 = vunpack.c.0.s8 %v2574
        %v2576 = vlaneseq
        %v2577 = vshrl.u32 %v2576, 7
        %v2578 = vsub.s32 %v2575, %v2577
        %v2579 = vrot.slane %v2565, %v2578
        %v2580 = vcombine.high %v2572, %v2572
        %v2581 = vcombine.high %v2579, %v2579
        %v2582 = vcombine.high %v2352, %v2352
        %v2584 = vunpack.c.l.s4 1983009808
        %v2585 = vunpack.c.0.s8 %v2584
        %v2586 = vlaneseq
        %v2587 = vshrl.u32 %v2586, 7
        %v2588 = vsub.s32 %v2585, %v2587
        %v2589 = vrot.slane %v2352, %v2588
        %v2591 = vunpack.c.l.s4 1983009808
        %v2592 = vunpack.c.0.s8 %v2591
        %v2593 = vlaneseq
        %v2594 = vshrl.u32 %v2593, 7
        %v2595 = vsub.s32 %v2592, %v2594
        %v2596 = vrot.slane %v2582, %v2595
        %v2597 = vcombine.high %v2589, %v2589
        %v2598 = vcombine.high %v2596, %v2596
        %v2599 = vcombine.high %v2355, %v2355
        %v2601 = vunpack.c.l.s4 1983009808
        %v2602 = vunpack.c.0.s8 %v2601
        %v2603 = vlaneseq
        %v2604 = vshrl.u32 %v2603, 7
        %v2605 = vsub.s32 %v2602, %v2604
        %v2606 = vrot.slane %v2355, %v2605
        %v2608 = vunpack.c.l.s4 1983009808
        %v2609 = vunpack.c.0.s8 %v2608
        %v2610 = vlaneseq
        %v2611 = vshrl.u32 %v2610, 7
        %v2612 = vsub.s32 %v2609, %v2611
        %v2613 = vrot.slane %v2599, %v2612
        %v2614 = vcombine.high %v2606, %v2606
        %v2615 = vcombine.high %v2613, %v2613
        %v2616 = vcombine.high %v2360, %v2360
        %v2618 = vunpack.c.l.s4 1983009808
        %v2619 = vunpack.c.0.s8 %v2618
        %v2620 = vlaneseq
        %v2621 = vshrl.u32 %v2620, 7
        %v2622 = vsub.s32 %v2619, %v2621
        %v2623 = vrot.slane %v2360, %v2622
        %v2625 = vunpack.c.l.s4 1983009808
        %v2626 = vunpack.c.0.s8 %v2625
        %v2627 = vlaneseq
        %v2628 = vshrl.u32 %v2627, 7
        %v2629 = vsub.s32 %v2626, %v2628
        %v2630 = vrot.slane %v2616, %v2629
        %v2631 = vcombine.high %v2623, %v2623
        %v2632 = vcombine.high %v2630, %v2630
        %v2633 = vcombine.high %v2363, %v2363
        %v2635 = vunpack.c.l.s4 1983009808
        %v2636 = vunpack.c.0.s8 %v2635
        %v2637 = vlaneseq
        %v2638 = vshrl.u32 %v2637, 7
        %v2639 = vsub.s32 %v2636, %v2638
        %v2640 = vrot.slane %v2363, %v2639
        %v2642 = vunpack.c.l.s4 1983009808
        %v2643 = vunpack.c.0.s8 %v2642
        %v2644 = vlaneseq
        %v2645 = vshrl.u32 %v2644, 7
        %v2646 = vsub.s32 %v2643, %v2645
        %v2647 = vrot.slane %v2633, %v2646
        %v2648 = vcombine.high %v2640, %v2640
        %v2649 = vcombine.high %v2647, %v2647
        %v2650 = vcombine.high %v2368, %v2368
        %v2652 = vunpack.c.l.s4 1983009808
        %v2653 = vunpack.c.0.s8 %v2652
        %v2654 = vlaneseq
        %v2655 = vshrl.u32 %v2654, 7
        %v2656 = vsub.s32 %v2653, %v2655
        %v2657 = vrot.slane %v2368, %v2656
        %v2659 = vunpack.c.l.s4 1983009808
        %v2660 = vunpack.c.0.s8 %v2659
        %v2661 = vlaneseq
        %v2662 = vshrl.u32 %v2661, 7
        %v2663 = vsub.s32 %v2660, %v2662
        %v2664 = vrot.slane %v2650, %v2663
        %v2665 = vcombine.high %v2657, %v2657
        %v2666 = vcombine.high %v2664, %v2664
        %v2667 = vcombine.high %v2371, %v2371
        %v2669 = vunpack.c.l.s4 1983009808
        %v2670 = vunpack.c.0.s8 %v2669
        %v2671 = vlaneseq
        %v2672 = vshrl.u32 %v2671, 7
        %v2673 = vsub.s32 %v2670, %v2672
        %v2674 = vrot.slane %v2371, %v2673
        %v2676 = vunpack.c.l.s4 1983009808
        %v2677 = vunpack.c.0.s8 %v2676
        %v2678 = vlaneseq
        %v2679 = vshrl.u32 %v2678, 7
        %v2680 = vsub.s32 %v2677, %v2679
        %v2681 = vrot.slane %v2667, %v2680
        %v2682 = vcombine.high %v2674, %v2674
        %v2683 = vcombine.high %v2681, %v2681
        %v2684 = vcombine.high %v2376, %v2376
        %v2686 = vunpack.c.l.s4 1983009808
        %v2687 = vunpack.c.0.s8 %v2686
        %v2688 = vlaneseq
        %v2689 = vshrl.u32 %v2688, 7
        %v2690 = vsub.s32 %v2687, %v2689
        %v2691 = vrot.slane %v2376, %v2690
        %v2693 = vunpack.c.l.s4 1983009808
        %v2694 = vunpack.c.0.s8 %v2693
        %v2695 = vlaneseq
        %v2696 = vshrl.u32 %v2695, 7
        %v2697 = vsub.s32 %v2694, %v2696
        %v2698 = vrot.slane %v2684, %v2697
        %v2699 = vcombine.high %v2691, %v2691
        %v2700 = vcombine.high %v2698, %v2698
        %v2701 = vcombine.high %v2379, %v2379
        %v2703 = vunpack.c.l.s4 1983009808
        %v2704 = vunpack.c.0.s8 %v2703
        %v2705 = vlaneseq
        %v2706 = vshrl.u32 %v2705, 7
        %v2707 = vsub.s32 %v2704, %v2706
        %v2708 = vrot.slane %v2379, %v2707
        %v2710 = vunpack.c.l.s4 1983009808
        %v2711 = vunpack.c.0.s8 %v2710
        %v2712 = vlaneseq
        %v2713 = vshrl.u32 %v2712, 7
        %v2714 = vsub.s32 %v2711, %v2713
        %v2715 = vrot.slane %v2701, %v2714
        %v2716 = vcombine.high %v2708, %v2708
        %v2717 = vcombine.high %v2715, %v2715
        %v2718 = vcombine.high %v2384, %v2384
        %v2720 = vunpack.c.l.s4 1983009808
        %v2721 = vunpack.c.0.s8 %v2720
        %v2722 = vlaneseq
        %v2723 = vshrl.u32 %v2722, 7
        %v2724 = vsub.s32 %v2721, %v2723
        %v2725 = vrot.slane %v2384, %v2724
        %v2727 = vunpack.c.l.s4 1983009808
        %v2728 = vunpack.c.0.s8 %v2727
        %v2729 = vlaneseq
        %v2730 = vshrl.u32 %v2729, 7
        %v2731 = vsub.s32 %v2728, %v2730
        %v2732 = vrot.slane %v2718, %v2731
        %v2733 = vcombine.high %v2725, %v2725
        %v2734 = vcombine.high %v2732, %v2732
        %v2735 = vcombine.high %v2387, %v2387
        %v2737 = vunpack.c.l.s4 1983009808
        %v2738 = vunpack.c.0.s8 %v2737
        %v2739 = vlaneseq
        %v2740 = vshrl.u32 %v2739, 7
        %v2741 = vsub.s32 %v2738, %v2740
        %v2742 = vrot.slane %v2387, %v2741
        %v2744 = vunpack.c.l.s4 1983009808
        %v2745 = vunpack.c.0.s8 %v2744
        %v2746 = vlaneseq
        %v2747 = vshrl.u32 %v2746, 7
        %v2748 = vsub.s32 %v2745, %v2747
        %v2749 = vrot.slane %v2735, %v2748
        %v2750 = vcombine.high %v2742, %v2742
        %v2751 = vcombine.high %v2749, %v2749
        %v2752 = vcombine.high %v2392, %v2392
        %v2754 = vunpack.c.l.s4 1983009808
        %v2755 = vunpack.c.0.s8 %v2754
        %v2756 = vlaneseq
        %v2757 = vshrl.u32 %v2756, 7
        %v2758 = vsub.s32 %v2755, %v2757
        %v2759 = vrot.slane %v2392, %v2758
        %v2761 = vunpack.c.l.s4 1983009808
        %v2762 = vunpack.c.0.s8 %v2761
        %v2763 = vlaneseq
        %v2764 = vshrl.u32 %v2763, 7
        %v2765 = vsub.s32 %v2762, %v2764
        %v2766 = vrot.slane %v2752, %v2765
        %v2767 = vcombine.high %v2759, %v2759
        %v2768 = vcombine.high %v2766, %v2766
        %v2769 = vcombine.high %v2395, %v2395
        %v2771 = vunpack.c.l.s4 1983009808
        %v2772 = vunpack.c.0.s8 %v2771
        %v2773 = vlaneseq
        %v2774 = vshrl.u32 %v2773, 7
        %v2775 = vsub.s32 %v2772, %v2774
        %v2776 = vrot.slane %v2395, %v2775
        %v2778 = vunpack.c.l.s4 1983009808
        %v2779 = vunpack.c.0.s8 %v2778
        %v2780 = vlaneseq
        %v2781 = vshrl.u32 %v2780, 7
        %v2782 = vsub.s32 %v2779, %v2781
        %v2783 = vrot.slane %v2769, %v2782
        %v2784 = vcombine.high %v2776, %v2776
        %v2785 = vcombine.high %v2783, %v2783
        %v2786 = vcombine.high %v2400, %v2400
        %v2788 = vunpack.c.l.s4 1983009808
        %v2789 = vunpack.c.0.s8 %v2788
        %v2790 = vlaneseq
        %v2791 = vshrl.u32 %v2790, 7
        %v2792 = vsub.s32 %v2789, %v2791
        %v2793 = vrot.slane %v2400, %v2792
        %v2795 = vunpack.c.l.s4 1983009808
        %v2796 = vunpack.c.0.s8 %v2795
        %v2797 = vlaneseq
        %v2798 = vshrl.u32 %v2797, 7
        %v2799 = vsub.s32 %v2796, %v2798
        %v2800 = vrot.slane %v2786, %v2799
        %v2801 = vcombine.high %v2793, %v2793
        %v2802 = vcombine.high %v2800, %v2800
        %v2803 = vcombine.high %v2403, %v2403
        %v2805 = vunpack.c.l.s4 1983009808
        %v2806 = vunpack.c.0.s8 %v2805
        %v2807 = vlaneseq
        %v2808 = vshrl.u32 %v2807, 7
        %v2809 = vsub.s32 %v2806, %v2808
        %v2810 = vrot.slane %v2403, %v2809
        %v2812 = vunpack.c.l.s4 1983009808
        %v2813 = vunpack.c.0.s8 %v2812
        %v2814 = vlaneseq
        %v2815 = vshrl.u32 %v2814, 7
        %v2816 = vsub.s32 %v2813, %v2815
        %v2817 = vrot.slane %v2803, %v2816
        %v2818 = vcombine.high %v2810, %v2810
        %v2819 = vcombine.high %v2817, %v2817
        %v2820 = vcombine.high %v2408, %v2408
        %v2822 = vunpack.c.l.s4 1983009808
        %v2823 = vunpack.c.0.s8 %v2822
        %v2824 = vlaneseq
        %v2825 = vshrl.u32 %v2824, 7
        %v2826 = vsub.s32 %v2823, %v2825
        %v2827 = vrot.slane %v2408, %v2826
        %v2829 = vunpack.c.l.s4 1983009808
        %v2830 = vunpack.c.0.s8 %v2829
        %v2831 = vlaneseq
        %v2832 = vshrl.u32 %v2831, 7
        %v2833 = vsub.s32 %v2830, %v2832
        %v2834 = vrot.slane %v2820, %v2833
        %v2835 = vcombine.high %v2827, %v2827
        %v2836 = vcombine.high %v2834, %v2834
        %v2837 = vcombine.high %v2411, %v2411
        %v2839 = vunpack.c.l.s4 1983009808
        %v2840 = vunpack.c.0.s8 %v2839
        %v2841 = vlaneseq
        %v2842 = vshrl.u32 %v2841, 7
        %v2843 = vsub.s32 %v2840, %v2842
        %v2844 = vrot.slane %v2411, %v2843
        %v2846 = vunpack.c.l.s4 1983009808
        %v2847 = vunpack.c.0.s8 %v2846
        %v2848 = vlaneseq
        %v2849 = vshrl.u32 %v2848, 7
        %v2850 = vsub.s32 %v2847, %v2849
        %v2851 = vrot.slane %v2837, %v2850
        %v2852 = vcombine.high %v2844, %v2844
        %v2853 = vcombine.high %v2851, %v2851
        %v2855 = vunpack.c.l.s4 1983009808
        %v2856 = vunpack.c.0.s8 %v2855
        %v2857 = vlaneseq
        %v2858 = vshrl.u32 %v2857, 7
        %v2859 = vsub.s32 %v2856, %v2858
        %v2860 = vrot.slane %v2416, %v2859
        %v2861 = vcombine.high %v2860, %v2860
        %v2960 = vld [vmem:[#allocation7] sm:$0x1]
        %v2962 = vlaneseq
        %v2963 = vshrl.u32 %v2962, 7
        %v2964 = vsub.s32 0, %v2963
        %v2965 = vrot.slane %v2960, %v2964
        %v2966 = vcombine.high %v2965, %v2965
        %v2968 = vunpack.c.l.s4 1983009808
        %v2969 = vunpack.c.0.s8 %v2968
        %v2970 = vlaneseq
        %v2971 = vshrl.u32 %v2970, 7
        %v2972 = vsub.s32 %v2969, %v2971
        %v2973 = vrot.slane %v2965, %v2972
        %v2975 = vunpack.c.l.s4 1983009808
        %v2976 = vunpack.c.0.s8 %v2975
        %v2977 = vlaneseq
        %v2978 = vshrl.u32 %v2977, 7
        %v2979 = vsub.s32 %v2976, %v2978
        %v2980 = vrot.slane %v2966, %v2979
        %v2981 = vcombine.high %v2973, %v2973
        %v2982 = vcombine.high %v2980, %v2980
        %v2987 = vadd.f32 %v2453, %v2973
        %v2988 = vadd.f32 %v2461, %v2981
        %v2989 = vadd.f32 %v2460, %v2980
        %v2990 = vadd.f32 %v2462, %v2982
        %v2991 = vadd.f32 %v2470, %v2973
        %v2992 = vadd.f32 %v2478, %v2981
        %v2993 = vadd.f32 %v2477, %v2980
        %v2994 = vadd.f32 %v2479, %v2973
        %v2995 = vadd.f32 %v2487, %v2981
        %v2996 = vadd.f32 %v2495, %v2980
        %v2997 = vadd.f32 %v2494, %v2982
        %v2998 = vadd.f32 %v2496, %v2973
        %v2999 = vadd.f32 %v2504, %v2981
        %v3000 = vadd.f32 %v2512, %v2980
        %v3001 = vadd.f32 %v2511, %v2973
        %v3002 = vadd.f32 %v2513, %v2981
        %v3003 = vadd.f32 %v2521, %v2980
        %v3004 = vadd.f32 %v2529, %v2982
        %v3005 = vadd.f32 %v2528, %v2973
        %v3006 = vadd.f32 %v2530, %v2981
        %v3007 = vadd.f32 %v2538, %v2980
        %v3008 = vadd.f32 %v2546, %v2973
        %v3009 = vadd.f32 %v2545, %v2981
        %v3010 = vadd.f32 %v2547, %v2980
        %v3011 = vadd.f32 %v2555, %v2982
        %v3012 = vadd.f32 %v2563, %v2973
        %v3013 = vadd.f32 %v2562, %v2981
        %v3014 = vadd.f32 %v2564, %v2980
        %v3015 = vadd.f32 %v2572, %v2973
        %v3016 = vadd.f32 %v2580, %v2981
        %v3017 = vadd.f32 %v2579, %v2980
        %v3018 = vadd.f32 %v2581, %v2982
        %v3019 = vadd.f32 %v2589, %v2973
        %v3020 = vadd.f32 %v2597, %v2981
        %v3021 = vadd.f32 %v2596, %v2980
        %v3022 = vadd.f32 %v2598, %v2973
        %v3023 = vadd.f32 %v2606, %v2981
        %v3024 = vadd.f32 %v2614, %v2980
        %v3025 = vadd.f32 %v2613, %v2982
        %v3026 = vadd.f32 %v2615, %v2973
        %v3027 = vadd.f32 %v2623, %v2981
        %v3028 = vadd.f32 %v2631, %v2980
        %v3029 = vadd.f32 %v2630, %v2973
        %v3030 = vadd.f32 %v2632, %v2981
        %v3031 = vadd.f32 %v2640, %v2980
        %v3032 = vadd.f32 %v2648, %v2982
        %v3033 = vadd.f32 %v2647, %v2973
        %v3034 = vadd.f32 %v2649, %v2981
        %v3035 = vadd.f32 %v2657, %v2980
        %v3036 = vadd.f32 %v2665, %v2973
        %v3037 = vadd.f32 %v2664, %v2981
        %v3038 = vadd.f32 %v2666, %v2980
        %v3039 = vadd.f32 %v2674, %v2982
        %v3040 = vadd.f32 %v2682, %v2973
        %v3041 = vadd.f32 %v2681, %v2981
        %v3042 = vadd.f32 %v2683, %v2980
        %v3043 = vadd.f32 %v2691, %v2973
        %v3044 = vadd.f32 %v2699, %v2981
        %v3045 = vadd.f32 %v2698, %v2980
        %v3046 = vadd.f32 %v2700, %v2982
        %v3047 = vadd.f32 %v2708, %v2973
        %v3048 = vadd.f32 %v2716, %v2981
        %v3049 = vadd.f32 %v2715, %v2980
        %v3050 = vadd.f32 %v2717, %v2973
        %v3051 = vadd.f32 %v2725, %v2981
        %v3052 = vadd.f32 %v2733, %v2980
        %v3053 = vadd.f32 %v2732, %v2982
        %v3054 = vadd.f32 %v2734, %v2973
        %v3055 = vadd.f32 %v2742, %v2981
        %v3056 = vadd.f32 %v2750, %v2980
        %v3057 = vadd.f32 %v2749, %v2973
        %v3058 = vadd.f32 %v2751, %v2981
        %v3059 = vadd.f32 %v2759, %v2980
        %v3060 = vadd.f32 %v2767, %v2982
        %v3061 = vadd.f32 %v2766, %v2973
        %v3062 = vadd.f32 %v2768, %v2981
        %v3063 = vadd.f32 %v2776, %v2980
        %v3064 = vadd.f32 %v2784, %v2973
        %v3065 = vadd.f32 %v2783, %v2981
        %v3066 = vadd.f32 %v2785, %v2980
        %v3067 = vadd.f32 %v2793, %v2982
        %v3068 = vadd.f32 %v2801, %v2973
        %v3069 = vadd.f32 %v2800, %v2981
        %v3070 = vadd.f32 %v2802, %v2980
        %v3071 = vadd.f32 %v2810, %v2973
        %v3072 = vadd.f32 %v2818, %v2981
        %v3073 = vadd.f32 %v2817, %v2980
        %v3074 = vadd.f32 %v2819, %v2982
        %v3075 = vadd.f32 %v2827, %v2973
        %v3076 = vadd.f32 %v2835, %v2981
        %v3077 = vadd.f32 %v2834, %v2980
        %v3078 = vadd.f32 %v2836, %v2973
        %v3079 = vadd.f32 %v2844, %v2981
        %v3080 = vadd.f32 %v2852, %v2980
        %v3081 = vadd.f32 %v2851, %v2982
        %v3082 = vadd.f32 %v2853, %v2973
        %v3083 = vadd.f32 %v2860, %v2981
        %v3084 = vadd.f32 %v2861, %v2980
        %v3085 = vmax.f32 %v2987, 0.0
        %v3086 = vmax.f32 %v2988, 0.0
        %v3087 = vmax.f32 %v2989, 0.0
        %v3088 = vmax.f32 %v2990, 0.0
        %v3089 = vmax.f32 %v2991, 0.0
        %v3090 = vmax.f32 %v2992, 0.0
        %v3091 = vmax.f32 %v2993, 0.0
        %v3092 = vmax.f32 %v2994, 0.0
        %v3093 = vmax.f32 %v2995, 0.0
        %v3094 = vmax.f32 %v2996, 0.0
        %v3095 = vmax.f32 %v2997, 0.0
        %v3096 = vmax.f32 %v2998, 0.0
        %v3097 = vmax.f32 %v2999, 0.0
        %v3098 = vmax.f32 %v3000, 0.0
        %v3099 = vmax.f32 %v3001, 0.0
        %v3100 = vmax.f32 %v3002, 0.0
        %v3101 = vmax.f32 %v3003, 0.0
        %v3102 = vmax.f32 %v3004, 0.0
        %v3103 = vmax.f32 %v3005, 0.0
        %v3104 = vmax.f32 %v3006, 0.0
        %v3105 = vmax.f32 %v3007, 0.0
        %v3106 = vmax.f32 %v3008, 0.0
        %v3107 = vmax.f32 %v3009, 0.0
        %v3108 = vmax.f32 %v3010, 0.0
        %v3109 = vmax.f32 %v3011, 0.0
        %v3110 = vmax.f32 %v3012, 0.0
        %v3111 = vmax.f32 %v3013, 0.0
        %v3112 = vmax.f32 %v3014, 0.0
        %v3113 = vmax.f32 %v3015, 0.0
        %v3114 = vmax.f32 %v3016, 0.0
        %v3115 = vmax.f32 %v3017, 0.0
        %v3116 = vmax.f32 %v3018, 0.0
        %v3117 = vmax.f32 %v3019, 0.0
        %v3118 = vmax.f32 %v3020, 0.0
        %v3119 = vmax.f32 %v3021, 0.0
        %v3120 = vmax.f32 %v3022, 0.0
        %v3121 = vmax.f32 %v3023, 0.0
        %v3122 = vmax.f32 %v3024, 0.0
        %v3123 = vmax.f32 %v3025, 0.0
        %v3124 = vmax.f32 %v3026, 0.0
        %v3125 = vmax.f32 %v3027, 0.0
        %v3126 = vmax.f32 %v3028, 0.0
        %v3127 = vmax.f32 %v3029, 0.0
        %v3128 = vmax.f32 %v3030, 0.0
        %v3129 = vmax.f32 %v3031, 0.0
        %v3130 = vmax.f32 %v3032, 0.0
        %v3131 = vmax.f32 %v3033, 0.0
        %v3132 = vmax.f32 %v3034, 0.0
        %v3133 = vmax.f32 %v3035, 0.0
        %v3134 = vmax.f32 %v3036, 0.0
        %v3135 = vmax.f32 %v3037, 0.0
        %v3136 = vmax.f32 %v3038, 0.0
        %v3137 = vmax.f32 %v3039, 0.0
        %v3138 = vmax.f32 %v3040, 0.0
        %v3139 = vmax.f32 %v3041, 0.0
        %v3140 = vmax.f32 %v3042, 0.0
        %v3141 = vmax.f32 %v3043, 0.0
        %v3142 = vmax.f32 %v3044, 0.0
        %v3143 = vmax.f32 %v3045, 0.0
        %v3144 = vmax.f32 %v3046, 0.0
        %v3145 = vmax.f32 %v3047, 0.0
        %v3146 = vmax.f32 %v3048, 0.0
        %v3147 = vmax.f32 %v3049, 0.0
        %v3148 = vmax.f32 %v3050, 0.0
        %v3149 = vmax.f32 %v3051, 0.0
        %v3150 = vmax.f32 %v3052, 0.0
        %v3151 = vmax.f32 %v3053, 0.0
        %v3152 = vmax.f32 %v3054, 0.0
        %v3153 = vmax.f32 %v3055, 0.0
        %v3154 = vmax.f32 %v3056, 0.0
        %v3155 = vmax.f32 %v3057, 0.0
        %v3156 = vmax.f32 %v3058, 0.0
        %v3157 = vmax.f32 %v3059, 0.0
        %v3158 = vmax.f32 %v3060, 0.0
        %v3159 = vmax.f32 %v3061, 0.0
        %v3160 = vmax.f32 %v3062, 0.0
        %v3161 = vmax.f32 %v3063, 0.0
        %v3162 = vmax.f32 %v3064, 0.0
        %v3163 = vmax.f32 %v3065, 0.0
        %v3164 = vmax.f32 %v3066, 0.0
        %v3165 = vmax.f32 %v3067, 0.0
        %v3166 = vmax.f32 %v3068, 0.0
        %v3167 = vmax.f32 %v3069, 0.0
        %v3168 = vmax.f32 %v3070, 0.0
        %v3169 = vmax.f32 %v3071, 0.0
        %v3170 = vmax.f32 %v3072, 0.0
        %v3171 = vmax.f32 %v3073, 0.0
        %v3172 = vmax.f32 %v3074, 0.0
        %v3173 = vmax.f32 %v3075, 0.0
        %v3174 = vmax.f32 %v3076, 0.0
        %v3175 = vmax.f32 %v3077, 0.0
        %v3176 = vmax.f32 %v3078, 0.0
        %v3177 = vmax.f32 %v3079, 0.0
        %v3178 = vmax.f32 %v3080, 0.0
        %v3179 = vmax.f32 %v3081, 0.0
        %v3180 = vmax.f32 %v3082, 0.0
        %v3181 = vmax.f32 %v3083, 0.0
        %v3182 = vmax.f32 %v3084, 0.0
        %v3183 = vmax.f32 %v3085, %v3092
        %v3184 = vmax.f32 %v3086, %v3093
        %v3185 = vmax.f32 %v3087, %v3094
        %v3186 = vmax.f32 %v3088, %v3095
        %v3187 = vmax.f32 %v3089, %v3096
        %v3188 = vmax.f32 %v3090, %v3097
        %v3189 = vmax.f32 %v3091, %v3098
        %v3190 = vmax.f32 %v3099, %v3106
        %v3191 = vmax.f32 %v3100, %v3107
        %v3192 = vmax.f32 %v3101, %v3108
        %v3193 = vmax.f32 %v3102, %v3109
        %v3194 = vmax.f32 %v3103, %v3110
        %v3195 = vmax.f32 %v3104, %v3111
        %v3196 = vmax.f32 %v3105, %v3112
        %v3197 = vmax.f32 %v3113, %v3120
        %v3198 = vmax.f32 %v3114, %v3121
        %v3199 = vmax.f32 %v3115, %v3122
        %v3200 = vmax.f32 %v3116, %v3123
        %v3201 = vmax.f32 %v3117, %v3124
        %v3202 = vmax.f32 %v3118, %v3125
        %v3203 = vmax.f32 %v3119, %v3126
        %v3204 = vmax.f32 %v3127, %v3134
        %v3205 = vmax.f32 %v3128, %v3135
        %v3206 = vmax.f32 %v3129, %v3136
        %v3207 = vmax.f32 %v3130, %v3137
        %v3208 = vmax.f32 %v3131, %v3138
        %v3209 = vmax.f32 %v3132, %v3139
        %v3210 = vmax.f32 %v3133, %v3140
        %v3211 = vmax.f32 %v3141, %v3148
        %v3212 = vmax.f32 %v3142, %v3149
        %v3213 = vmax.f32 %v3143, %v3150
        %v3214 = vmax.f32 %v3144, %v3151
        %v3215 = vmax.f32 %v3145, %v3152
        %v3216 = vmax.f32 %v3146, %v3153
        %v3217 = vmax.f32 %v3147, %v3154
        %v3218 = vmax.f32 %v3155, %v3162
        %v3219 = vmax.f32 %v3156, %v3163
        %v3220 = vmax.f32 %v3157, %v3164
        %v3221 = vmax.f32 %v3158, %v3165
        %v3222 = vmax.f32 %v3159, %v3166
        %v3223 = vmax.f32 %v3160, %v3167
        %v3224 = vmax.f32 %v3161, %v3168
        %v3225 = vmax.f32 %v3169, %v3176
        %v3226 = vmax.f32 %v3170, %v3177
        %v3227 = vmax.f32 %v3171, %v3178
        %v3228 = vmax.f32 %v3172, %v3179
        %v3229 = vmax.f32 %v3173, %v3180
        %v3230 = vmax.f32 %v3174, %v3181
        %v3231 = vmax.f32 %v3175, %v3182
        %v3281 = vrot.slane %v3183, 7
        %v3282 = vrot.slane %v3281, 2
        %v3283 = vrot.slane %v3184, 7
        %v3284 = vrot.slane %v3283, 2
        %v3285 = vrot.slane %v3185, 7
        %v3286 = vrot.slane %v3285, 2
        %v3287 = vrot.slane %v3186, 7
        %v3288 = vrot.slane %v3287, 2
        %v3289 = vrot.slane %v3187, 7
        %v3290 = vrot.slane %v3289, 2
        %v3291 = vrot.slane %v3188, 7
        %v3292 = vrot.slane %v3291, 2
        %v3293 = vrot.slane %v3189, 7
        %v3294 = vrot.slane %v3293, 2
        %v3295 = vrot.slane %v3190, 7
        %v3296 = vrot.slane %v3295, 2
        %v3297 = vrot.slane %v3191, 7
        %v3298 = vrot.slane %v3297, 2
        %v3299 = vrot.slane %v3192, 7
        %v3300 = vrot.slane %v3299, 2
        %v3301 = vrot.slane %v3193, 7
        %v3302 = vrot.slane %v3301, 2
        %v3303 = vrot.slane %v3194, 7
        %v3304 = vrot.slane %v3303, 2
        %v3305 = vrot.slane %v3195, 7
        %v3306 = vrot.slane %v3305, 2
        %v3307 = vrot.slane %v3196, 7
        %v3308 = vrot.slane %v3307, 2
        %v3309 = vrot.slane %v3197, 7
        %v3310 = vrot.slane %v3309, 2
        %v3311 = vrot.slane %v3198, 7
        %v3312 = vrot.slane %v3311, 2
        %v3313 = vrot.slane %v3199, 7
        %v3314 = vrot.slane %v3313, 2
        %v3315 = vrot.slane %v3200, 7
        %v3316 = vrot.slane %v3315, 2
        %v3317 = vrot.slane %v3201, 7
        %v3318 = vrot.slane %v3317, 2
        %v3319 = vrot.slane %v3202, 7
        %v3320 = vrot.slane %v3319, 2
        %v3321 = vrot.slane %v3203, 7
        %v3322 = vrot.slane %v3321, 2
        %v3323 = vrot.slane %v3204, 7
        %v3324 = vrot.slane %v3323, 2
        %v3325 = vrot.slane %v3205, 7
        %v3326 = vrot.slane %v3325, 2
        %v3327 = vrot.slane %v3206, 7
        %v3328 = vrot.slane %v3327, 2
        %v3329 = vrot.slane %v3207, 7
        %v3330 = vrot.slane %v3329, 2
        %v3331 = vrot.slane %v3208, 7
        %v3332 = vrot.slane %v3331, 2
        %v3333 = vrot.slane %v3209, 7
        %v3334 = vrot.slane %v3333, 2
        %v3335 = vrot.slane %v3210, 7
        %v3336 = vrot.slane %v3335, 2
        %v3337 = vrot.slane %v3211, 7
        %v3338 = vrot.slane %v3337, 2
        %v3339 = vrot.slane %v3212, 7
        %v3340 = vrot.slane %v3339, 2
        %v3341 = vrot.slane %v3213, 7
        %v3342 = vrot.slane %v3341, 2
        %v3343 = vrot.slane %v3214, 7
        %v3344 = vrot.slane %v3343, 2
        %v3345 = vrot.slane %v3215, 7
        %v3346 = vrot.slane %v3345, 2
        %v3347 = vrot.slane %v3216, 7
        %v3348 = vrot.slane %v3347, 2
        %v3349 = vrot.slane %v3217, 7
        %v3350 = vrot.slane %v3349, 2
        %v3351 = vrot.slane %v3218, 7
        %v3352 = vrot.slane %v3351, 2
        %v3353 = vrot.slane %v3219, 7
        %v3354 = vrot.slane %v3353, 2
        %v3355 = vrot.slane %v3220, 7
        %v3356 = vrot.slane %v3355, 2
        %v3357 = vrot.slane %v3221, 7
        %v3358 = vrot.slane %v3357, 2
        %v3359 = vrot.slane %v3222, 7
        %v3360 = vrot.slane %v3359, 2
        %v3361 = vrot.slane %v3223, 7
        %v3362 = vrot.slane %v3361, 2
        %v3363 = vrot.slane %v3224, 7
        %v3364 = vrot.slane %v3363, 2
        %v3365 = vrot.slane %v3225, 7
        %v3366 = vrot.slane %v3365, 2
        %v3367 = vrot.slane %v3226, 7
        %v3368 = vrot.slane %v3367, 2
        %v3369 = vrot.slane %v3227, 7
        %v3370 = vrot.slane %v3369, 2
        %v3371 = vrot.slane %v3228, 7
        %v3372 = vrot.slane %v3371, 2
        %v3373 = vrot.slane %v3229, 7
        %v3374 = vrot.slane %v3373, 2
        %v3375 = vrot.slane %v3230, 7
        %v3376 = vrot.slane %v3375, 2
        %v3377 = vrot.slane %v3231, 7
        %v3378 = vrot.slane %v3377, 2
        %v3428 = vmax.f32 %v3183, %v3282
        %v3429 = vmax.f32 %v3184, %v3284
        %v3430 = vmax.f32 %v3185, %v3286
        %v3431 = vmax.f32 %v3186, %v3288
        %v3432 = vmax.f32 %v3187, %v3290
        %v3433 = vmax.f32 %v3188, %v3292
        %v3434 = vmax.f32 %v3189, %v3294
        %v3435 = vmax.f32 %v3190, %v3296
        %v3436 = vmax.f32 %v3191, %v3298
        %v3437 = vmax.f32 %v3192, %v3300
        %v3438 = vmax.f32 %v3193, %v3302
        %v3439 = vmax.f32 %v3194, %v3304
        %v3440 = vmax.f32 %v3195, %v3306
        %v3441 = vmax.f32 %v3196, %v3308
        %v3442 = vmax.f32 %v3197, %v3310
        %v3443 = vmax.f32 %v3198, %v3312
        %v3444 = vmax.f32 %v3199, %v3314
        %v3445 = vmax.f32 %v3200, %v3316
        %v3446 = vmax.f32 %v3201, %v3318
        %v3447 = vmax.f32 %v3202, %v3320
        %v3448 = vmax.f32 %v3203, %v3322
        %v3449 = vmax.f32 %v3204, %v3324
        %v3450 = vmax.f32 %v3205, %v3326
        %v3451 = vmax.f32 %v3206, %v3328
        %v3452 = vmax.f32 %v3207, %v3330
        %v3453 = vmax.f32 %v3208, %v3332
        %v3454 = vmax.f32 %v3209, %v3334
        %v3455 = vmax.f32 %v3210, %v3336
        %v3456 = vmax.f32 %v3211, %v3338
        %v3457 = vmax.f32 %v3212, %v3340
        %v3458 = vmax.f32 %v3213, %v3342
        %v3459 = vmax.f32 %v3214, %v3344
        %v3460 = vmax.f32 %v3215, %v3346
        %v3461 = vmax.f32 %v3216, %v3348
        %v3462 = vmax.f32 %v3217, %v3350
        %v3463 = vmax.f32 %v3218, %v3352
        %v3464 = vmax.f32 %v3219, %v3354
        %v3465 = vmax.f32 %v3220, %v3356
        %v3466 = vmax.f32 %v3221, %v3358
        %v3467 = vmax.f32 %v3222, %v3360
        %v3468 = vmax.f32 %v3223, %v3362
        %v3469 = vmax.f32 %v3224, %v3364
        %v3470 = vmax.f32 %v3225, %v3366
        %v3471 = vmax.f32 %v3226, %v3368
        %v3472 = vmax.f32 %v3227, %v3370
        %v3473 = vmax.f32 %v3228, %v3372
        %v3474 = vmax.f32 %v3229, %v3374
        %v3475 = vmax.f32 %v3230, %v3376
        %v3476 = vmax.f32 %v3231, %v3378
        %v3477 = vpack.c.bf16 %v3428, %v3428
        %v3478 = vpack.c.bf16 %v3429, %v3429
        %v3479 = vpack.c.bf16 %v3430, %v3430
        %v3480 = vpack.c.bf16 %v3431, %v3431
        %v3481 = vpack.c.bf16 %v3432, %v3432
        %v3482 = vpack.c.bf16 %v3433, %v3433
        %v3483 = vpack.c.bf16 %v3434, %v3434
        %v3484 = vpack.c.bf16 %v3435, %v3435
        %v3485 = vpack.c.bf16 %v3436, %v3436
        %v3486 = vpack.c.bf16 %v3437, %v3437
        %v3487 = vpack.c.bf16 %v3438, %v3438
        %v3488 = vpack.c.bf16 %v3439, %v3439
        %v3489 = vpack.c.bf16 %v3440, %v3440
        %v3490 = vpack.c.bf16 %v3441, %v3441
        %v3491 = vpack.c.bf16 %v3442, %v3442
        %v3492 = vpack.c.bf16 %v3443, %v3443
        %v3493 = vpack.c.bf16 %v3444, %v3444
        %v3494 = vpack.c.bf16 %v3445, %v3445
        %v3495 = vpack.c.bf16 %v3446, %v3446
        %v3496 = vpack.c.bf16 %v3447, %v3447
        %v3497 = vpack.c.bf16 %v3448, %v3448
        %v3498 = vpack.c.bf16 %v3449, %v3449
        %v3499 = vpack.c.bf16 %v3450, %v3450
        %v3500 = vpack.c.bf16 %v3451, %v3451
        %v3501 = vpack.c.bf16 %v3452, %v3452
        %v3502 = vpack.c.bf16 %v3453, %v3453
        %v3503 = vpack.c.bf16 %v3454, %v3454
        %v3504 = vpack.c.bf16 %v3455, %v3455
        %v3505 = vpack.c.bf16 %v3456, %v3456
        %v3506 = vpack.c.bf16 %v3457, %v3457
        %v3507 = vpack.c.bf16 %v3458, %v3458
        %v3508 = vpack.c.bf16 %v3459, %v3459
        %v3509 = vpack.c.bf16 %v3460, %v3460
        %v3510 = vpack.c.bf16 %v3461, %v3461
        %v3511 = vpack.c.bf16 %v3462, %v3462
        %v3512 = vpack.c.bf16 %v3463, %v3463
        %v3513 = vpack.c.bf16 %v3464, %v3464
        %v3514 = vpack.c.bf16 %v3465, %v3465
        %v3515 = vpack.c.bf16 %v3466, %v3466
        %v3516 = vpack.c.bf16 %v3467, %v3467
        %v3517 = vpack.c.bf16 %v3468, %v3468
        %v3518 = vpack.c.bf16 %v3469, %v3469
        %v3519 = vpack.c.bf16 %v3470, %v3470
        %v3520 = vpack.c.bf16 %v3471, %v3471
        %v3521 = vpack.c.bf16 %v3472, %v3472
        %v3522 = vpack.c.bf16 %v3473, %v3473
        %v3523 = vpack.c.bf16 %v3474, %v3474
        %v3524 = vpack.c.bf16 %v3475, %v3475
        %v3525 = vpack.c.bf16 %v3476, %v3476
        %v3575 = vunpack.c.l.b16 %v3477
        %v3576 = vunpack.c.l.b16 %v3478
        %v3577 = vunpack.c.l.b16 %v3479
        %v3578 = vunpack.c.l.b16 %v3480
        %v3579 = vunpack.c.l.b16 %v3481
        %v3580 = vunpack.c.l.b16 %v3482
        %v3581 = vunpack.c.l.b16 %v3483
        %v3582 = vunpack.c.l.b16 %v3484
        %v3583 = vunpack.c.l.b16 %v3485
        %v3584 = vunpack.c.l.b16 %v3486
        %v3585 = vunpack.c.l.b16 %v3487
        %v3586 = vunpack.c.l.b16 %v3488
        %v3587 = vunpack.c.l.b16 %v3489
        %v3588 = vunpack.c.l.b16 %v3490
        %v3589 = vunpack.c.l.b16 %v3491
        %v3590 = vunpack.c.l.b16 %v3492
        %v3591 = vunpack.c.l.b16 %v3493
        %v3592 = vunpack.c.l.b16 %v3494
        %v3593 = vunpack.c.l.b16 %v3495
        %v3594 = vunpack.c.l.b16 %v3496
        %v3595 = vunpack.c.l.b16 %v3497
        %v3596 = vunpack.c.l.b16 %v3498
        %v3597 = vunpack.c.l.b16 %v3499
        %v3598 = vunpack.c.l.b16 %v3500
        %v3599 = vunpack.c.l.b16 %v3501
        %v3600 = vunpack.c.l.b16 %v3502
        %v3601 = vunpack.c.l.b16 %v3503
        %v3602 = vunpack.c.l.b16 %v3504
        %v3603 = vunpack.c.l.b16 %v3505
        %v3604 = vunpack.c.l.b16 %v3506
        %v3605 = vunpack.c.l.b16 %v3507
        %v3606 = vunpack.c.l.b16 %v3508
        %v3607 = vunpack.c.l.b16 %v3509
        %v3608 = vunpack.c.l.b16 %v3510
        %v3609 = vunpack.c.l.b16 %v3511
        %v3610 = vunpack.c.l.b16 %v3512
        %v3611 = vunpack.c.l.b16 %v3513
        %v3612 = vunpack.c.l.b16 %v3514
        %v3613 = vunpack.c.l.b16 %v3515
        %v3614 = vunpack.c.l.b16 %v3516
        %v3615 = vunpack.c.l.b16 %v3517
        %v3616 = vunpack.c.l.b16 %v3518
        %v3617 = vunpack.c.l.b16 %v3519
        %v3618 = vunpack.c.l.b16 %v3520
        %v3619 = vunpack.c.l.b16 %v3521
        %v3620 = vunpack.c.l.b16 %v3522
        %v3621 = vunpack.c.l.b16 %v3523
        %v3622 = vunpack.c.l.b16 %v3524
        %v3623 = vunpack.c.l.b16 %v3525
        %v3624 = vpack.c.b16 %v3575, %v3575
        %v3625 = vpack.c.b16 %v3576, %v3576
        %v3626 = vpack.c.b16 %v3577, %v3577
        %v3627 = vpack.c.b16 %v3578, %v3578
        %v3628 = vpack.c.b16 %v3579, %v3579
        %v3629 = vpack.c.b16 %v3580, %v3580
        %v3630 = vpack.c.b16 %v3581, %v3581
        %v3631 = vpack.c.b16 %v3582, %v3582
        %v3632 = vpack.c.b16 %v3583, %v3583
        %v3633 = vpack.c.b16 %v3584, %v3584
        %v3634 = vpack.c.b16 %v3585, %v3585
        %v3635 = vpack.c.b16 %v3586, %v3586
        %v3636 = vpack.c.b16 %v3587, %v3587
        %v3637 = vpack.c.b16 %v3588, %v3588
        %v3638 = vpack.c.b16 %v3589, %v3589
        %v3639 = vpack.c.b16 %v3590, %v3590
        %v3640 = vpack.c.b16 %v3591, %v3591
        %v3641 = vpack.c.b16 %v3592, %v3592
        %v3642 = vpack.c.b16 %v3593, %v3593
        %v3643 = vpack.c.b16 %v3594, %v3594
        %v3644 = vpack.c.b16 %v3595, %v3595
        %v3645 = vpack.c.b16 %v3596, %v3596
        %v3646 = vpack.c.b16 %v3597, %v3597
        %v3647 = vpack.c.b16 %v3598, %v3598
        %v3648 = vpack.c.b16 %v3599, %v3599
        %v3649 = vpack.c.b16 %v3600, %v3600
        %v3650 = vpack.c.b16 %v3601, %v3601
        %v3651 = vpack.c.b16 %v3602, %v3602
        %v3652 = vpack.c.b16 %v3603, %v3603
        %v3653 = vpack.c.b16 %v3604, %v3604
        %v3654 = vpack.c.b16 %v3605, %v3605
        %v3655 = vpack.c.b16 %v3606, %v3606
        %v3656 = vpack.c.b16 %v3607, %v3607
        %v3657 = vpack.c.b16 %v3608, %v3608
        %v3658 = vpack.c.b16 %v3609, %v3609
        %v3659 = vpack.c.b16 %v3610, %v3610
        %v3660 = vpack.c.b16 %v3611, %v3611
        %v3661 = vpack.c.b16 %v3612, %v3612
        %v3662 = vpack.c.b16 %v3613, %v3613
        %v3663 = vpack.c.b16 %v3614, %v3614
        %v3664 = vpack.c.b16 %v3615, %v3615
        %v3665 = vpack.c.b16 %v3616, %v3616
        %v3666 = vpack.c.b16 %v3617, %v3617
        %v3667 = vpack.c.b16 %v3618, %v3618
        %v3668 = vpack.c.b16 %v3619, %v3619
        %v3669 = vpack.c.b16 %v3620, %v3620
        %v3670 = vpack.c.b16 %v3621, %v3621
        %v3671 = vpack.c.b16 %v3622, %v3622
        %v3672 = vpack.c.b16 %v3623, %v3623
        %v3673 = vunpack.c.l.b16 %v3624
        %v3674 = vunpack.c.l.b16 %v3625
        %v3675 = vunpack.c.l.b16 %v3626
        %v3676 = vunpack.c.l.b16 %v3627
        %v3677 = vunpack.c.l.b16 %v3628
        %v3678 = vunpack.c.l.b16 %v3629
        %v3679 = vunpack.c.l.b16 %v3630
        %v3680 = vunpack.c.l.b16 %v3631
        %v3681 = vunpack.c.l.b16 %v3632
        %v3682 = vunpack.c.l.b16 %v3633
        %v3683 = vunpack.c.l.b16 %v3634
        %v3684 = vunpack.c.l.b16 %v3635
        %v3685 = vunpack.c.l.b16 %v3636
        %v3686 = vunpack.c.l.b16 %v3637
        %v3687 = vunpack.c.l.b16 %v3638
        %v3688 = vunpack.c.l.b16 %v3639
        %v3689 = vunpack.c.l.b16 %v3640
        %v3690 = vunpack.c.l.b16 %v3641
        %v3691 = vunpack.c.l.b16 %v3642
        %v3692 = vunpack.c.l.b16 %v3643
        %v3693 = vunpack.c.l.b16 %v3644
        %v3694 = vunpack.c.l.b16 %v3645
        %v3695 = vunpack.c.l.b16 %v3646
        %v3696 = vunpack.c.l.b16 %v3647
        %v3697 = vunpack.c.l.b16 %v3648
        %v3698 = vunpack.c.l.b16 %v3649
        %v3699 = vunpack.c.l.b16 %v3650
        %v3700 = vunpack.c.l.b16 %v3651
        %v3701 = vunpack.c.l.b16 %v3652
        %v3702 = vunpack.c.l.b16 %v3653
        %v3703 = vunpack.c.l.b16 %v3654
        %v3704 = vunpack.c.l.b16 %v3655
        %v3705 = vunpack.c.l.b16 %v3656
        %v3706 = vunpack.c.l.b16 %v3657
        %v3707 = vunpack.c.l.b16 %v3658
        %v3708 = vunpack.c.l.b16 %v3659
        %v3709 = vunpack.c.l.b16 %v3660
        %v3710 = vunpack.c.l.b16 %v3661
        %v3711 = vunpack.c.l.b16 %v3662
        %v3712 = vunpack.c.l.b16 %v3663
        %v3713 = vunpack.c.l.b16 %v3664
        %v3714 = vunpack.c.l.b16 %v3665
        %v3715 = vunpack.c.l.b16 %v3666
        %v3716 = vunpack.c.l.b16 %v3667
        %v3717 = vunpack.c.l.b16 %v3668
        %v3718 = vunpack.c.l.b16 %v3669
        %v3719 = vunpack.c.l.b16 %v3670
        %v3720 = vunpack.c.l.b16 %v3671
        %v3721 = vunpack.c.l.b16 %v3672
        %v3722 = vrot.slane %v3674, 7
        %vm3723 = vcmask 1041409
        %v3724 = vsel %vm3723, %v3722, %v3673
        %v3725 = vrot.slane %v3675, 6
        %vm3726 = vcmask 1042434
        %v3727 = vsel %vm3726, %v3725, %v3724
        %v3728 = vrot.slane %v3676, 5
        %vm3729 = vcmask 1043459
        %v3730 = vsel %vm3729, %v3728, %v3727
        %v3731 = vrot.slane %v3677, 4
        %vm3732 = vcmask 1044484
        %v3733 = vsel %vm3732, %v3731, %v3730
        %v3734 = vrot.slane %v3678, 3
        %vm3735 = vcmask 1045509
        %v3736 = vsel %vm3735, %v3734, %v3733
        %v3737 = vrot.slane %v3679, 2
        %vm3738 = vcmask 1046534
        %v3739 = vsel %vm3738, %v3737, %v3736
        %v3740 = vrot.slane %v3681, 7
        %v3741 = vsel %vm3723, %v3740, %v3680
        %v3742 = vrot.slane %v3682, 6
        %v3743 = vsel %vm3726, %v3742, %v3741
        %v3744 = vrot.slane %v3683, 5
        %v3745 = vsel %vm3729, %v3744, %v3743
        %v3746 = vrot.slane %v3684, 4
        %v3747 = vsel %vm3732, %v3746, %v3745
        %v3748 = vrot.slane %v3685, 3
        %v3749 = vsel %vm3735, %v3748, %v3747
        %v3750 = vrot.slane %v3686, 2
        %v3751 = vsel %vm3738, %v3750, %v3749
        %v3752 = vrot.slane %v3688, 7
        %v3753 = vsel %vm3723, %v3752, %v3687
        %v3754 = vrot.slane %v3689, 6
        %v3755 = vsel %vm3726, %v3754, %v3753
        %v3756 = vrot.slane %v3690, 5
        %v3757 = vsel %vm3729, %v3756, %v3755
        %v3758 = vrot.slane %v3691, 4
        %v3759 = vsel %vm3732, %v3758, %v3757
        %v3760 = vrot.slane %v3692, 3
        %v3761 = vsel %vm3735, %v3760, %v3759
        %v3762 = vrot.slane %v3693, 2
        %v3763 = vsel %vm3738, %v3762, %v3761
        %v3764 = vrot.slane %v3695, 7
        %v3765 = vsel %vm3723, %v3764, %v3694
        %v3766 = vrot.slane %v3696, 6
        %v3767 = vsel %vm3726, %v3766, %v3765
        %v3768 = vrot.slane %v3697, 5
        %v3769 = vsel %vm3729, %v3768, %v3767
        %v3770 = vrot.slane %v3698, 4
        %v3771 = vsel %vm3732, %v3770, %v3769
        %v3772 = vrot.slane %v3699, 3
        %v3773 = vsel %vm3735, %v3772, %v3771
        %v3774 = vrot.slane %v3700, 2
        %v3775 = vsel %vm3738, %v3774, %v3773
        %v3776 = vrot.slane %v3702, 7
        %v3777 = vsel %vm3723, %v3776, %v3701
        %v3778 = vrot.slane %v3703, 6
        %v3779 = vsel %vm3726, %v3778, %v3777
        %v3780 = vrot.slane %v3704, 5
        %v3781 = vsel %vm3729, %v3780, %v3779
        %v3782 = vrot.slane %v3705, 4
        %v3783 = vsel %vm3732, %v3782, %v3781
        %v3784 = vrot.slane %v3706, 3
        %v3785 = vsel %vm3735, %v3784, %v3783
        %v3786 = vrot.slane %v3707, 2
        %v3787 = vsel %vm3738, %v3786, %v3785
        %v3788 = vrot.slane %v3709, 7
        %v3789 = vsel %vm3723, %v3788, %v3708
        %v3790 = vrot.slane %v3710, 6
        %v3791 = vsel %vm3726, %v3790, %v3789
        %v3792 = vrot.slane %v3711, 5
        %v3793 = vsel %vm3729, %v3792, %v3791
        %v3794 = vrot.slane %v3712, 4
        %v3795 = vsel %vm3732, %v3794, %v3793
        %v3796 = vrot.slane %v3713, 3
        %v3797 = vsel %vm3735, %v3796, %v3795
        %v3798 = vrot.slane %v3714, 2
        %v3799 = vsel %vm3738, %v3798, %v3797
        %v3800 = vrot.slane %v3716, 7
        %v3801 = vsel %vm3723, %v3800, %v3715
        %v3802 = vrot.slane %v3717, 6
        %v3803 = vsel %vm3726, %v3802, %v3801
        %v3804 = vrot.slane %v3718, 5
        %v3805 = vsel %vm3729, %v3804, %v3803
        %v3806 = vrot.slane %v3719, 4
        %v3807 = vsel %vm3732, %v3806, %v3805
        %v3808 = vrot.slane %v3720, 3
        %v3809 = vsel %vm3735, %v3808, %v3807
        %v3810 = vrot.slane %v3721, 2
        %v3811 = vsel %vm3738, %v3810, %v3809
        %v3812 = vpack.c.b16 %v3739, %v3739
        %v3813 = vpack.c.b16 %v3751, %v3751
        %v3814 = vpack.c.b16 %v3763, %v3763
        %v3815 = vpack.c.b16 %v3775, %v3775
        %v3816 = vpack.c.b16 %v3787, %v3787
        %v3817 = vpack.c.b16 %v3799, %v3799
        %v3818 = vpack.c.b16 %v3811, %v3811
        %vm3826 = vcmask 125952
        %vm3827 = vsmask.f32 3328
        %vm3828 = vmand %vm3826, %vm3827
        %v3829 = vld [vmem:[%s229] sm:$0xf]
        %v3830 = vsel %vm3828, %v3812, %v3829
        %3831 = vst [vmem:[%s229] sm:$0xf] %v3830
        %v3832 = vld [vmem:[%s229 + $0x4] sm:$0xf]
        %v3833 = vsel %vm3828, %v3813, %v3832
        %3834 = vst [vmem:[%s229 + $0x4] sm:$0xf] %v3833
        %v3835 = vld [vmem:[%s229 + $0x8] sm:$0xf]
        %v3836 = vsel %vm3828, %v3814, %v3835
        %3837 = vst [vmem:[%s229 + $0x8] sm:$0xf] %v3836
        %v3838 = vld [vmem:[%s229 + $0xc] sm:$0xf]
        %v3839 = vsel %vm3828, %v3815, %v3838
        %3840 = vst [vmem:[%s229 + $0xc] sm:$0xf] %v3839
        %v3841 = vld [vmem:[%s229 + $0x10] sm:$0xf]
        %v3842 = vsel %vm3828, %v3816, %v3841
        %3843 = vst [vmem:[%s229 + $0x10] sm:$0xf] %v3842
        %v3844 = vld [vmem:[%s229 + $0x14] sm:$0xf]
        %v3845 = vsel %vm3828, %v3817, %v3844
        %3846 = vst [vmem:[%s229 + $0x14] sm:$0xf] %v3845
        %v3847 = vld [vmem:[%s229 + $0x18] sm:$0xf]
        %v3848 = vsel %vm3828, %v3818, %v3847
        %3849 = vst [vmem:[%s229 + $0x18] sm:$0xf] %v3848
        %s3850 = sand.u32 %s111, 1
        %s3851 = scalar_lea.sflag [#allocation4], %s3850
        %s3852 = sand.u32 %s111, 1
        %s3853 = smul.addr %s3852, 28
        %s3854 = scalar_lea.vmem [#allocation8], %s3853
        // Predicated region
        $region45: #{cnn_forward.3} parent=31 // pred_check
          %p3855 = pneg %p121
        $region46: #{cnn_forward.3} parent=31 // pred_check_branch
          %3857 = sbr.rel (%p3855) target = $region48
        $region47: #{cnn_forward.3} parent=31 // pred_region
          %s3858 = smul.u32 7, %s26
          %s3860 = ssub.s32 448, 448
          %3861 = vsyncadd %s3851, %s3860
          %s3862 = smul.addr %s25, 7
          %s3863 = sadd.s32 %s3858, %s3862
          %s3864 = smul.addr %s3863, 64
          %s3865 = scalar_lea.hbm %s3, %s3864
          %s3866 = sshll.u32 %s3854, 4
          %s3867 = int_to_ptr.vmem [resolvable:$true] %s3866
          %3872 = dma.vmem_to_hbm [thread:$0]  %s3867, 448, %s3865, %s3851, 64, 64, 4
        $region48: #{cnn_forward.3} parent=31 // pred_fallthru
          _
      $region32: #{cnn_forward.3} parent=5 // pred_fallthru
        _
      %p3873 = scmp.le.s32.totalorder 2, %s16
      // Predicated region
      $region49: #{cnn_forward.3} parent=5 // pred_check
        %p3874 = pneg %p3873
      $region50: #{cnn_forward.3} parent=5 // pred_check_branch
        %3876 = sbr.rel (%p3874) target = $region52
      $region51: #{cnn_forward.3} parent=5 // pred_region
        %s3877 = ssub.s32 %s16, 2
        // Predicated region
        $region53: #{cnn_forward.3} parent=51 // pred_check
          %p3878 = pneg %p127
        $region54: #{cnn_forward.3} parent=51 // pred_check_branch
          %3880 = sbr.rel (%p3878) target = $region56
        $region55: #{cnn_forward.3} parent=51 // pred_region
          %s3881 = sand.u32 %s112, 1
          %s3882 = scalar_lea.sflag [#allocation4], %s3881
          %s3883 = sand.u32 %s112, 1
          %s3884 = smul.addr %s3883, 28
          %s3885 = scalar_lea.vmem [#allocation8], %s3884
          %3886 = dma.done %s3882, 448
        $region56: #{cnn_forward.3} parent=51 // pred_fallthru
          _
      $region52: #{cnn_forward.3} parent=5 // pred_fallthru
        _
    $region6: #{cnn_forward.3} parent=1 // loop_footer
      %s20 = sadd.s32 1, %s16
    $region7: #{cnn_forward.3} parent=1 // loop_footer_branch
      %15 = sbr.rel target = $region3
    $region8: #{cnn_forward.3} parent=1 // loop_exit
      _
    %3887 = vsyncpa [#allocation3], 1
    %s3888 = scalar_lea.sflag [#allocation3], 1
    %3889 = vsyncpa %s3888, 1
    %3890 = vsyncpa [#allocation6], 1
    %3891 = vsyncpa [#allocation4], 1
    %s3892 = scalar_lea.sflag [#allocation4], 1
    %3893 = vsyncpa %s3892, 1

</llo_original>
